<compile_context>
chip_gen: v6e
topology: v6e:2x2x1
jax: 0.10.0
libtpu: 0.0.40
codegen_flags: <defaults>
</compile_context>

<pallas_src>
import functools

import jax
import jax.numpy as jnp
from jax.experimental import pallas as pl
from jax.experimental.pallas import tpu as pltpu

LANE = 128
_VMEM_LIMIT = 32 * 1024 * 1024  # safe scoped-VMEM budget on v5e/v6e/v7x


def _round_up(x, m):
    return -(-x // m) * m


def _sum_to_11(x):
    # Reduce an (..., C) array to shape (1, 1) staying >= 2D throughout.
    x2 = x.reshape(-1, x.shape[-1])
    s = jnp.sum(x2, axis=0, keepdims=True)
    return jnp.sum(s, axis=1, keepdims=True)


# ---------------- kernel 1: fused 3x3 conv + bias + ReLU (in-kernel im2col) --
def _conv3x3_relu_kernel(x_ref, w_ref, b_ref, o_ref, *, H, W):
    # x_ref : (1, H+2, W+2, Cin_p)  spatially pre-padded, channel-padded input
    # w_ref : (9, Cin_p, Cout_p)    tap-major packed weights
    # b_ref : (1, Cout_p)
    # o_ref : (1, H, W, Cout_p)
    cin = x_ref.shape[-1]
    cout = w_ref.shape[-1]
    x = x_ref[0]                                  # (H+2, W+2, Cin_p)
    acc = jnp.zeros((H * W, cout), jnp.float32)
    for kh in range(3):
        for kw in range(3):
            patch = x[kh:kh + H, kw:kw + W, :].reshape(H * W, cin)
            acc = acc + jnp.dot(patch, w_ref[kh * 3 + kw],
                                preferred_element_type=jnp.float32)
    y = jnp.maximum(acc + b_ref[...], 0.0)
    o_ref[...] = y.reshape(1, H, W, cout)


def conv3x3_relu(x_nhwc, w_pack, b_pack):
    # x_nhwc: (N, H, W, Cin_p) with Cin_p already lane-padded (multiple of 128)
    N, H, W, cin = x_nhwc.shape
    cout = w_pack.shape[-1]
    xp = jnp.pad(x_nhwc, ((0, 0), (1, 1), (1, 1), (0, 0)))   # "same" padding
    kern = functools.partial(_conv3x3_relu_kernel, H=H, W=W)
    return pl.pallas_call(
        kern,
        out_shape=jax.ShapeDtypeStruct((N, H, W, cout), jnp.float32),
        grid_spec=pltpu.PrefetchScalarGridSpec(
            num_scalar_prefetch=0,
            grid=(N,),
            in_specs=[
                pl.BlockSpec((1, H + 2, W + 2, cin), lambda n: (n, 0, 0, 0)),
                pl.BlockSpec((9, cin, cout), lambda n: (0, 0, 0)),
                pl.BlockSpec((1, cout), lambda n: (0, 0)),
            ],
            out_specs=pl.BlockSpec((1, H, W, cout), lambda n: (n, 0, 0, 0)),
        ),
        compiler_params=pltpu.CompilerParams(
            dimension_semantics=("parallel",),
            vmem_limit_bytes=_VMEM_LIMIT),
    )(xp, w_pack, b_pack)


# ---------------- kernel 2: fused feature-L1 + gram-L1 per layer -------------
def _feat_gram_loss_kernel(fi_ref, fo_ref, of_ref, og_ref,
                           gin_acc, gout_acc, fsum_acc,
                           *, inv_gram_denom, inv_feat_n, inv_gram_n):
    k = pl.program_id(0)

    @pl.when(k == 0)
    def _init():
        gin_acc[...] = jnp.zeros_like(gin_acc)
        gout_acc[...] = jnp.zeros_like(gout_acc)
        fsum_acc[...] = jnp.zeros_like(fsum_acc)

    fi = fi_ref[...]                              # (N, THW, Cp) f32
    fo = fo_ref[...]
    dn = (((1,), (1,)), ((0,), (0,)))             # contract over the HW tile
    gin_acc[...] += jax.lax.dot_general(fi, fi, dn,
                                        preferred_element_type=jnp.float32)
    gout_acc[...] += jax.lax.dot_general(fo, fo, dn,
                                         preferred_element_type=jnp.float32)
    fsum_acc[...] += _sum_to_11(jnp.abs(fi - fo))

    @pl.when(k == pl.num_programs(0) - 1)
    def _finalize():
        g_in = gin_acc[...] * inv_gram_denom
        g_out = gout_acc[...] * inv_gram_denom
        of_ref[...] = fsum_acc[...] * inv_feat_n
        og_ref[...] = _sum_to_11(jnp.abs(g_in - g_out)) * inv_gram_n


def feature_gram_loss(fi_nhwc, fo_nhwc, real_c, *, thw=128):
    # fi/fo: (N, H, W, Cp) lane-padded features (padded channels are zero in
    # both, so they contribute nothing to either L1 sum).
    N, H, W, cp = fi_nhwc.shape
    hw = H * W
    fi = fi_nhwc.reshape(N, hw, cp)
    fo = fo_nhwc.reshape(N, hw, cp)

    thw_eff = min(thw, _round_up(hw, 8))
    hw_p = _round_up(hw, thw_eff)
    if hw_p != hw:
        fi = jnp.pad(fi, ((0, 0), (0, hw_p - hw), (0, 0)))
        fo = jnp.pad(fo, ((0, 0), (0, hw_p - hw), (0, 0)))

    kern = functools.partial(
        _feat_gram_loss_kernel,
        inv_gram_denom=1.0 / float(real_c * hw),
        inv_feat_n=1.0 / float(N * hw * real_c),
        inv_gram_n=1.0 / float(N * real_c * real_c))

    out_feat, out_gram = pl.pallas_call(
        kern,
        out_shape=(jax.ShapeDtypeStruct((1, 1), jnp.float32),
                   jax.ShapeDtypeStruct((1, 1), jnp.float32)),
        grid_spec=pltpu.PrefetchScalarGridSpec(
            num_scalar_prefetch=0,
            grid=(hw_p // thw_eff,),
            in_specs=[pl.BlockSpec((N, thw_eff, cp), lambda k: (0, k, 0)),
                      pl.BlockSpec((N, thw_eff, cp), lambda k: (0, k, 0))],
            out_specs=[pl.BlockSpec((1, 1), lambda k: (0, 0)),
                       pl.BlockSpec((1, 1), lambda k: (0, 0))],
            scratch_shapes=[pltpu.VMEM((N, cp, cp), jnp.float32),
                            pltpu.VMEM((N, cp, cp), jnp.float32),
                            pltpu.VMEM((1, 1), jnp.float32)]),
        compiler_params=pltpu.CompilerParams(
            dimension_semantics=("arbitrary",),
            vmem_limit_bytes=_VMEM_LIMIT),
    )(fi, fo)
    return out_feat[0, 0], out_gram[0, 0]


# ---------------- kernel 3: gridded L1 mean (pixel loss) ---------------------
def _l1_sum_kernel(a_ref, b_ref, o_ref, acc_ref, *, inv_n):
    @pl.when(pl.program_id(0) == 0)
    def _init():
        acc_ref[...] = jnp.zeros_like(acc_ref)

    d = jnp.abs(a_ref[...] - b_ref[...])
    s = jnp.sum(d, axis=1, keepdims=True)
    acc_ref[...] += jnp.sum(s, axis=0, keepdims=True)

    @pl.when(pl.program_id(0) == pl.num_programs(0) - 1)
    def _finalize():
        o_ref[...] = acc_ref[...] * inv_n


def l1_loss(a, b, *, block_rows=256):
    af = a.reshape(-1).astype(jnp.float32)
    bf = b.reshape(-1).astype(jnp.float32)
    n = af.size
    rows = _round_up(-(-n // LANE), 8)            # rows, multiple of 8
    br = min(block_rows, rows)
    rows_p = _round_up(rows, br)
    pad = rows_p * LANE - n
    a2 = jnp.pad(af, (0, pad)).reshape(rows_p, LANE)
    b2 = jnp.pad(bf, (0, pad)).reshape(rows_p, LANE)

    kern = functools.partial(_l1_sum_kernel, inv_n=1.0 / float(n))
    out = pl.pallas_call(
        kern,
        out_shape=jax.ShapeDtypeStruct((1, 1), jnp.float32),
        grid_spec=pltpu.PrefetchScalarGridSpec(
            num_scalar_prefetch=0,
            grid=(rows_p // br,),
            in_specs=[pl.BlockSpec((br, LANE), lambda k: (k, 0)),
                      pl.BlockSpec((br, LANE), lambda k: (k, 0))],
            out_specs=pl.BlockSpec((1, 1), lambda k: (0, 0)),
            scratch_shapes=[pltpu.VMEM((1, 1), jnp.float32)]),
        compiler_params=pltpu.CompilerParams(
            dimension_semantics=("arbitrary",),
            vmem_limit_bytes=_VMEM_LIMIT),
    )(a2, b2)
    return out[0, 0]


# ---------------- FeatureLoss port -------------------------------------------
class FeatureLoss:
    """JAX/Pallas port of the PyTorch FeatureLoss; base_loss = L1 (mean)."""
    # TODO(synk): the original hooks a pretrained VGG; here m_feat is a
    # deterministic synthetic 2-conv stack with the same hook semantics.

    def __init__(self, conv_params, layer_wgts=(5.0, 15.0)):
        self.wgts = tuple(layer_wgts)
        n = len(layer_wgts)
        self.metric_names = (['pixel'] + [f'feat_{i}' for i in range(n)]
                             + [f'gram_{i}' for i in range(n)])
        # Pre-pack weights once: OIHW -> (9, Cin_pad, Cout_pad), lane-padded.
        self.packed = []
        self.real_channels = []
        prev_cpad = None
        self.cin_pad0 = None
        for (w, b) in conv_params:
            c_out, c_in, kh, kw = w.shape
            cin_pad = prev_cpad if prev_cpad is not None else _round_up(c_in, LANE)
            cout_pad = _round_up(c_out, LANE)
            wp = jnp.transpose(w.astype(jnp.float32), (2, 3, 1, 0))
            wp = wp.reshape(kh * kw, c_in, c_out)
            wp = jnp.pad(wp, ((0, 0), (0, cin_pad - c_in), (0, cout_pad - c_out)))
            bp = jnp.pad(b.astype(jnp.float32), (0, cout_pad - c_out))
            bp = bp.reshape(1, cout_pad)
            self.packed.append((wp, bp))
            self.real_channels.append(c_out)
            if self.cin_pad0 is None:
                self.cin_pad0 = cin_pad
            prev_cpad = cout_pad

    def make_features(self, x_nchw):
        x = jnp.transpose(x_nchw, (0, 2, 3, 1)).astype(jnp.float32)  # NHWC
        c = x.shape[-1]
        x = jnp.pad(x, ((0, 0), (0, 0), (0, 0), (0, self.cin_pad0 - c)))
        feats = []
        for (wp, bp) in self.packed:
            x = conv3x3_relu(x, wp, bp)
            feats.append(x)                      # "hook" after each ReLU
        return feats

    def __call__(self, input_nchw, target_nchw):
        n = input_nchw.shape[0]
        # One batched pass through the feature extractor for input AND target.
        feats = self.make_features(
            jnp.concatenate([input_nchw, target_nchw], axis=0))

        pixel = l1_loss(input_nchw, target_nchw)
        feat_terms, gram_terms = [], []
        for f, w, rc in zip(feats, self.wgts, self.real_channels):
            fl, gl = feature_gram_loss(f[:n], f[n:], rc)
            feat_terms.append(fl * w)
            gram_terms.append(gl * (w ** 2) * 5e3)
        losses = [pixel] + feat_terms + gram_terms
        # NOTE: Python side effect; holds tracers/stale values under jax.jit.
        self.metrics = dict(zip(self.metric_names, losses))
        return sum(losses)


if __name__ == "__main__":
    key = jax.random.PRNGKey(0)
    k1, k2, k3, k4, k5, k6 = jax.random.split(key, 6)

    N, C, H, W = 2, 3, 16, 16
    C1, C2 = 8, 8

    inp = jax.random.normal(k1, (N, C, H, W), jnp.float32)
    tgt = jax.random.normal(k2, (N, C, H, W), jnp.float32)

    conv_params = [
        (0.1 * jax.random.normal(k3, (C1, C, 3, 3), jnp.float32),
         0.01 * jax.random.normal(k4, (C1,), jnp.float32)),
        (0.1 * jax.random.normal(k5, (C2, C1, 3, 3), jnp.float32),
         0.01 * jax.random.normal(k6, (C2,), jnp.float32)),
    ]

    floss = FeatureLoss(conv_params, layer_wgts=(5.0, 15.0))
    total = floss(inp, tgt)
    jax.block_until_ready(total)
    assert jnp.isfinite(total)
    print("KERNEL_OK")
</pallas_src>

<mosaic_0001>
module attributes {stable_mosaic.version = 11 : i64} {
  func.func @_conv3x3_relu_kernel(%arg0: i32, %arg1: memref<1x18x18x128xf32, #tpu.memory_space<vmem>>, %arg2: memref<9x128x128xf32, #tpu.memory_space<vmem>>, %arg3: memref<1x128xf32, #tpu.memory_space<vmem>>, %arg4: memref<1x16x16x128xf32, #tpu.memory_space<vmem>>) attributes {dimension_semantics = [#tpu.dimension_semantics<parallel>], iteration_bounds = array<i64: 4>, scalar_prefetch = 0 : i64, scratch_operands = 0 : i64, tpu.core_type = #tpu.core_type<tc>, window_params = [{transform_indices = @transform_0, window_bounds = array<i64: 1, 18, 18, 128>}, {pipeline_mode = #tpu.pipeline_mode<synchronous>, transform_indices = @transform_1, window_bounds = array<i64: 9, 128, 128>}, {pipeline_mode = #tpu.pipeline_mode<synchronous>, transform_indices = @transform_2, window_bounds = array<i64: 1, 128>}, {transform_indices = @transform_3, window_bounds = array<i64: 1, 16, 16, 128>}]} {
    %c0 = arith.constant 0 : index
    %c0_0 = arith.constant 0 : index
    %c0_1 = arith.constant 0 : index
    %c0_2 = arith.constant 0 : index
    %0 = vector.load %arg1[%c0, %c0_0, %c0_1, %c0_2] : memref<1x18x18x128xf32, #tpu.memory_space<vmem>>, vector<1x18x18x128xf32>
    %1 = vector.shape_cast %0 : vector<1x18x18x128xf32> to vector<18x18x128xf32>
    %cst = arith.constant 0.000000e+00 : f32
    %2 = vector.broadcast %cst : f32 to vector<256x128xf32>
    %3 = vector.extract_strided_slice %1 {offsets = [0, 0, 0], sizes = [16, 16, 128], strides = [1, 1, 1]} : vector<18x18x128xf32> to vector<16x16x128xf32>
    %4 = vector.shape_cast %3 : vector<16x16x128xf32> to vector<256x128xf32>
    %c0_3 = arith.constant 0 : index
    %c0_4 = arith.constant 0 : index
    %c0_5 = arith.constant 0 : index
    %5 = vector.load %arg2[%c0_3, %c0_4, %c0_5] : memref<9x128x128xf32, #tpu.memory_space<vmem>>, vector<1x128x128xf32>
    %6 = vector.shape_cast %5 : vector<1x128x128xf32> to vector<128x128xf32>
    %cst_6 = arith.constant dense<0.000000e+00> : vector<256x128xf32>
    %7 = tpu.matmul %4, %6, %cst_6 {dimension_numbers = #tpu.dot_dimension_numbers<[1], [0], [0], [1], [0, 0, 1, 1], [], []>} : vector<256x128xf32>, vector<128x128xf32>, vector<256x128xf32> -> vector<256x128xf32>
    %8 = arith.addf %2, %7 : vector<256x128xf32>
    %9 = vector.extract_strided_slice %1 {offsets = [0, 1, 0], sizes = [16, 16, 128], strides = [1, 1, 1]} : vector<18x18x128xf32> to vector<16x16x128xf32>
    %10 = vector.shape_cast %9 : vector<16x16x128xf32> to vector<256x128xf32>
    %c1 = arith.constant 1 : index
    %c0_7 = arith.constant 0 : index
    %c0_8 = arith.constant 0 : index
    %11 = vector.load %arg2[%c1, %c0_7, %c0_8] : memref<9x128x128xf32, #tpu.memory_space<vmem>>, vector<1x128x128xf32>
    %12 = vector.shape_cast %11 : vector<1x128x128xf32> to vector<128x128xf32>
    %cst_9 = arith.constant dense<0.000000e+00> : vector<256x128xf32>
    %13 = tpu.matmul %10, %12, %cst_9 {dimension_numbers = #tpu.dot_dimension_numbers<[1], [0], [0], [1], [0, 0, 1, 1], [], []>} : vector<256x128xf32>, vector<128x128xf32>, vector<256x128xf32> -> vector<256x128xf32>
    %14 = arith.addf %8, %13 : vector<256x128xf32>
    %15 = vector.extract_strided_slice %1 {offsets = [0, 2, 0], sizes = [16, 16, 128], strides = [1, 1, 1]} : vector<18x18x128xf32> to vector<16x16x128xf32>
    %16 = vector.shape_cast %15 : vector<16x16x128xf32> to vector<256x128xf32>
    %c2 = arith.constant 2 : index
    %c0_10 = arith.constant 0 : index
    %c0_11 = arith.constant 0 : index
    %17 = vector.load %arg2[%c2, %c0_10, %c0_11] : memref<9x128x128xf32, #tpu.memory_space<vmem>>, vector<1x128x128xf32>
    %18 = vector.shape_cast %17 : vector<1x128x128xf32> to vector<128x128xf32>
    %cst_12 = arith.constant dense<0.000000e+00> : vector<256x128xf32>
    %19 = tpu.matmul %16, %18, %cst_12 {dimension_numbers = #tpu.dot_dimension_numbers<[1], [0], [0], [1], [0, 0, 1, 1], [], []>} : vector<256x128xf32>, vector<128x128xf32>, vector<256x128xf32> -> vector<256x128xf32>
    %20 = arith.addf %14, %19 : vector<256x128xf32>
    %21 = vector.extract_strided_slice %1 {offsets = [1, 0, 0], sizes = [16, 16, 128], strides = [1, 1, 1]} : vector<18x18x128xf32> to vector<16x16x128xf32>
    %22 = vector.shape_cast %21 : vector<16x16x128xf32> to vector<256x128xf32>
    %c3 = arith.constant 3 : index
    %c0_13 = arith.constant 0 : index
    %c0_14 = arith.constant 0 : index
    %23 = vector.load %arg2[%c3, %c0_13, %c0_14] : memref<9x128x128xf32, #tpu.memory_space<vmem>>, vector<1x128x128xf32>
    %24 = vector.shape_cast %23 : vector<1x128x128xf32> to vector<128x128xf32>
    %cst_15 = arith.constant dense<0.000000e+00> : vector<256x128xf32>
    %25 = tpu.matmul %22, %24, %cst_15 {dimension_numbers = #tpu.dot_dimension_numbers<[1], [0], [0], [1], [0, 0, 1, 1], [], []>} : vector<256x128xf32>, vector<128x128xf32>, vector<256x128xf32> -> vector<256x128xf32>
    %26 = arith.addf %20, %25 : vector<256x128xf32>
    %27 = vector.extract_strided_slice %1 {offsets = [1, 1, 0], sizes = [16, 16, 128], strides = [1, 1, 1]} : vector<18x18x128xf32> to vector<16x16x128xf32>
    %28 = vector.shape_cast %27 : vector<16x16x128xf32> to vector<256x128xf32>
    %c4 = arith.constant 4 : index
    %c0_16 = arith.constant 0 : index
    %c0_17 = arith.constant 0 : index
    %29 = vector.load %arg2[%c4, %c0_16, %c0_17] : memref<9x128x128xf32, #tpu.memory_space<vmem>>, vector<1x128x128xf32>
    %30 = vector.shape_cast %29 : vector<1x128x128xf32> to vector<128x128xf32>
    %cst_18 = arith.constant dense<0.000000e+00> : vector<256x128xf32>
    %31 = tpu.matmul %28, %30, %cst_18 {dimension_numbers = #tpu.dot_dimension_numbers<[1], [0], [0], [1], [0, 0, 1, 1], [], []>} : vector<256x128xf32>, vector<128x128xf32>, vector<256x128xf32> -> vector<256x128xf32>
    %32 = arith.addf %26, %31 : vector<256x128xf32>
    %33 = vector.extract_strided_slice %1 {offsets = [1, 2, 0], sizes = [16, 16, 128], strides = [1, 1, 1]} : vector<18x18x128xf32> to vector<16x16x128xf32>
    %34 = vector.shape_cast %33 : vector<16x16x128xf32> to vector<256x128xf32>
    %c5 = arith.constant 5 : index
    %c0_19 = arith.constant 0 : index
    %c0_20 = arith.constant 0 : index
    %35 = vector.load %arg2[%c5, %c0_19, %c0_20] : memref<9x128x128xf32, #tpu.memory_space<vmem>>, vector<1x128x128xf32>
    %36 = vector.shape_cast %35 : vector<1x128x128xf32> to vector<128x128xf32>
    %cst_21 = arith.constant dense<0.000000e+00> : vector<256x128xf32>
    %37 = tpu.matmul %34, %36, %cst_21 {dimension_numbers = #tpu.dot_dimension_numbers<[1], [0], [0], [1], [0, 0, 1, 1], [], []>} : vector<256x128xf32>, vector<128x128xf32>, vector<256x128xf32> -> vector<256x128xf32>
    %38 = arith.addf %32, %37 : vector<256x128xf32>
    %39 = vector.extract_strided_slice %1 {offsets = [2, 0, 0], sizes = [16, 16, 128], strides = [1, 1, 1]} : vector<18x18x128xf32> to vector<16x16x128xf32>
    %40 = vector.shape_cast %39 : vector<16x16x128xf32> to vector<256x128xf32>
    %c6 = arith.constant 6 : index
    %c0_22 = arith.constant 0 : index
    %c0_23 = arith.constant 0 : index
    %41 = vector.load %arg2[%c6, %c0_22, %c0_23] : memref<9x128x128xf32, #tpu.memory_space<vmem>>, vector<1x128x128xf32>
    %42 = vector.shape_cast %41 : vector<1x128x128xf32> to vector<128x128xf32>
    %cst_24 = arith.constant dense<0.000000e+00> : vector<256x128xf32>
    %43 = tpu.matmul %40, %42, %cst_24 {dimension_numbers = #tpu.dot_dimension_numbers<[1], [0], [0], [1], [0, 0, 1, 1], [], []>} : vector<256x128xf32>, vector<128x128xf32>, vector<256x128xf32> -> vector<256x128xf32>
    %44 = arith.addf %38, %43 : vector<256x128xf32>
    %45 = vector.extract_strided_slice %1 {offsets = [2, 1, 0], sizes = [16, 16, 128], strides = [1, 1, 1]} : vector<18x18x128xf32> to vector<16x16x128xf32>
    %46 = vector.shape_cast %45 : vector<16x16x128xf32> to vector<256x128xf32>
    %c7 = arith.constant 7 : index
    %c0_25 = arith.constant 0 : index
    %c0_26 = arith.constant 0 : index
    %47 = vector.load %arg2[%c7, %c0_25, %c0_26] : memref<9x128x128xf32, #tpu.memory_space<vmem>>, vector<1x128x128xf32>
    %48 = vector.shape_cast %47 : vector<1x128x128xf32> to vector<128x128xf32>
    %cst_27 = arith.constant dense<0.000000e+00> : vector<256x128xf32>
    %49 = tpu.matmul %46, %48, %cst_27 {dimension_numbers = #tpu.dot_dimension_numbers<[1], [0], [0], [1], [0, 0, 1, 1], [], []>} : vector<256x128xf32>, vector<128x128xf32>, vector<256x128xf32> -> vector<256x128xf32>
    %50 = arith.addf %44, %49 : vector<256x128xf32>
    %51 = vector.extract_strided_slice %1 {offsets = [2, 2, 0], sizes = [16, 16, 128], strides = [1, 1, 1]} : vector<18x18x128xf32> to vector<16x16x128xf32>
    %52 = vector.shape_cast %51 : vector<16x16x128xf32> to vector<256x128xf32>
    %c8 = arith.constant 8 : index
    %c0_28 = arith.constant 0 : index
    %c0_29 = arith.constant 0 : index
    %53 = vector.load %arg2[%c8, %c0_28, %c0_29] : memref<9x128x128xf32, #tpu.memory_space<vmem>>, vector<1x128x128xf32>
    %54 = vector.shape_cast %53 : vector<1x128x128xf32> to vector<128x128xf32>
    %cst_30 = arith.constant dense<0.000000e+00> : vector<256x128xf32>
    %55 = tpu.matmul %52, %54, %cst_30 {dimension_numbers = #tpu.dot_dimension_numbers<[1], [0], [0], [1], [0, 0, 1, 1], [], []>} : vector<256x128xf32>, vector<128x128xf32>, vector<256x128xf32> -> vector<256x128xf32>
    %56 = arith.addf %50, %55 : vector<256x128xf32>
    %c0_31 = arith.constant 0 : index
    %c0_32 = arith.constant 0 : index
    %57 = vector.load %arg3[%c0_31, %c0_32] : memref<1x128xf32, #tpu.memory_space<vmem>>, vector<1x128xf32>
    %58 = vector.broadcast %57 : vector<1x128xf32> to vector<256x128xf32>
    %59 = arith.addf %56, %58 : vector<256x128xf32>
    %cst_33 = arith.constant 0.000000e+00 : f32
    %60 = vector.broadcast %cst_33 : f32 to vector<256x128xf32>
    %61 = arith.maximumf %59, %60 : vector<256x128xf32>
    %62 = vector.shape_cast %61 : vector<256x128xf32> to vector<1x16x16x128xf32>
    %c0_34 = arith.constant 0 : index
    %c0_35 = arith.constant 0 : index
    %c0_36 = arith.constant 0 : index
    %c0_37 = arith.constant 0 : index
    %63 = vector.load %arg4[%c0_34, %c0_35, %c0_36, %c0_37] : memref<1x16x16x128xf32, #tpu.memory_space<vmem>>, vector<1x16x16x128xf32>
    tpu.vector_store %arg4[%c0_34, %c0_35, %c0_36, %c0_37], %62 {strides = array<i32>} : memref<1x16x16x128xf32, #tpu.memory_space<vmem>>, vector<1x16x16x128xf32>,
    return
  }
  func.func @transform_0(%arg0: i32) -> (i32, i32, i32, i32) {
    %c0_i32 = arith.constant 0 : i32
    %c0_i32_0 = arith.constant 0 : i32
    %c0_i32_1 = arith.constant 0 : i32
    %c0_i32_2 = arith.constant 0 : i32
    return %arg0, %c0_i32, %c0_i32_0, %c0_i32_1 : i32, i32, i32, i32
  }
  func.func @transform_1(%arg0: i32) -> (i32, i32, i32) {
    %c0_i32 = arith.constant 0 : i32
    %c0_i32_0 = arith.constant 0 : i32
    %c0_i32_1 = arith.constant 0 : i32
    %c0_i32_2 = arith.constant 0 : i32
    return %c0_i32, %c0_i32_0, %c0_i32_1 : i32, i32, i32
  }
  func.func @transform_2(%arg0: i32) -> (i32, i32) {
    %c0_i32 = arith.constant 0 : i32
    %c0_i32_0 = arith.constant 0 : i32
    %c0_i32_1 = arith.constant 0 : i32
    return %c0_i32, %c0_i32_0 : i32, i32
  }
  func.func @transform_3(%arg0: i32) -> (i32, i32, i32, i32) {
    %c0_i32 = arith.constant 0 : i32
    %c0_i32_0 = arith.constant 0 : i32
    %c0_i32_1 = arith.constant 0 : i32
    %c0_i32_2 = arith.constant 0 : i32
    return %arg0, %c0_i32, %c0_i32_0, %c0_i32_1 : i32, i32, i32, i32
  }
}

</mosaic_0001>

<llo_original>
// kernel: tpu_custom_call.1
$region0: #{tpu_custom_call.1}
  #allocation0 [shape = 'u32[]', space=smem, size = 0x4, offset = 0x4, fixed_abs, tag = 'smem constant byte address 0x4 - core index']
  #allocation1 [shape = 'u32[144,128]{1,0:T(1,128)}', space=vmem, size = 0x12000, scoped, tag = 'internal scratch']
  %s0 = inlined_call_operand.vmem [shape: f32[4,18,18,128], index: 0, kind: input, shape index: {}]
  %s1 = inlined_call_operand.vmem [shape: f32[9,128,128], index: 1, kind: input, shape index: {}]
  %s2 = inlined_call_operand.vmem [shape: f32[1,128], index: 2, kind: input, shape index: {}]
  %s3 = inlined_call_operand.hbm [shape: f32[4,16,16,128], index: 3, kind: output, shape index: {}]
  %s4 = sld [smem:[#allocation0]]
  $region45: #{tpu_custom_call.1} parent=0
    _
  %s6 = ssub.s32 1, %s4
  %s7 = scalar_select 0, %s6, %s4
  $region1: #{tpu_custom_call.1} parent=0
    #allocation2 [shape = 'u8[262144]{0}', space=vmem, size = 0x40000, scoped, tag = 'output window, operand 0']
    #allocation3 [shape = 's32[2]{0}', space=sflag, size = 0x8, scoped, tag = 'scoped memory for tpu_custom_call.1']
    %8 = vsyncpa [#allocation3], 0
    %s9 = scalar_lea.sflag [#allocation3], 1
    %10 = vsyncpa %s9, 0
    loop: start=0, step=1, limit=6
    $region2: #{tpu_custom_call.1} parent=1 // loop_pre_header
      _
    $region3: #{tpu_custom_call.1} parent=1 // loop_header
      %s12 = sphi 0, %s16
      %p13 = scmp.ge.s32.totalorder %s12, 6
      %s22 = sphi 0, %s24
      %s25 = sphi 0, %s22
      %s26 = sphi 0, %s25
      %s42 = sphi 0, %s26
      %s46 = sphi 0, %s46
      %s48 = sphi 0, %s46
      %s49 = sphi 0, %s48
      %s63 = sphi 0, %s49
      %s67 = sphi 0, %s67
      %s69 = sphi 0, %s67
      %s70 = sphi 0, %s69
      %s84 = sphi 0, %s70
      %s90 = sphi 0, %s92
      %s93 = sphi 0, %s90
      %s94 = sphi 0, %s93
      %s110 = sphi 0, %s94
    $region4: #{tpu_custom_call.1} parent=1 // loop_header_branch
      %15 = sbr.rel (%p13) target = $region8
    $region5: #{tpu_custom_call.1} parent=1 // loop_body
      %s17 = ssub.s32 %s12, 1
      %s18 = ssub.s32 %s12, 2
      %s19 = sadd.s32 %s12, 1
      %s20 = ssub.s32 %s12, %s19
      %p21 = scmp.eq.s32.totalorder %s20, 0
      %s23 = sadd.s32 %s22, 1
      %s24 = scalar_select %p21, %s22, %s23
      %p27 = pneg %p21
      %p28 = scmp.eq.s32.totalorder %s12, 3
      %p29 = por %p27, %p28
      %p30 = scmp.ne.s32.totalorder %s22, %s25
      %p31 = scmp.eq.s32.totalorder %s12, 0
      %p32 = por %p30, %p31
      %p33 = scmp.ne.s32.totalorder %s22, %s25
      %p34 = scmp.eq.s32.totalorder %s17, 3
      %p35 = por %p33, %p34
      %p36 = scmp.ne.s32.totalorder %s25, %s26
      %p37 = scmp.eq.s32.totalorder %s17, 0
      %p38 = por %p36, %p37
      %p39 = scmp.ne.s32.totalorder %s25, %s26
      %p40 = scmp.eq.s32.totalorder %s18, 3
      %p41 = por %p39, %p40
      %p43 = scmp.ne.s32.totalorder %s26, %s42
      %p44 = scmp.eq.s32.totalorder %s18, 0
      %p45 = por %p43, %p44
      %s47 = sadd.s32 %s46, 1
      %p50 = scmp.eq.s32.totalorder %s12, 3
      %p51 = scmp.ne.s32.totalorder %s46, %s48
      %p52 = scmp.eq.s32.totalorder %s12, 0
      %p53 = por %p51, %p52
      %p54 = scmp.ne.s32.totalorder %s46, %s48
      %p55 = scmp.eq.s32.totalorder %s17, 3
      %p56 = por %p54, %p55
      %p57 = scmp.ne.s32.totalorder %s48, %s49
      %p58 = scmp.eq.s32.totalorder %s17, 0
      %p59 = por %p57, %p58
      %p60 = scmp.ne.s32.totalorder %s48, %s49
      %p61 = scmp.eq.s32.totalorder %s18, 3
      %p62 = por %p60, %p61
      %p64 = scmp.ne.s32.totalorder %s49, %s63
      %p65 = scmp.eq.s32.totalorder %s18, 0
      %p66 = por %p64, %p65
      %s68 = sadd.s32 %s67, 1
      %p71 = scmp.eq.s32.totalorder %s12, 3
      %p72 = scmp.ne.s32.totalorder %s67, %s69
      %p73 = scmp.eq.s32.totalorder %s12, 0
      %p74 = por %p72, %p73
      %p75 = scmp.ne.s32.totalorder %s67, %s69
      %p76 = scmp.eq.s32.totalorder %s17, 3
      %p77 = por %p75, %p76
      %p78 = scmp.ne.s32.totalorder %s69, %s70
      %p79 = scmp.eq.s32.totalorder %s17, 0
      %p80 = por %p78, %p79
      %p81 = scmp.ne.s32.totalorder %s69, %s70
      %p82 = scmp.eq.s32.totalorder %s18, 3
      %p83 = por %p81, %p82
      %p85 = scmp.ne.s32.totalorder %s70, %s84
      %p86 = scmp.eq.s32.totalorder %s18, 0
      %p87 = por %p85, %p86
      %s88 = ssub.s32 %s12, %s19
      %p89 = scmp.eq.s32.totalorder %s88, 0
      %s91 = sadd.s32 %s90, 1
      %s92 = scalar_select %p89, %s90, %s91
      %p95 = pneg %p89
      %p96 = scmp.eq.s32.totalorder %s12, 3
      %p97 = por %p95, %p96
      %p98 = scmp.ne.s32.totalorder %s90, %s93
      %p99 = scmp.eq.s32.totalorder %s12, 0
      %p100 = por %p98, %p99
      %p101 = scmp.ne.s32.totalorder %s90, %s93
      %p102 = scmp.eq.s32.totalorder %s17, 3
      %p103 = por %p101, %p102
      %p104 = scmp.ne.s32.totalorder %s93, %s94
      %p105 = scmp.eq.s32.totalorder %s17, 0
      %p106 = por %p104, %p105
      %p107 = scmp.ne.s32.totalorder %s93, %s94
      %p108 = scmp.eq.s32.totalorder %s18, 3
      %p109 = por %p107, %p108
      %p111 = scmp.ne.s32.totalorder %s94, %s110
      %p112 = scmp.eq.s32.totalorder %s18, 0
      %p113 = por %p111, %p112
      %p114 = scmp.le.s32.totalorder 1, %s12
      %p115 = scmp.lt.s32.totalorder %s12, 5
      %p116 = pnand %p114, %p115
      %p117 = pneg %p116
      // Predicated region
      $region9: #{tpu_custom_call.1} parent=5 // pred_check
        _
      $region10: #{tpu_custom_call.1} parent=5 // pred_check_branch
        %119 = sbr.rel (%p116) target = $region12
      $region11: #{tpu_custom_call.1} parent=5 // pred_region
        %s120 = ssub.s32 %s12, 1
        // Predicated region
        $region13: #{tpu_custom_call.1} parent=11 // pred_check
          %p121 = pneg %p59
        $region14: #{tpu_custom_call.1} parent=11 // pred_check_branch
          %123 = sbr.rel (%p121) target = $region16
        $region15: #{tpu_custom_call.1} parent=11 // pred_region
          _
        $region16: #{tpu_custom_call.1} parent=11 // pred_fallthru
          _
        // Predicated region
        $region17: #{tpu_custom_call.1} parent=11 // pred_check
          %p124 = pneg %p80
        $region18: #{tpu_custom_call.1} parent=11 // pred_check_branch
          %126 = sbr.rel (%p124) target = $region20
        $region19: #{tpu_custom_call.1} parent=11 // pred_region
          _
        $region20: #{tpu_custom_call.1} parent=11 // pred_fallthru
          _
      $region12: #{tpu_custom_call.1} parent=5 // pred_fallthru
        _
      %p127 = scmp.lt.s32.totalorder %s12, 4
      // Predicated region
      $region21: #{tpu_custom_call.1} parent=5 // pred_check
        %p128 = pneg %p127
      $region22: #{tpu_custom_call.1} parent=5 // pred_check_branch
        %130 = sbr.rel (%p128) target = $region24
      $region23: #{tpu_custom_call.1} parent=5 // pred_region
        // Predicated region
        $region25: #{tpu_custom_call.1} parent=23 // pred_check
          %p131 = pneg %p32
        $region26: #{tpu_custom_call.1} parent=23 // pred_check_branch
          %133 = sbr.rel (%p131) target = $region28
        $region27: #{tpu_custom_call.1} parent=23 // pred_region
          %p134 = scmp.lt.s32.totalorder %s12, 3
          %s135 = scalar_select %p134, %s12, 3
          %s136 = smul.addr %s135, 54
          %s137 = smul.addr %s136, 8
          %s138 = scalar_lea.vmem %s0, %s137
        $region28: #{tpu_custom_call.1} parent=23 // pred_fallthru
          _
      $region24: #{tpu_custom_call.1} parent=5 // pred_fallthru
        _
      %p139 = scmp.le.s32.totalorder 1, %s12
      %p140 = scmp.lt.s32.totalorder %s12, 5
      %p141 = pnand %p139, %p140
      %p142 = pneg %p141
      // Predicated region
      $region29: #{tpu_custom_call.1} parent=5 // pred_check
        _
      $region30: #{tpu_custom_call.1} parent=5 // pred_check_branch
        %144 = sbr.rel (%p141) target = $region32
      $region31: #{tpu_custom_call.1} parent=5 // pred_region
        %s145 = ssub.s32 %s12, 1
        %p146 = scmp.lt.s32.totalorder %s17, 3
        %s147 = scalar_select %p146, %s17, 3
        %s148 = smul.addr %s147, 54
        %s149 = smul.addr %s148, 8
        %s150 = scalar_lea.vmem %s0, %s149
        %p151 = pneg %p38
        %p152 = pneg %p35
        %p153 = pneg %p59
        %p154 = pneg %p56
        %p155 = pneg %p80
        %p156 = pneg %p77
        %p157 = pneg %p106
        %p158 = pneg %p103
        %s159 = sand.u32 %s93, 1
        %s160 = scalar_lea.sflag [#allocation3], %s159
        %s161 = sand.u32 %s93, 1
        %s162 = smul.addr %s161, 256
        %s163 = scalar_lea.vmem [#allocation2], %s162
        %p164 = scmp.lt.s32.totalorder %s17, 3
        %s165 = scalar_select %p164, %s17, 3
        %s166 = smul.addr %s165, 54
        %s167 = smul.addr %s166, 8
        %s168 = scalar_lea.vmem %s0, %s167
        %v169 = vld [vmem:[%s168] sm:$0xff]
        %v170 = vld [vmem:[%s168 + $0x8] sm:$0xff]
        %v171 = vld [vmem:[%s168 + $0x10] sm:$0x3]
        %v172 = vld [vmem:[%s168 + $0x18] sm:$0xff]
        %v173 = vld [vmem:[%s168 + $0x20] sm:$0xff]
        %v174 = vld [vmem:[%s168 + $0x28] sm:$0x3]
        %v175 = vld [vmem:[%s168 + $0x30] sm:$0xff]
        %v176 = vld [vmem:[%s168 + $0x38] sm:$0xff]
        %v177 = vld [vmem:[%s168 + $0x40] sm:$0x3]
        %v178 = vld [vmem:[%s168 + $0x48] sm:$0xff]
        %v179 = vld [vmem:[%s168 + $0x50] sm:$0xff]
        %v180 = vld [vmem:[%s168 + $0x58] sm:$0x3]
        %v181 = vld [vmem:[%s168 + $0x60] sm:$0xff]
        %v182 = vld [vmem:[%s168 + $0x68] sm:$0xff]
        %v183 = vld [vmem:[%s168 + $0x70] sm:$0x3]
        %v184 = vld [vmem:[%s168 + $0x78] sm:$0xff]
        %v185 = vld [vmem:[%s168 + $0x80] sm:$0xff]
        %v186 = vld [vmem:[%s168 + $0x88] sm:$0x3]
        %v187 = vld [vmem:[%s168 + $0x90] sm:$0xff]
        %v188 = vld [vmem:[%s168 + $0x98] sm:$0xff]
        %v189 = vld [vmem:[%s168 + $0xa0] sm:$0x3]
        %v190 = vld [vmem:[%s168 + $0xa8] sm:$0xff]
        %v191 = vld [vmem:[%s168 + $0xb0] sm:$0xff]
        %v192 = vld [vmem:[%s168 + $0xb8] sm:$0x3]
        %v193 = vld [vmem:[%s168 + $0xc0] sm:$0xff]
        %v194 = vld [vmem:[%s168 + $0xc8] sm:$0xff]
        %v195 = vld [vmem:[%s168 + $0xd0] sm:$0x3]
        %v196 = vld [vmem:[%s168 + $0xd8] sm:$0xff]
        %v197 = vld [vmem:[%s168 + $0xe0] sm:$0xff]
        %v198 = vld [vmem:[%s168 + $0xe8] sm:$0x3]
        %v199 = vld [vmem:[%s168 + $0xf0] sm:$0xff]
        %v200 = vld [vmem:[%s168 + $0xf8] sm:$0xff]
        %v201 = vld [vmem:[%s168 + $0x100] sm:$0x3]
        %v202 = vld [vmem:[%s168 + $0x108] sm:$0xff]
        %v203 = vld [vmem:[%s168 + $0x110] sm:$0xff]
        %v204 = vld [vmem:[%s168 + $0x118] sm:$0x3]
        %v205 = vld [vmem:[%s168 + $0x120] sm:$0xff]
        %v206 = vld [vmem:[%s168 + $0x128] sm:$0xff]
        %v207 = vld [vmem:[%s168 + $0x130] sm:$0x3]
        %v208 = vld [vmem:[%s168 + $0x138] sm:$0xff]
        %v209 = vld [vmem:[%s168 + $0x140] sm:$0xff]
        %v210 = vld [vmem:[%s168 + $0x148] sm:$0x3]
        %v211 = vld [vmem:[%s168 + $0x150] sm:$0xff]
        %v212 = vld [vmem:[%s168 + $0x158] sm:$0xff]
        %v213 = vld [vmem:[%s168 + $0x160] sm:$0x3]
        %v214 = vld [vmem:[%s168 + $0x168] sm:$0xff]
        %v215 = vld [vmem:[%s168 + $0x170] sm:$0xff]
        %v216 = vld [vmem:[%s168 + $0x178] sm:$0x3]
        %v217 = vld [vmem:[%s168 + $0x180] sm:$0xff]
        %v218 = vld [vmem:[%s168 + $0x188] sm:$0xff]
        %v219 = vld [vmem:[%s168 + $0x190] sm:$0x3]
        %v220 = vld [vmem:[%s168 + $0x198] sm:$0xff]
        %v221 = vld [vmem:[%s168 + $0x1a0] sm:$0xff]
        %v222 = vld [vmem:[%s168 + $0x1a8] sm:$0x3]
        %v223 = vld [vmem:[%s1] sm:$0xff]
        %v224 = vld [vmem:[%s1 + $0x8] sm:$0xff]
        %v225 = vld [vmem:[%s1 + $0x10] sm:$0xff]
        %v226 = vld [vmem:[%s1 + $0x18] sm:$0xff]
        %v227 = vld [vmem:[%s1 + $0x20] sm:$0xff]
        %v228 = vld [vmem:[%s1 + $0x28] sm:$0xff]
        %v229 = vld [vmem:[%s1 + $0x30] sm:$0xff]
        %v230 = vld [vmem:[%s1 + $0x38] sm:$0xff]
        %v231 = vld [vmem:[%s1 + $0x40] sm:$0xff]
        %v232 = vld [vmem:[%s1 + $0x48] sm:$0xff]
        %v233 = vld [vmem:[%s1 + $0x50] sm:$0xff]
        %v234 = vld [vmem:[%s1 + $0x58] sm:$0xff]
        %v235 = vld [vmem:[%s1 + $0x60] sm:$0xff]
        %v236 = vld [vmem:[%s1 + $0x68] sm:$0xff]
        %v237 = vld [vmem:[%s1 + $0x70] sm:$0xff]
        %v238 = vld [vmem:[%s1 + $0x78] sm:$0xff]
        %vm287 = vcmask 1046528
        %v288 = vrot.slane %v169, 1
        %v289 = vrot.slane %v170, 1
        %v290 = vsel %vm287, %v288, %v289
        %v291 = vrot.slane %v171, 1
        %v292 = vsel %vm287, %v289, %v291
        %v293 = vrot.slane %v172, 1
        %v294 = vrot.slane %v173, 1
        %v295 = vsel %vm287, %v293, %v294
        %v296 = vrot.slane %v174, 1
        %v297 = vsel %vm287, %v294, %v296
        %v298 = vrot.slane %v175, 1
        %v299 = vrot.slane %v176, 1
        %v300 = vsel %vm287, %v298, %v299
        %v301 = vrot.slane %v177, 1
        %v302 = vsel %vm287, %v299, %v301
        %v303 = vrot.slane %v178, 1
        %v304 = vrot.slane %v179, 1
        %v305 = vsel %vm287, %v303, %v304
        %v306 = vrot.slane %v180, 1
        %v307 = vsel %vm287, %v304, %v306
        %v308 = vrot.slane %v181, 1
        %v309 = vrot.slane %v182, 1
        %v310 = vsel %vm287, %v308, %v309
        %v311 = vrot.slane %v183, 1
        %v312 = vsel %vm287, %v309, %v311
        %v313 = vrot.slane %v184, 1
        %v314 = vrot.slane %v185, 1
        %v315 = vsel %vm287, %v313, %v314
        %v316 = vrot.slane %v186, 1
        %v317 = vsel %vm287, %v314, %v316
        %v318 = vrot.slane %v187, 1
        %v319 = vrot.slane %v188, 1
        %v320 = vsel %vm287, %v318, %v319
        %v321 = vrot.slane %v189, 1
        %v322 = vsel %vm287, %v319, %v321
        %v323 = vrot.slane %v190, 1
        %v324 = vrot.slane %v191, 1
        %v325 = vsel %vm287, %v323, %v324
        %v326 = vrot.slane %v192, 1
        %v327 = vsel %vm287, %v324, %v326
        %v328 = vrot.slane %v193, 1
        %v329 = vrot.slane %v194, 1
        %v330 = vsel %vm287, %v328, %v329
        %v331 = vrot.slane %v195, 1
        %v332 = vsel %vm287, %v329, %v331
        %v333 = vrot.slane %v196, 1
        %v334 = vrot.slane %v197, 1
        %v335 = vsel %vm287, %v333, %v334
        %v336 = vrot.slane %v198, 1
        %v337 = vsel %vm287, %v334, %v336
        %v338 = vrot.slane %v199, 1
        %v339 = vrot.slane %v200, 1
        %v340 = vsel %vm287, %v338, %v339
        %v341 = vrot.slane %v201, 1
        %v342 = vsel %vm287, %v339, %v341
        %v343 = vrot.slane %v202, 1
        %v344 = vrot.slane %v203, 1
        %v345 = vsel %vm287, %v343, %v344
        %v346 = vrot.slane %v204, 1
        %v347 = vsel %vm287, %v344, %v346
        %v348 = vrot.slane %v205, 1
        %v349 = vrot.slane %v206, 1
        %v350 = vsel %vm287, %v348, %v349
        %v351 = vrot.slane %v207, 1
        %v352 = vsel %vm287, %v349, %v351
        %v353 = vrot.slane %v208, 1
        %v354 = vrot.slane %v209, 1
        %v355 = vsel %vm287, %v353, %v354
        %v356 = vrot.slane %v210, 1
        %v357 = vsel %vm287, %v354, %v356
        %v358 = vrot.slane %v211, 1
        %v359 = vrot.slane %v212, 1
        %v360 = vsel %vm287, %v358, %v359
        %v361 = vrot.slane %v213, 1
        %v362 = vsel %vm287, %v359, %v361
        %v363 = vrot.slane %v214, 1
        %v364 = vrot.slane %v215, 1
        %v365 = vsel %vm287, %v363, %v364
        %v366 = vrot.slane %v216, 1
        %v367 = vsel %vm287, %v364, %v366
        %s400 = scalar_lea.vmem %s1, 128
        %v401 = vld [vmem:[%s400] sm:$0xff]
        %v402 = vld [vmem:[%s400 + $0x8] sm:$0xff]
        %v403 = vld [vmem:[%s400 + $0x10] sm:$0xff]
        %v404 = vld [vmem:[%s400 + $0x18] sm:$0xff]
        %v405 = vld [vmem:[%s400 + $0x20] sm:$0xff]
        %v406 = vld [vmem:[%s400 + $0x28] sm:$0xff]
        %v407 = vld [vmem:[%s400 + $0x30] sm:$0xff]
        %v408 = vld [vmem:[%s400 + $0x38] sm:$0xff]
        %v409 = vld [vmem:[%s400 + $0x40] sm:$0xff]
        %v410 = vld [vmem:[%s400 + $0x48] sm:$0xff]
        %v411 = vld [vmem:[%s400 + $0x50] sm:$0xff]
        %v412 = vld [vmem:[%s400 + $0x58] sm:$0xff]
        %v413 = vld [vmem:[%s400 + $0x60] sm:$0xff]
        %v414 = vld [vmem:[%s400 + $0x68] sm:$0xff]
        %v415 = vld [vmem:[%s400 + $0x70] sm:$0xff]
        %v416 = vld [vmem:[%s400 + $0x78] sm:$0xff]
        %417 = vmatprep.subr.mxu0 0.0
        %418 = vmatpush1.msra.mxu0 %v416
        %419 = vmatprep.subr.mxu0 0.0
        %420 = vmatpush1.msra.mxu0 %v415
        %421 = vmatprep.subr.mxu0 0.0
        %422 = vmatpush1.msra.mxu0 %v414
        %423 = vmatprep.subr.mxu0 0.0
        %424 = vmatpush1.msra.mxu0 %v413
        %425 = vmatprep.subr.mxu0 0.0
        %426 = vmatpush1.msra.mxu0 %v412
        %427 = vmatprep.subr.mxu0 0.0
        %428 = vmatpush1.msra.mxu0 %v411
        %429 = vmatprep.subr.mxu0 0.0
        %430 = vmatpush1.msra.mxu0 %v410
        %431 = vmatprep.subr.mxu0 0.0
        %432 = vmatpush1.msra.mxu0 %v409
        %433 = vmatprep.subr.mxu0 0.0
        %434 = vmatpush1.msra.mxu0 %v408
        %435 = vmatprep.subr.mxu0 0.0
        %436 = vmatpush1.msra.mxu0 %v407
        %437 = vmatprep.subr.mxu0 0.0
        %438 = vmatpush1.msra.mxu0 %v406
        %439 = vmatprep.subr.mxu0 0.0
        %440 = vmatpush1.msra.mxu0 %v405
        %441 = vmatprep.subr.mxu0 0.0
        %442 = vmatpush1.msra.mxu0 %v404
        %443 = vmatprep.subr.mxu0 0.0
        %444 = vmatpush1.msra.mxu0 %v403
        %445 = vmatprep.subr.mxu0 0.0
        %446 = vmatpush1.msra.mxu0 %v402
        %447 = vmatprep.subr.mxu0 0.0
        %448 = vmatpush1.msra.mxu0 %v401
        %449 = vmatprep.subr.mxu0 0.0
        %450 = vmatpush2.msra.mxu0 0.0
        %451 = vmatprep.subr.mxu0 0.0
        %452 = vmatpush2.msra.mxu0 0.0
        %453 = vmatprep.subr.mxu0 0.0
        %454 = vmatpush2.msra.mxu0 0.0
        %455 = vmatprep.subr.mxu0 0.0
        %456 = vmatpush2.msra.mxu0 0.0
        %457 = vmatprep.subr.mxu0 0.0
        %458 = vmatpush2.msra.mxu0 0.0
        %459 = vmatprep.subr.mxu0 0.0
        %460 = vmatpush2.msra.mxu0 0.0
        %461 = vmatprep.subr.mxu0 0.0
        %462 = vmatpush2.msra.mxu0 0.0
        %463 = vmatprep.subr.mxu0 0.0
        %464 = vmatpush2.msra.mxu0 0.0
        %465 = vmatprep.subr.mxu0 0.0
        %466 = vmatpush2.msra.mxu0 0.0
        %467 = vmatprep.subr.mxu0 0.0
        %468 = vmatpush2.msra.mxu0 0.0
        %469 = vmatprep.subr.mxu0 0.0
        %470 = vmatpush2.msra.mxu0 0.0
        %471 = vmatprep.subr.mxu0 0.0
        %472 = vmatpush2.msra.mxu0 0.0
        %473 = vmatprep.subr.mxu0 0.0
        %474 = vmatpush2.msra.mxu0 0.0
        %475 = vmatprep.subr.mxu0 0.0
        %476 = vmatpush2.msra.mxu0 0.0
        %477 = vmatprep.subr.mxu0 0.0
        %478 = vmatpush2.msra.mxu0 0.0
        %479 = vmatprep.subr.mxu0 0.0
        %480 = vmatpush2.msra.mxu0 0.0
        %481 = vmatprep.mubr.f32.mxu0 0.0
        %482 = vmatmul.mubr.f32.gmra.mxu0 %v290
        %v483 = vpop.f32.mrf.mxu0
        %v484 = vadd.f32 0.0, %v483
        %v485 = vpop.f32.mrf.mxu0
        %486 = vmatprep.mubr.f32.mxu0 0.0
        %487 = vmatmul.mubr.f32.gmra.mxu0 %v292
        %v488 = vpop.f32.mrf.mxu0
        %v489 = vadd.f32 0.0, %v488
        %v490 = vpop.f32.mrf.mxu0
        %491 = vmatprep.mubr.f32.mxu0 0.0
        %492 = vmatmul.mubr.f32.gmra.mxu0 %v295
        %v493 = vpop.f32.mrf.mxu0
        %v494 = vadd.f32 0.0, %v493
        %v495 = vpop.f32.mrf.mxu0
        %496 = vmatprep.mubr.f32.mxu0 0.0
        %497 = vmatmul.mubr.f32.gmra.mxu0 %v297
        %v498 = vpop.f32.mrf.mxu0
        %v499 = vadd.f32 0.0, %v498
        %v500 = vpop.f32.mrf.mxu0
        %501 = vmatprep.mubr.f32.mxu0 0.0
        %502 = vmatmul.mubr.f32.gmra.mxu0 %v300
        %v503 = vpop.f32.mrf.mxu0
        %v504 = vadd.f32 0.0, %v503
        %v505 = vpop.f32.mrf.mxu0
        %506 = vmatprep.mubr.f32.mxu0 0.0
        %507 = vmatmul.mubr.f32.gmra.mxu0 %v302
        %v508 = vpop.f32.mrf.mxu0
        %v509 = vadd.f32 0.0, %v508
        %v510 = vpop.f32.mrf.mxu0
        %511 = vmatprep.mubr.f32.mxu0 0.0
        %512 = vmatmul.mubr.f32.gmra.mxu0 %v305
        %v513 = vpop.f32.mrf.mxu0
        %v514 = vadd.f32 0.0, %v513
        %v515 = vpop.f32.mrf.mxu0
        %516 = vmatprep.mubr.f32.mxu0 0.0
        %517 = vmatmul.mubr.f32.gmra.mxu0 %v307
        %v518 = vpop.f32.mrf.mxu0
        %v519 = vadd.f32 0.0, %v518
        %v520 = vpop.f32.mrf.mxu0
        %521 = vmatprep.mubr.f32.mxu0 0.0
        %522 = vmatmul.mubr.f32.gmra.mxu0 %v310
        %v523 = vpop.f32.mrf.mxu0
        %v524 = vadd.f32 0.0, %v523
        %v525 = vpop.f32.mrf.mxu0
        %526 = vmatprep.mubr.f32.mxu0 0.0
        %527 = vmatmul.mubr.f32.gmra.mxu0 %v312
        %v528 = vpop.f32.mrf.mxu0
        %v529 = vadd.f32 0.0, %v528
        %v530 = vpop.f32.mrf.mxu0
        %531 = vmatprep.mubr.f32.mxu0 0.0
        %532 = vmatmul.mubr.f32.gmra.mxu0 %v315
        %v533 = vpop.f32.mrf.mxu0
        %v534 = vadd.f32 0.0, %v533
        %v535 = vpop.f32.mrf.mxu0
        %536 = vmatprep.mubr.f32.mxu0 0.0
        %537 = vmatmul.mubr.f32.gmra.mxu0 %v317
        %v538 = vpop.f32.mrf.mxu0
        %v539 = vadd.f32 0.0, %v538
        %v540 = vpop.f32.mrf.mxu0
        %541 = vmatprep.mubr.f32.mxu0 0.0
        %542 = vmatmul.mubr.f32.gmra.mxu0 %v320
        %v543 = vpop.f32.mrf.mxu0
        %v544 = vadd.f32 0.0, %v543
        %v545 = vpop.f32.mrf.mxu0
        %546 = vmatprep.mubr.f32.mxu0 0.0
        %547 = vmatmul.mubr.f32.gmra.mxu0 %v322
        %v548 = vpop.f32.mrf.mxu0
        %v549 = vadd.f32 0.0, %v548
        %v550 = vpop.f32.mrf.mxu0
        %551 = vmatprep.mubr.f32.mxu0 0.0
        %552 = vmatmul.mubr.f32.gmra.mxu0 %v325
        %v553 = vpop.f32.mrf.mxu0
        %v554 = vadd.f32 0.0, %v553
        %v555 = vpop.f32.mrf.mxu0
        %556 = vmatprep.mubr.f32.mxu0 0.0
        %557 = vmatmul.mubr.f32.gmra.mxu0 %v327
        %v558 = vpop.f32.mrf.mxu0
        %v559 = vadd.f32 0.0, %v558
        %v560 = vpop.f32.mrf.mxu0
        %561 = vmatprep.mubr.f32.mxu0 0.0
        %562 = vmatmul.mubr.f32.gmra.mxu0 %v330
        %v563 = vpop.f32.mrf.mxu0
        %v564 = vadd.f32 0.0, %v563
        %v565 = vpop.f32.mrf.mxu0
        %566 = vmatprep.mubr.f32.mxu0 0.0
        %567 = vmatmul.mubr.f32.gmra.mxu0 %v332
        %v568 = vpop.f32.mrf.mxu0
        %v569 = vadd.f32 0.0, %v568
        %v570 = vpop.f32.mrf.mxu0
        %571 = vmatprep.mubr.f32.mxu0 0.0
        %572 = vmatmul.mubr.f32.gmra.mxu0 %v335
        %v573 = vpop.f32.mrf.mxu0
        %v574 = vadd.f32 0.0, %v573
        %v575 = vpop.f32.mrf.mxu0
        %576 = vmatprep.mubr.f32.mxu0 0.0
        %577 = vmatmul.mubr.f32.gmra.mxu0 %v337
        %v578 = vpop.f32.mrf.mxu0
        %v579 = vadd.f32 0.0, %v578
        %v580 = vpop.f32.mrf.mxu0
        %581 = vmatprep.mubr.f32.mxu0 0.0
        %582 = vmatmul.mubr.f32.gmra.mxu0 %v340
        %v583 = vpop.f32.mrf.mxu0
        %v584 = vadd.f32 0.0, %v583
        %v585 = vpop.f32.mrf.mxu0
        %586 = vmatprep.mubr.f32.mxu0 0.0
        %587 = vmatmul.mubr.f32.gmra.mxu0 %v342
        %v588 = vpop.f32.mrf.mxu0
        %v589 = vadd.f32 0.0, %v588
        %v590 = vpop.f32.mrf.mxu0
        %591 = vmatprep.mubr.f32.mxu0 0.0
        %592 = vmatmul.mubr.f32.gmra.mxu0 %v345
        %v593 = vpop.f32.mrf.mxu0
        %v594 = vadd.f32 0.0, %v593
        %v595 = vpop.f32.mrf.mxu0
        %596 = vmatprep.mubr.f32.mxu0 0.0
        %597 = vmatmul.mubr.f32.gmra.mxu0 %v347
        %v598 = vpop.f32.mrf.mxu0
        %v599 = vadd.f32 0.0, %v598
        %v600 = vpop.f32.mrf.mxu0
        %601 = vmatprep.mubr.f32.mxu0 0.0
        %602 = vmatmul.mubr.f32.gmra.mxu0 %v350
        %v603 = vpop.f32.mrf.mxu0
        %v604 = vadd.f32 0.0, %v603
        %v605 = vpop.f32.mrf.mxu0
        %606 = vmatprep.mubr.f32.mxu0 0.0
        %607 = vmatmul.mubr.f32.gmra.mxu0 %v352
        %v608 = vpop.f32.mrf.mxu0
        %v609 = vadd.f32 0.0, %v608
        %v610 = vpop.f32.mrf.mxu0
        %611 = vmatprep.mubr.f32.mxu0 0.0
        %612 = vmatmul.mubr.f32.gmra.mxu0 %v355
        %v613 = vpop.f32.mrf.mxu0
        %v614 = vadd.f32 0.0, %v613
        %v615 = vpop.f32.mrf.mxu0
        %616 = vmatprep.mubr.f32.mxu0 0.0
        %617 = vmatmul.mubr.f32.gmra.mxu0 %v357
        %v618 = vpop.f32.mrf.mxu0
        %v619 = vadd.f32 0.0, %v618
        %v620 = vpop.f32.mrf.mxu0
        %621 = vmatprep.mubr.f32.mxu0 0.0
        %622 = vmatmul.mubr.f32.gmra.mxu0 %v360
        %v623 = vpop.f32.mrf.mxu0
        %v624 = vadd.f32 0.0, %v623
        %v625 = vpop.f32.mrf.mxu0
        %626 = vmatprep.mubr.f32.mxu0 0.0
        %627 = vmatmul.mubr.f32.gmra.mxu0 %v362
        %v628 = vpop.f32.mrf.mxu0
        %v629 = vadd.f32 0.0, %v628
        %v630 = vpop.f32.mrf.mxu0
        %631 = vmatprep.mubr.f32.mxu0 0.0
        %632 = vmatmul.mubr.f32.gmra.mxu0 %v365
        %v633 = vpop.f32.mrf.mxu0
        %v634 = vadd.f32 0.0, %v633
        %v635 = vpop.f32.mrf.mxu0
        %636 = vmatprep.mubr.f32.mxu0 0.0
        %637 = vmatmul.mubr.f32.gmra.mxu0 %v367
        %v638 = vpop.f32.mrf.mxu0
        %v639 = vadd.f32 0.0, %v638
        %v640 = vpop.f32.mrf.mxu0
        %641 = vdwg.mxu0
        %642 = vmatprep.subr.mxu0 0.0
        %643 = vmatpush1.msra.mxu0 %v238
        %644 = vmatprep.subr.mxu0 0.0
        %645 = vmatpush1.msra.mxu0 %v237
        %646 = vmatprep.subr.mxu0 0.0
        %647 = vmatpush1.msra.mxu0 %v236
        %648 = vmatprep.subr.mxu0 0.0
        %649 = vmatpush1.msra.mxu0 %v235
        %650 = vmatprep.subr.mxu0 0.0
        %651 = vmatpush1.msra.mxu0 %v234
        %652 = vmatprep.subr.mxu0 0.0
        %653 = vmatpush1.msra.mxu0 %v233
        %654 = vmatprep.subr.mxu0 0.0
        %655 = vmatpush1.msra.mxu0 %v232
        %656 = vmatprep.subr.mxu0 0.0
        %657 = vmatpush1.msra.mxu0 %v231
        %658 = vmatprep.subr.mxu0 0.0
        %659 = vmatpush1.msra.mxu0 %v230
        %660 = vmatprep.subr.mxu0 0.0
        %661 = vmatpush1.msra.mxu0 %v229
        %662 = vmatprep.subr.mxu0 0.0
        %663 = vmatpush1.msra.mxu0 %v228
        %664 = vmatprep.subr.mxu0 0.0
        %665 = vmatpush1.msra.mxu0 %v227
        %666 = vmatprep.subr.mxu0 0.0
        %667 = vmatpush1.msra.mxu0 %v226
        %668 = vmatprep.subr.mxu0 0.0
        %669 = vmatpush1.msra.mxu0 %v225
        %670 = vmatprep.subr.mxu0 0.0
        %671 = vmatpush1.msra.mxu0 %v224
        %672 = vmatprep.subr.mxu0 0.0
        %673 = vmatpush1.msra.mxu0 %v223
        %674 = vmatprep.subr.mxu0 0.0
        %675 = vmatpush2.msra.mxu0 0.0
        %676 = vmatprep.subr.mxu0 0.0
        %677 = vmatpush2.msra.mxu0 0.0
        %678 = vmatprep.subr.mxu0 0.0
        %679 = vmatpush2.msra.mxu0 0.0
        %680 = vmatprep.subr.mxu0 0.0
        %681 = vmatpush2.msra.mxu0 0.0
        %682 = vmatprep.subr.mxu0 0.0
        %683 = vmatpush2.msra.mxu0 0.0
        %684 = vmatprep.subr.mxu0 0.0
        %685 = vmatpush2.msra.mxu0 0.0
        %686 = vmatprep.subr.mxu0 0.0
        %687 = vmatpush2.msra.mxu0 0.0
        %688 = vmatprep.subr.mxu0 0.0
        %689 = vmatpush2.msra.mxu0 0.0
        %690 = vmatprep.subr.mxu0 0.0
        %691 = vmatpush2.msra.mxu0 0.0
        %692 = vmatprep.subr.mxu0 0.0
        %693 = vmatpush2.msra.mxu0 0.0
        %694 = vmatprep.subr.mxu0 0.0
        %695 = vmatpush2.msra.mxu0 0.0
        %696 = vmatprep.subr.mxu0 0.0
        %697 = vmatpush2.msra.mxu0 0.0
        %698 = vmatprep.subr.mxu0 0.0
        %699 = vmatpush2.msra.mxu0 0.0
        %700 = vmatprep.subr.mxu0 0.0
        %701 = vmatpush2.msra.mxu0 0.0
        %702 = vmatprep.subr.mxu0 0.0
        %703 = vmatpush2.msra.mxu0 0.0
        %704 = vmatprep.subr.mxu0 0.0
        %705 = vmatpush2.msra.mxu0 0.0
        %706 = vmatprep.mubr.f32.mxu0 0.0
        %707 = vmatmul.mubr.f32.gmra.mxu0 %v169
        %v708 = vpop.f32.mrf.mxu0
        %v709 = vadd.f32 %v484, %v708
        %v710 = vpop.f32.mrf.mxu0
        %711 = vmatprep.mubr.f32.mxu0 0.0
        %712 = vmatmul.mubr.f32.gmra.mxu0 %v170
        %v713 = vpop.f32.mrf.mxu0
        %v714 = vadd.f32 %v489, %v713
        %v715 = vpop.f32.mrf.mxu0
        %716 = vmatprep.mubr.f32.mxu0 0.0
        %717 = vmatmul.mubr.f32.gmra.mxu0 %v172
        %v718 = vpop.f32.mrf.mxu0
        %v719 = vadd.f32 %v494, %v718
        %v720 = vpop.f32.mrf.mxu0
        %721 = vmatprep.mubr.f32.mxu0 0.0
        %722 = vmatmul.mubr.f32.gmra.mxu0 %v173
        %v723 = vpop.f32.mrf.mxu0
        %v724 = vadd.f32 %v499, %v723
        %v725 = vpop.f32.mrf.mxu0
        %726 = vmatprep.mubr.f32.mxu0 0.0
        %727 = vmatmul.mubr.f32.gmra.mxu0 %v175
        %v728 = vpop.f32.mrf.mxu0
        %v729 = vadd.f32 %v504, %v728
        %v730 = vpop.f32.mrf.mxu0
        %731 = vmatprep.mubr.f32.mxu0 0.0
        %732 = vmatmul.mubr.f32.gmra.mxu0 %v176
        %v733 = vpop.f32.mrf.mxu0
        %v734 = vadd.f32 %v509, %v733
        %v735 = vpop.f32.mrf.mxu0
        %736 = vmatprep.mubr.f32.mxu0 0.0
        %737 = vmatmul.mubr.f32.gmra.mxu0 %v178
        %v738 = vpop.f32.mrf.mxu0
        %v739 = vadd.f32 %v514, %v738
        %v740 = vpop.f32.mrf.mxu0
        %741 = vmatprep.mubr.f32.mxu0 0.0
        %742 = vmatmul.mubr.f32.gmra.mxu0 %v179
        %v743 = vpop.f32.mrf.mxu0
        %v744 = vadd.f32 %v519, %v743
        %v745 = vpop.f32.mrf.mxu0
        %746 = vmatprep.mubr.f32.mxu0 0.0
        %747 = vmatmul.mubr.f32.gmra.mxu0 %v181
        %v748 = vpop.f32.mrf.mxu0
        %v749 = vadd.f32 %v524, %v748
        %v750 = vpop.f32.mrf.mxu0
        %751 = vmatprep.mubr.f32.mxu0 0.0
        %752 = vmatmul.mubr.f32.gmra.mxu0 %v182
        %v753 = vpop.f32.mrf.mxu0
        %v754 = vadd.f32 %v529, %v753
        %v755 = vpop.f32.mrf.mxu0
        %756 = vmatprep.mubr.f32.mxu0 0.0
        %757 = vmatmul.mubr.f32.gmra.mxu0 %v184
        %v758 = vpop.f32.mrf.mxu0
        %v759 = vadd.f32 %v534, %v758
        %v760 = vpop.f32.mrf.mxu0
        %761 = vmatprep.mubr.f32.mxu0 0.0
        %762 = vmatmul.mubr.f32.gmra.mxu0 %v185
        %v763 = vpop.f32.mrf.mxu0
        %v764 = vadd.f32 %v539, %v763
        %v765 = vpop.f32.mrf.mxu0
        %766 = vmatprep.mubr.f32.mxu0 0.0
        %767 = vmatmul.mubr.f32.gmra.mxu0 %v187
        %v768 = vpop.f32.mrf.mxu0
        %v769 = vadd.f32 %v544, %v768
        %v770 = vpop.f32.mrf.mxu0
        %771 = vmatprep.mubr.f32.mxu0 0.0
        %772 = vmatmul.mubr.f32.gmra.mxu0 %v188
        %v773 = vpop.f32.mrf.mxu0
        %v774 = vadd.f32 %v549, %v773
        %v775 = vpop.f32.mrf.mxu0
        %776 = vmatprep.mubr.f32.mxu0 0.0
        %777 = vmatmul.mubr.f32.gmra.mxu0 %v190
        %v778 = vpop.f32.mrf.mxu0
        %v779 = vadd.f32 %v554, %v778
        %v780 = vpop.f32.mrf.mxu0
        %781 = vmatprep.mubr.f32.mxu0 0.0
        %782 = vmatmul.mubr.f32.gmra.mxu0 %v191
        %v783 = vpop.f32.mrf.mxu0
        %v784 = vadd.f32 %v559, %v783
        %v785 = vpop.f32.mrf.mxu0
        %786 = vmatprep.mubr.f32.mxu0 0.0
        %787 = vmatmul.mubr.f32.gmra.mxu0 %v193
        %v788 = vpop.f32.mrf.mxu0
        %v789 = vadd.f32 %v564, %v788
        %v790 = vpop.f32.mrf.mxu0
        %791 = vmatprep.mubr.f32.mxu0 0.0
        %792 = vmatmul.mubr.f32.gmra.mxu0 %v194
        %v793 = vpop.f32.mrf.mxu0
        %v794 = vadd.f32 %v569, %v793
        %v795 = vpop.f32.mrf.mxu0
        %796 = vmatprep.mubr.f32.mxu0 0.0
        %797 = vmatmul.mubr.f32.gmra.mxu0 %v196
        %v798 = vpop.f32.mrf.mxu0
        %v799 = vadd.f32 %v574, %v798
        %v800 = vpop.f32.mrf.mxu0
        %801 = vmatprep.mubr.f32.mxu0 0.0
        %802 = vmatmul.mubr.f32.gmra.mxu0 %v197
        %v803 = vpop.f32.mrf.mxu0
        %v804 = vadd.f32 %v579, %v803
        %v805 = vpop.f32.mrf.mxu0
        %806 = vmatprep.mubr.f32.mxu0 0.0
        %807 = vmatmul.mubr.f32.gmra.mxu0 %v199
        %v808 = vpop.f32.mrf.mxu0
        %v809 = vadd.f32 %v584, %v808
        %v810 = vpop.f32.mrf.mxu0
        %811 = vmatprep.mubr.f32.mxu0 0.0
        %812 = vmatmul.mubr.f32.gmra.mxu0 %v200
        %v813 = vpop.f32.mrf.mxu0
        %v814 = vadd.f32 %v589, %v813
        %v815 = vpop.f32.mrf.mxu0
        %816 = vmatprep.mubr.f32.mxu0 0.0
        %817 = vmatmul.mubr.f32.gmra.mxu0 %v202
        %v818 = vpop.f32.mrf.mxu0
        %v819 = vadd.f32 %v594, %v818
        %v820 = vpop.f32.mrf.mxu0
        %821 = vmatprep.mubr.f32.mxu0 0.0
        %822 = vmatmul.mubr.f32.gmra.mxu0 %v203
        %v823 = vpop.f32.mrf.mxu0
        %v824 = vadd.f32 %v599, %v823
        %v825 = vpop.f32.mrf.mxu0
        %826 = vmatprep.mubr.f32.mxu0 0.0
        %827 = vmatmul.mubr.f32.gmra.mxu0 %v205
        %v828 = vpop.f32.mrf.mxu0
        %v829 = vadd.f32 %v604, %v828
        %v830 = vpop.f32.mrf.mxu0
        %831 = vmatprep.mubr.f32.mxu0 0.0
        %832 = vmatmul.mubr.f32.gmra.mxu0 %v206
        %v833 = vpop.f32.mrf.mxu0
        %v834 = vadd.f32 %v609, %v833
        %v835 = vpop.f32.mrf.mxu0
        %836 = vmatprep.mubr.f32.mxu0 0.0
        %837 = vmatmul.mubr.f32.gmra.mxu0 %v208
        %v838 = vpop.f32.mrf.mxu0
        %v839 = vadd.f32 %v614, %v838
        %v840 = vpop.f32.mrf.mxu0
        %841 = vmatprep.mubr.f32.mxu0 0.0
        %842 = vmatmul.mubr.f32.gmra.mxu0 %v209
        %v843 = vpop.f32.mrf.mxu0
        %v844 = vadd.f32 %v619, %v843
        %v845 = vpop.f32.mrf.mxu0
        %846 = vmatprep.mubr.f32.mxu0 0.0
        %847 = vmatmul.mubr.f32.gmra.mxu0 %v211
        %v848 = vpop.f32.mrf.mxu0
        %v849 = vadd.f32 %v624, %v848
        %v850 = vpop.f32.mrf.mxu0
        %851 = vmatprep.mubr.f32.mxu0 0.0
        %852 = vmatmul.mubr.f32.gmra.mxu0 %v212
        %v853 = vpop.f32.mrf.mxu0
        %v854 = vadd.f32 %v629, %v853
        %v855 = vpop.f32.mrf.mxu0
        %856 = vmatprep.mubr.f32.mxu0 0.0
        %857 = vmatmul.mubr.f32.gmra.mxu0 %v214
        %v858 = vpop.f32.mrf.mxu0
        %v859 = vadd.f32 %v634, %v858
        %v860 = vpop.f32.mrf.mxu0
        %861 = vmatprep.mubr.f32.mxu0 0.0
        %862 = vmatmul.mubr.f32.gmra.mxu0 %v215
        %v863 = vpop.f32.mrf.mxu0
        %v864 = vadd.f32 %v639, %v863
        %v865 = vpop.f32.mrf.mxu0
        %866 = vdwg.mxu0
        %vm867 = vcmask 1045504
        %v868 = vrot.slane %v169, 2
        %v869 = vrot.slane %v170, 2
        %v870 = vsel %vm867, %v868, %v869
        %v871 = vrot.slane %v171, 2
        %v872 = vsel %vm867, %v869, %v871
        %v873 = vrot.slane %v172, 2
        %v874 = vrot.slane %v173, 2
        %v875 = vsel %vm867, %v873, %v874
        %v876 = vrot.slane %v174, 2
        %v877 = vsel %vm867, %v874, %v876
        %v878 = vrot.slane %v175, 2
        %v879 = vrot.slane %v176, 2
        %v880 = vsel %vm867, %v878, %v879
        %v881 = vrot.slane %v177, 2
        %v882 = vsel %vm867, %v879, %v881
        %v883 = vrot.slane %v178, 2
        %v884 = vrot.slane %v179, 2
        %v885 = vsel %vm867, %v883, %v884
        %v886 = vrot.slane %v180, 2
        %v887 = vsel %vm867, %v884, %v886
        %v888 = vrot.slane %v181, 2
        %v889 = vrot.slane %v182, 2
        %v890 = vsel %vm867, %v888, %v889
        %v891 = vrot.slane %v183, 2
        %v892 = vsel %vm867, %v889, %v891
        %v893 = vrot.slane %v184, 2
        %v894 = vrot.slane %v185, 2
        %v895 = vsel %vm867, %v893, %v894
        %v896 = vrot.slane %v186, 2
        %v897 = vsel %vm867, %v894, %v896
        %v898 = vrot.slane %v187, 2
        %v899 = vrot.slane %v188, 2
        %v900 = vsel %vm867, %v898, %v899
        %v901 = vrot.slane %v189, 2
        %v902 = vsel %vm867, %v899, %v901
        %v903 = vrot.slane %v190, 2
        %v904 = vrot.slane %v191, 2
        %v905 = vsel %vm867, %v903, %v904
        %v906 = vrot.slane %v192, 2
        %v907 = vsel %vm867, %v904, %v906
        %v908 = vrot.slane %v193, 2
        %v909 = vrot.slane %v194, 2
        %v910 = vsel %vm867, %v908, %v909
        %v911 = vrot.slane %v195, 2
        %v912 = vsel %vm867, %v909, %v911
        %v913 = vrot.slane %v196, 2
        %v914 = vrot.slane %v197, 2
        %v915 = vsel %vm867, %v913, %v914
        %v916 = vrot.slane %v198, 2
        %v917 = vsel %vm867, %v914, %v916
        %v918 = vrot.slane %v199, 2
        %v919 = vrot.slane %v200, 2
        %v920 = vsel %vm867, %v918, %v919
        %v921 = vrot.slane %v201, 2
        %v922 = vsel %vm867, %v919, %v921
        %v923 = vrot.slane %v202, 2
        %v924 = vrot.slane %v203, 2
        %v925 = vsel %vm867, %v923, %v924
        %v926 = vrot.slane %v204, 2
        %v927 = vsel %vm867, %v924, %v926
        %v928 = vrot.slane %v205, 2
        %v929 = vrot.slane %v206, 2
        %v930 = vsel %vm867, %v928, %v929
        %v931 = vrot.slane %v207, 2
        %v932 = vsel %vm867, %v929, %v931
        %v933 = vrot.slane %v208, 2
        %v934 = vrot.slane %v209, 2
        %v935 = vsel %vm867, %v933, %v934
        %v936 = vrot.slane %v210, 2
        %v937 = vsel %vm867, %v934, %v936
        %v938 = vrot.slane %v211, 2
        %v939 = vrot.slane %v212, 2
        %v940 = vsel %vm867, %v938, %v939
        %v941 = vrot.slane %v213, 2
        %v942 = vsel %vm867, %v939, %v941
        %v943 = vrot.slane %v214, 2
        %v944 = vrot.slane %v215, 2
        %v945 = vsel %vm867, %v943, %v944
        %v946 = vrot.slane %v216, 2
        %v947 = vsel %vm867, %v944, %v946
        %s980 = scalar_lea.vmem %s1, 256
        %v981 = vld [vmem:[%s980] sm:$0xff]
        %v982 = vld [vmem:[%s980 + $0x8] sm:$0xff]
        %v983 = vld [vmem:[%s980 + $0x10] sm:$0xff]
        %v984 = vld [vmem:[%s980 + $0x18] sm:$0xff]
        %v985 = vld [vmem:[%s980 + $0x20] sm:$0xff]
        %v986 = vld [vmem:[%s980 + $0x28] sm:$0xff]
        %v987 = vld [vmem:[%s980 + $0x30] sm:$0xff]
        %v988 = vld [vmem:[%s980 + $0x38] sm:$0xff]
        %v989 = vld [vmem:[%s980 + $0x40] sm:$0xff]
        %v990 = vld [vmem:[%s980 + $0x48] sm:$0xff]
        %v991 = vld [vmem:[%s980 + $0x50] sm:$0xff]
        %v992 = vld [vmem:[%s980 + $0x58] sm:$0xff]
        %v993 = vld [vmem:[%s980 + $0x60] sm:$0xff]
        %v994 = vld [vmem:[%s980 + $0x68] sm:$0xff]
        %v995 = vld [vmem:[%s980 + $0x70] sm:$0xff]
        %v996 = vld [vmem:[%s980 + $0x78] sm:$0xff]
        %997 = vmatprep.subr.mxu0 0.0
        %998 = vmatpush1.msra.mxu0 %v996
        %999 = vmatprep.subr.mxu0 0.0
        %1000 = vmatpush1.msra.mxu0 %v995
        %1001 = vmatprep.subr.mxu0 0.0
        %1002 = vmatpush1.msra.mxu0 %v994
        %1003 = vmatprep.subr.mxu0 0.0
        %1004 = vmatpush1.msra.mxu0 %v993
        %1005 = vmatprep.subr.mxu0 0.0
        %1006 = vmatpush1.msra.mxu0 %v992
        %1007 = vmatprep.subr.mxu0 0.0
        %1008 = vmatpush1.msra.mxu0 %v991
        %1009 = vmatprep.subr.mxu0 0.0
        %1010 = vmatpush1.msra.mxu0 %v990
        %1011 = vmatprep.subr.mxu0 0.0
        %1012 = vmatpush1.msra.mxu0 %v989
        %1013 = vmatprep.subr.mxu0 0.0
        %1014 = vmatpush1.msra.mxu0 %v988
        %1015 = vmatprep.subr.mxu0 0.0
        %1016 = vmatpush1.msra.mxu0 %v987
        %1017 = vmatprep.subr.mxu0 0.0
        %1018 = vmatpush1.msra.mxu0 %v986
        %1019 = vmatprep.subr.mxu0 0.0
        %1020 = vmatpush1.msra.mxu0 %v985
        %1021 = vmatprep.subr.mxu0 0.0
        %1022 = vmatpush1.msra.mxu0 %v984
        %1023 = vmatprep.subr.mxu0 0.0
        %1024 = vmatpush1.msra.mxu0 %v983
        %1025 = vmatprep.subr.mxu0 0.0
        %1026 = vmatpush1.msra.mxu0 %v982
        %1027 = vmatprep.subr.mxu0 0.0
        %1028 = vmatpush1.msra.mxu0 %v981
        %1029 = vmatprep.subr.mxu0 0.0
        %1030 = vmatpush2.msra.mxu0 0.0
        %1031 = vmatprep.subr.mxu0 0.0
        %1032 = vmatpush2.msra.mxu0 0.0
        %1033 = vmatprep.subr.mxu0 0.0
        %1034 = vmatpush2.msra.mxu0 0.0
        %1035 = vmatprep.subr.mxu0 0.0
        %1036 = vmatpush2.msra.mxu0 0.0
        %1037 = vmatprep.subr.mxu0 0.0
        %1038 = vmatpush2.msra.mxu0 0.0
        %1039 = vmatprep.subr.mxu0 0.0
        %1040 = vmatpush2.msra.mxu0 0.0
        %1041 = vmatprep.subr.mxu0 0.0
        %1042 = vmatpush2.msra.mxu0 0.0
        %1043 = vmatprep.subr.mxu0 0.0
        %1044 = vmatpush2.msra.mxu0 0.0
        %1045 = vmatprep.subr.mxu0 0.0
        %1046 = vmatpush2.msra.mxu0 0.0
        %1047 = vmatprep.subr.mxu0 0.0
        %1048 = vmatpush2.msra.mxu0 0.0
        %1049 = vmatprep.subr.mxu0 0.0
        %1050 = vmatpush2.msra.mxu0 0.0
        %1051 = vmatprep.subr.mxu0 0.0
        %1052 = vmatpush2.msra.mxu0 0.0
        %1053 = vmatprep.subr.mxu0 0.0
        %1054 = vmatpush2.msra.mxu0 0.0
        %1055 = vmatprep.subr.mxu0 0.0
        %1056 = vmatpush2.msra.mxu0 0.0
        %1057 = vmatprep.subr.mxu0 0.0
        %1058 = vmatpush2.msra.mxu0 0.0
        %1059 = vmatprep.subr.mxu0 0.0
        %1060 = vmatpush2.msra.mxu0 0.0
        %1061 = vmatprep.mubr.f32.mxu0 0.0
        %1062 = vmatmul.mubr.f32.gmra.mxu0 %v870
        %v1063 = vpop.f32.mrf.mxu0
        %v1064 = vadd.f32 0.0, %v1063
        %v1065 = vpop.f32.mrf.mxu0
        %1066 = vmatprep.mubr.f32.mxu0 0.0
        %1067 = vmatmul.mubr.f32.gmra.mxu0 %v872
        %v1068 = vpop.f32.mrf.mxu0
        %v1069 = vadd.f32 0.0, %v1068
        %v1070 = vpop.f32.mrf.mxu0
        %1071 = vmatprep.mubr.f32.mxu0 0.0
        %1072 = vmatmul.mubr.f32.gmra.mxu0 %v875
        %v1073 = vpop.f32.mrf.mxu0
        %v1074 = vadd.f32 0.0, %v1073
        %v1075 = vpop.f32.mrf.mxu0
        %1076 = vmatprep.mubr.f32.mxu0 0.0
        %1077 = vmatmul.mubr.f32.gmra.mxu0 %v877
        %v1078 = vpop.f32.mrf.mxu0
        %v1079 = vadd.f32 0.0, %v1078
        %v1080 = vpop.f32.mrf.mxu0
        %1081 = vmatprep.mubr.f32.mxu0 0.0
        %1082 = vmatmul.mubr.f32.gmra.mxu0 %v880
        %v1083 = vpop.f32.mrf.mxu0
        %v1084 = vadd.f32 0.0, %v1083
        %v1085 = vpop.f32.mrf.mxu0
        %1086 = vmatprep.mubr.f32.mxu0 0.0
        %1087 = vmatmul.mubr.f32.gmra.mxu0 %v882
        %v1088 = vpop.f32.mrf.mxu0
        %v1089 = vadd.f32 0.0, %v1088
        %v1090 = vpop.f32.mrf.mxu0
        %1091 = vmatprep.mubr.f32.mxu0 0.0
        %1092 = vmatmul.mubr.f32.gmra.mxu0 %v885
        %v1093 = vpop.f32.mrf.mxu0
        %v1094 = vadd.f32 0.0, %v1093
        %v1095 = vpop.f32.mrf.mxu0
        %1096 = vmatprep.mubr.f32.mxu0 0.0
        %1097 = vmatmul.mubr.f32.gmra.mxu0 %v887
        %v1098 = vpop.f32.mrf.mxu0
        %v1099 = vadd.f32 0.0, %v1098
        %v1100 = vpop.f32.mrf.mxu0
        %1101 = vmatprep.mubr.f32.mxu0 0.0
        %1102 = vmatmul.mubr.f32.gmra.mxu0 %v890
        %v1103 = vpop.f32.mrf.mxu0
        %v1104 = vadd.f32 0.0, %v1103
        %v1105 = vpop.f32.mrf.mxu0
        %1106 = vmatprep.mubr.f32.mxu0 0.0
        %1107 = vmatmul.mubr.f32.gmra.mxu0 %v892
        %v1108 = vpop.f32.mrf.mxu0
        %v1109 = vadd.f32 0.0, %v1108
        %v1110 = vpop.f32.mrf.mxu0
        %1111 = vmatprep.mubr.f32.mxu0 0.0
        %1112 = vmatmul.mubr.f32.gmra.mxu0 %v895
        %v1113 = vpop.f32.mrf.mxu0
        %v1114 = vadd.f32 0.0, %v1113
        %v1115 = vpop.f32.mrf.mxu0
        %1116 = vmatprep.mubr.f32.mxu0 0.0
        %1117 = vmatmul.mubr.f32.gmra.mxu0 %v897
        %v1118 = vpop.f32.mrf.mxu0
        %v1119 = vadd.f32 0.0, %v1118
        %v1120 = vpop.f32.mrf.mxu0
        %1121 = vmatprep.mubr.f32.mxu0 0.0
        %1122 = vmatmul.mubr.f32.gmra.mxu0 %v900
        %v1123 = vpop.f32.mrf.mxu0
        %v1124 = vadd.f32 0.0, %v1123
        %v1125 = vpop.f32.mrf.mxu0
        %1126 = vmatprep.mubr.f32.mxu0 0.0
        %1127 = vmatmul.mubr.f32.gmra.mxu0 %v902
        %v1128 = vpop.f32.mrf.mxu0
        %v1129 = vadd.f32 0.0, %v1128
        %v1130 = vpop.f32.mrf.mxu0
        %1131 = vmatprep.mubr.f32.mxu0 0.0
        %1132 = vmatmul.mubr.f32.gmra.mxu0 %v905
        %v1133 = vpop.f32.mrf.mxu0
        %v1134 = vadd.f32 0.0, %v1133
        %v1135 = vpop.f32.mrf.mxu0
        %1136 = vmatprep.mubr.f32.mxu0 0.0
        %1137 = vmatmul.mubr.f32.gmra.mxu0 %v907
        %v1138 = vpop.f32.mrf.mxu0
        %v1139 = vadd.f32 0.0, %v1138
        %v1140 = vpop.f32.mrf.mxu0
        %1141 = vmatprep.mubr.f32.mxu0 0.0
        %1142 = vmatmul.mubr.f32.gmra.mxu0 %v910
        %v1143 = vpop.f32.mrf.mxu0
        %v1144 = vadd.f32 0.0, %v1143
        %v1145 = vpop.f32.mrf.mxu0
        %1146 = vmatprep.mubr.f32.mxu0 0.0
        %1147 = vmatmul.mubr.f32.gmra.mxu0 %v912
        %v1148 = vpop.f32.mrf.mxu0
        %v1149 = vadd.f32 0.0, %v1148
        %v1150 = vpop.f32.mrf.mxu0
        %1151 = vmatprep.mubr.f32.mxu0 0.0
        %1152 = vmatmul.mubr.f32.gmra.mxu0 %v915
        %v1153 = vpop.f32.mrf.mxu0
        %v1154 = vadd.f32 0.0, %v1153
        %v1155 = vpop.f32.mrf.mxu0
        %1156 = vmatprep.mubr.f32.mxu0 0.0
        %1157 = vmatmul.mubr.f32.gmra.mxu0 %v917
        %v1158 = vpop.f32.mrf.mxu0
        %v1159 = vadd.f32 0.0, %v1158
        %v1160 = vpop.f32.mrf.mxu0
        %1161 = vmatprep.mubr.f32.mxu0 0.0
        %1162 = vmatmul.mubr.f32.gmra.mxu0 %v920
        %v1163 = vpop.f32.mrf.mxu0
        %v1164 = vadd.f32 0.0, %v1163
        %v1165 = vpop.f32.mrf.mxu0
        %1166 = vmatprep.mubr.f32.mxu0 0.0
        %1167 = vmatmul.mubr.f32.gmra.mxu0 %v922
        %v1168 = vpop.f32.mrf.mxu0
        %v1169 = vadd.f32 0.0, %v1168
        %v1170 = vpop.f32.mrf.mxu0
        %1171 = vmatprep.mubr.f32.mxu0 0.0
        %1172 = vmatmul.mubr.f32.gmra.mxu0 %v925
        %v1173 = vpop.f32.mrf.mxu0
        %v1174 = vadd.f32 0.0, %v1173
        %v1175 = vpop.f32.mrf.mxu0
        %1176 = vmatprep.mubr.f32.mxu0 0.0
        %1177 = vmatmul.mubr.f32.gmra.mxu0 %v927
        %v1178 = vpop.f32.mrf.mxu0
        %v1179 = vadd.f32 0.0, %v1178
        %v1180 = vpop.f32.mrf.mxu0
        %1181 = vmatprep.mubr.f32.mxu0 0.0
        %1182 = vmatmul.mubr.f32.gmra.mxu0 %v930
        %v1183 = vpop.f32.mrf.mxu0
        %v1184 = vadd.f32 0.0, %v1183
        %v1185 = vpop.f32.mrf.mxu0
        %1186 = vmatprep.mubr.f32.mxu0 0.0
        %1187 = vmatmul.mubr.f32.gmra.mxu0 %v932
        %v1188 = vpop.f32.mrf.mxu0
        %v1189 = vadd.f32 0.0, %v1188
        %v1190 = vpop.f32.mrf.mxu0
        %1191 = vmatprep.mubr.f32.mxu0 0.0
        %1192 = vmatmul.mubr.f32.gmra.mxu0 %v935
        %v1193 = vpop.f32.mrf.mxu0
        %v1194 = vadd.f32 0.0, %v1193
        %v1195 = vpop.f32.mrf.mxu0
        %1196 = vmatprep.mubr.f32.mxu0 0.0
        %1197 = vmatmul.mubr.f32.gmra.mxu0 %v937
        %v1198 = vpop.f32.mrf.mxu0
        %v1199 = vadd.f32 0.0, %v1198
        %v1200 = vpop.f32.mrf.mxu0
        %1201 = vmatprep.mubr.f32.mxu0 0.0
        %1202 = vmatmul.mubr.f32.gmra.mxu0 %v940
        %v1203 = vpop.f32.mrf.mxu0
        %v1204 = vadd.f32 0.0, %v1203
        %v1205 = vpop.f32.mrf.mxu0
        %1206 = vmatprep.mubr.f32.mxu0 0.0
        %1207 = vmatmul.mubr.f32.gmra.mxu0 %v942
        %v1208 = vpop.f32.mrf.mxu0
        %v1209 = vadd.f32 0.0, %v1208
        %v1210 = vpop.f32.mrf.mxu0
        %1211 = vmatprep.mubr.f32.mxu0 0.0
        %1212 = vmatmul.mubr.f32.gmra.mxu0 %v945
        %v1213 = vpop.f32.mrf.mxu0
        %v1214 = vadd.f32 0.0, %v1213
        %v1215 = vpop.f32.mrf.mxu0
        %1216 = vmatprep.mubr.f32.mxu0 0.0
        %1217 = vmatmul.mubr.f32.gmra.mxu0 %v947
        %v1218 = vpop.f32.mrf.mxu0
        %v1219 = vadd.f32 0.0, %v1218
        %v1220 = vpop.f32.mrf.mxu0
        %1221 = vdwg.mxu0
        %v1222 = vadd.f32 %v709, %v1064
        %v1223 = vadd.f32 %v714, %v1069
        %v1224 = vadd.f32 %v719, %v1074
        %v1225 = vadd.f32 %v724, %v1079
        %v1226 = vadd.f32 %v729, %v1084
        %v1227 = vadd.f32 %v734, %v1089
        %v1228 = vadd.f32 %v739, %v1094
        %v1229 = vadd.f32 %v744, %v1099
        %v1230 = vadd.f32 %v749, %v1104
        %v1231 = vadd.f32 %v754, %v1109
        %v1232 = vadd.f32 %v759, %v1114
        %v1233 = vadd.f32 %v764, %v1119
        %v1234 = vadd.f32 %v769, %v1124
        %v1235 = vadd.f32 %v774, %v1129
        %v1236 = vadd.f32 %v779, %v1134
        %v1237 = vadd.f32 %v784, %v1139
        %v1238 = vadd.f32 %v789, %v1144
        %v1239 = vadd.f32 %v794, %v1149
        %v1240 = vadd.f32 %v799, %v1154
        %v1241 = vadd.f32 %v804, %v1159
        %v1242 = vadd.f32 %v809, %v1164
        %v1243 = vadd.f32 %v814, %v1169
        %v1244 = vadd.f32 %v819, %v1174
        %v1245 = vadd.f32 %v824, %v1179
        %v1246 = vadd.f32 %v829, %v1184
        %v1247 = vadd.f32 %v834, %v1189
        %v1248 = vadd.f32 %v839, %v1194
        %v1249 = vadd.f32 %v844, %v1199
        %v1250 = vadd.f32 %v849, %v1204
        %v1251 = vadd.f32 %v854, %v1209
        %v1252 = vadd.f32 %v859, %v1214
        %v1253 = vadd.f32 %v864, %v1219
        %s1254 = scalar_lea.vmem %s1, 384
        %v1255 = vld [vmem:[%s1254] sm:$0xff]
        %v1256 = vld [vmem:[%s1254 + $0x8] sm:$0xff]
        %v1257 = vld [vmem:[%s1254 + $0x10] sm:$0xff]
        %v1258 = vld [vmem:[%s1254 + $0x18] sm:$0xff]
        %v1259 = vld [vmem:[%s1254 + $0x20] sm:$0xff]
        %v1260 = vld [vmem:[%s1254 + $0x28] sm:$0xff]
        %v1261 = vld [vmem:[%s1254 + $0x30] sm:$0xff]
        %v1262 = vld [vmem:[%s1254 + $0x38] sm:$0xff]
        %v1263 = vld [vmem:[%s1254 + $0x40] sm:$0xff]
        %v1264 = vld [vmem:[%s1254 + $0x48] sm:$0xff]
        %v1265 = vld [vmem:[%s1254 + $0x50] sm:$0xff]
        %v1266 = vld [vmem:[%s1254 + $0x58] sm:$0xff]
        %v1267 = vld [vmem:[%s1254 + $0x60] sm:$0xff]
        %v1268 = vld [vmem:[%s1254 + $0x68] sm:$0xff]
        %v1269 = vld [vmem:[%s1254 + $0x70] sm:$0xff]
        %v1270 = vld [vmem:[%s1254 + $0x78] sm:$0xff]
        %1271 = vmatprep.subr.mxu0 0.0
        %1272 = vmatpush1.msra.mxu0 %v1270
        %1273 = vmatprep.subr.mxu0 0.0
        %1274 = vmatpush1.msra.mxu0 %v1269
        %1275 = vmatprep.subr.mxu0 0.0
        %1276 = vmatpush1.msra.mxu0 %v1268
        %1277 = vmatprep.subr.mxu0 0.0
        %1278 = vmatpush1.msra.mxu0 %v1267
        %1279 = vmatprep.subr.mxu0 0.0
        %1280 = vmatpush1.msra.mxu0 %v1266
        %1281 = vmatprep.subr.mxu0 0.0
        %1282 = vmatpush1.msra.mxu0 %v1265
        %1283 = vmatprep.subr.mxu0 0.0
        %1284 = vmatpush1.msra.mxu0 %v1264
        %1285 = vmatprep.subr.mxu0 0.0
        %1286 = vmatpush1.msra.mxu0 %v1263
        %1287 = vmatprep.subr.mxu0 0.0
        %1288 = vmatpush1.msra.mxu0 %v1262
        %1289 = vmatprep.subr.mxu0 0.0
        %1290 = vmatpush1.msra.mxu0 %v1261
        %1291 = vmatprep.subr.mxu0 0.0
        %1292 = vmatpush1.msra.mxu0 %v1260
        %1293 = vmatprep.subr.mxu0 0.0
        %1294 = vmatpush1.msra.mxu0 %v1259
        %1295 = vmatprep.subr.mxu0 0.0
        %1296 = vmatpush1.msra.mxu0 %v1258
        %1297 = vmatprep.subr.mxu0 0.0
        %1298 = vmatpush1.msra.mxu0 %v1257
        %1299 = vmatprep.subr.mxu0 0.0
        %1300 = vmatpush1.msra.mxu0 %v1256
        %1301 = vmatprep.subr.mxu0 0.0
        %1302 = vmatpush1.msra.mxu0 %v1255
        %1303 = vmatprep.subr.mxu0 0.0
        %1304 = vmatpush2.msra.mxu0 0.0
        %1305 = vmatprep.subr.mxu0 0.0
        %1306 = vmatpush2.msra.mxu0 0.0
        %1307 = vmatprep.subr.mxu0 0.0
        %1308 = vmatpush2.msra.mxu0 0.0
        %1309 = vmatprep.subr.mxu0 0.0
        %1310 = vmatpush2.msra.mxu0 0.0
        %1311 = vmatprep.subr.mxu0 0.0
        %1312 = vmatpush2.msra.mxu0 0.0
        %1313 = vmatprep.subr.mxu0 0.0
        %1314 = vmatpush2.msra.mxu0 0.0
        %1315 = vmatprep.subr.mxu0 0.0
        %1316 = vmatpush2.msra.mxu0 0.0
        %1317 = vmatprep.subr.mxu0 0.0
        %1318 = vmatpush2.msra.mxu0 0.0
        %1319 = vmatprep.subr.mxu0 0.0
        %1320 = vmatpush2.msra.mxu0 0.0
        %1321 = vmatprep.subr.mxu0 0.0
        %1322 = vmatpush2.msra.mxu0 0.0
        %1323 = vmatprep.subr.mxu0 0.0
        %1324 = vmatpush2.msra.mxu0 0.0
        %1325 = vmatprep.subr.mxu0 0.0
        %1326 = vmatpush2.msra.mxu0 0.0
        %1327 = vmatprep.subr.mxu0 0.0
        %1328 = vmatpush2.msra.mxu0 0.0
        %1329 = vmatprep.subr.mxu0 0.0
        %1330 = vmatpush2.msra.mxu0 0.0
        %1331 = vmatprep.subr.mxu0 0.0
        %1332 = vmatpush2.msra.mxu0 0.0
        %1333 = vmatprep.subr.mxu0 0.0
        %1334 = vmatpush2.msra.mxu0 0.0
        %1335 = vmatprep.mubr.f32.mxu0 0.0
        %1336 = vmatmul.mubr.f32.gmra.mxu0 %v172
        %v1337 = vpop.f32.mrf.mxu0
        %v1338 = vadd.f32 0.0, %v1337
        %v1339 = vpop.f32.mrf.mxu0
        %1340 = vmatprep.mubr.f32.mxu0 0.0
        %1341 = vmatmul.mubr.f32.gmra.mxu0 %v173
        %v1342 = vpop.f32.mrf.mxu0
        %v1343 = vadd.f32 0.0, %v1342
        %v1344 = vpop.f32.mrf.mxu0
        %1345 = vmatprep.mubr.f32.mxu0 0.0
        %1346 = vmatmul.mubr.f32.gmra.mxu0 %v175
        %v1347 = vpop.f32.mrf.mxu0
        %v1348 = vadd.f32 0.0, %v1347
        %v1349 = vpop.f32.mrf.mxu0
        %1350 = vmatprep.mubr.f32.mxu0 0.0
        %1351 = vmatmul.mubr.f32.gmra.mxu0 %v176
        %v1352 = vpop.f32.mrf.mxu0
        %v1353 = vadd.f32 0.0, %v1352
        %v1354 = vpop.f32.mrf.mxu0
        %1355 = vmatprep.mubr.f32.mxu0 0.0
        %1356 = vmatmul.mubr.f32.gmra.mxu0 %v178
        %v1357 = vpop.f32.mrf.mxu0
        %v1358 = vadd.f32 0.0, %v1357
        %v1359 = vpop.f32.mrf.mxu0
        %1360 = vmatprep.mubr.f32.mxu0 0.0
        %1361 = vmatmul.mubr.f32.gmra.mxu0 %v179
        %v1362 = vpop.f32.mrf.mxu0
        %v1363 = vadd.f32 0.0, %v1362
        %v1364 = vpop.f32.mrf.mxu0
        %1365 = vmatprep.mubr.f32.mxu0 0.0
        %1366 = vmatmul.mubr.f32.gmra.mxu0 %v181
        %v1367 = vpop.f32.mrf.mxu0
        %v1368 = vadd.f32 0.0, %v1367
        %v1369 = vpop.f32.mrf.mxu0
        %1370 = vmatprep.mubr.f32.mxu0 0.0
        %1371 = vmatmul.mubr.f32.gmra.mxu0 %v182
        %v1372 = vpop.f32.mrf.mxu0
        %v1373 = vadd.f32 0.0, %v1372
        %v1374 = vpop.f32.mrf.mxu0
        %1375 = vmatprep.mubr.f32.mxu0 0.0
        %1376 = vmatmul.mubr.f32.gmra.mxu0 %v184
        %v1377 = vpop.f32.mrf.mxu0
        %v1378 = vadd.f32 0.0, %v1377
        %v1379 = vpop.f32.mrf.mxu0
        %1380 = vmatprep.mubr.f32.mxu0 0.0
        %1381 = vmatmul.mubr.f32.gmra.mxu0 %v185
        %v1382 = vpop.f32.mrf.mxu0
        %v1383 = vadd.f32 0.0, %v1382
        %v1384 = vpop.f32.mrf.mxu0
        %1385 = vmatprep.mubr.f32.mxu0 0.0
        %1386 = vmatmul.mubr.f32.gmra.mxu0 %v187
        %v1387 = vpop.f32.mrf.mxu0
        %v1388 = vadd.f32 0.0, %v1387
        %v1389 = vpop.f32.mrf.mxu0
        %1390 = vmatprep.mubr.f32.mxu0 0.0
        %1391 = vmatmul.mubr.f32.gmra.mxu0 %v188
        %v1392 = vpop.f32.mrf.mxu0
        %v1393 = vadd.f32 0.0, %v1392
        %v1394 = vpop.f32.mrf.mxu0
        %1395 = vmatprep.mubr.f32.mxu0 0.0
        %1396 = vmatmul.mubr.f32.gmra.mxu0 %v190
        %v1397 = vpop.f32.mrf.mxu0
        %v1398 = vadd.f32 0.0, %v1397
        %v1399 = vpop.f32.mrf.mxu0
        %1400 = vmatprep.mubr.f32.mxu0 0.0
        %1401 = vmatmul.mubr.f32.gmra.mxu0 %v191
        %v1402 = vpop.f32.mrf.mxu0
        %v1403 = vadd.f32 0.0, %v1402
        %v1404 = vpop.f32.mrf.mxu0
        %1405 = vmatprep.mubr.f32.mxu0 0.0
        %1406 = vmatmul.mubr.f32.gmra.mxu0 %v193
        %v1407 = vpop.f32.mrf.mxu0
        %v1408 = vadd.f32 0.0, %v1407
        %v1409 = vpop.f32.mrf.mxu0
        %1410 = vmatprep.mubr.f32.mxu0 0.0
        %1411 = vmatmul.mubr.f32.gmra.mxu0 %v194
        %v1412 = vpop.f32.mrf.mxu0
        %v1413 = vadd.f32 0.0, %v1412
        %v1414 = vpop.f32.mrf.mxu0
        %1415 = vmatprep.mubr.f32.mxu0 0.0
        %1416 = vmatmul.mubr.f32.gmra.mxu0 %v196
        %v1417 = vpop.f32.mrf.mxu0
        %v1418 = vadd.f32 0.0, %v1417
        %v1419 = vpop.f32.mrf.mxu0
        %1420 = vmatprep.mubr.f32.mxu0 0.0
        %1421 = vmatmul.mubr.f32.gmra.mxu0 %v197
        %v1422 = vpop.f32.mrf.mxu0
        %v1423 = vadd.f32 0.0, %v1422
        %v1424 = vpop.f32.mrf.mxu0
        %1425 = vmatprep.mubr.f32.mxu0 0.0
        %1426 = vmatmul.mubr.f32.gmra.mxu0 %v199
        %v1427 = vpop.f32.mrf.mxu0
        %v1428 = vadd.f32 0.0, %v1427
        %v1429 = vpop.f32.mrf.mxu0
        %1430 = vmatprep.mubr.f32.mxu0 0.0
        %1431 = vmatmul.mubr.f32.gmra.mxu0 %v200
        %v1432 = vpop.f32.mrf.mxu0
        %v1433 = vadd.f32 0.0, %v1432
        %v1434 = vpop.f32.mrf.mxu0
        %1435 = vmatprep.mubr.f32.mxu0 0.0
        %1436 = vmatmul.mubr.f32.gmra.mxu0 %v202
        %v1437 = vpop.f32.mrf.mxu0
        %v1438 = vadd.f32 0.0, %v1437
        %v1439 = vpop.f32.mrf.mxu0
        %1440 = vmatprep.mubr.f32.mxu0 0.0
        %1441 = vmatmul.mubr.f32.gmra.mxu0 %v203
        %v1442 = vpop.f32.mrf.mxu0
        %v1443 = vadd.f32 0.0, %v1442
        %v1444 = vpop.f32.mrf.mxu0
        %1445 = vmatprep.mubr.f32.mxu0 0.0
        %1446 = vmatmul.mubr.f32.gmra.mxu0 %v205
        %v1447 = vpop.f32.mrf.mxu0
        %v1448 = vadd.f32 0.0, %v1447
        %v1449 = vpop.f32.mrf.mxu0
        %1450 = vmatprep.mubr.f32.mxu0 0.0
        %1451 = vmatmul.mubr.f32.gmra.mxu0 %v206
        %v1452 = vpop.f32.mrf.mxu0
        %v1453 = vadd.f32 0.0, %v1452
        %v1454 = vpop.f32.mrf.mxu0
        %1455 = vmatprep.mubr.f32.mxu0 0.0
        %1456 = vmatmul.mubr.f32.gmra.mxu0 %v208
        %v1457 = vpop.f32.mrf.mxu0
        %v1458 = vadd.f32 0.0, %v1457
        %v1459 = vpop.f32.mrf.mxu0
        %1460 = vmatprep.mubr.f32.mxu0 0.0
        %1461 = vmatmul.mubr.f32.gmra.mxu0 %v209
        %v1462 = vpop.f32.mrf.mxu0
        %v1463 = vadd.f32 0.0, %v1462
        %v1464 = vpop.f32.mrf.mxu0
        %1465 = vmatprep.mubr.f32.mxu0 0.0
        %1466 = vmatmul.mubr.f32.gmra.mxu0 %v211
        %v1467 = vpop.f32.mrf.mxu0
        %v1468 = vadd.f32 0.0, %v1467
        %v1469 = vpop.f32.mrf.mxu0
        %1470 = vmatprep.mubr.f32.mxu0 0.0
        %1471 = vmatmul.mubr.f32.gmra.mxu0 %v212
        %v1472 = vpop.f32.mrf.mxu0
        %v1473 = vadd.f32 0.0, %v1472
        %v1474 = vpop.f32.mrf.mxu0
        %1475 = vmatprep.mubr.f32.mxu0 0.0
        %1476 = vmatmul.mubr.f32.gmra.mxu0 %v214
        %v1477 = vpop.f32.mrf.mxu0
        %v1478 = vadd.f32 0.0, %v1477
        %v1479 = vpop.f32.mrf.mxu0
        %1480 = vmatprep.mubr.f32.mxu0 0.0
        %1481 = vmatmul.mubr.f32.gmra.mxu0 %v215
        %v1482 = vpop.f32.mrf.mxu0
        %v1483 = vadd.f32 0.0, %v1482
        %v1484 = vpop.f32.mrf.mxu0
        %1485 = vmatprep.mubr.f32.mxu0 0.0
        %1486 = vmatmul.mubr.f32.gmra.mxu0 %v217
        %v1487 = vpop.f32.mrf.mxu0
        %v1488 = vadd.f32 0.0, %v1487
        %v1489 = vpop.f32.mrf.mxu0
        %1490 = vmatprep.mubr.f32.mxu0 0.0
        %1491 = vmatmul.mubr.f32.gmra.mxu0 %v218
        %v1492 = vpop.f32.mrf.mxu0
        %v1493 = vadd.f32 0.0, %v1492
        %v1494 = vpop.f32.mrf.mxu0
        %1495 = vdwg.mxu0
        %v1496 = vadd.f32 %v1222, %v1338
        %v1497 = vadd.f32 %v1223, %v1343
        %v1498 = vadd.f32 %v1224, %v1348
        %v1499 = vadd.f32 %v1225, %v1353
        %v1500 = vadd.f32 %v1226, %v1358
        %v1501 = vadd.f32 %v1227, %v1363
        %v1502 = vadd.f32 %v1228, %v1368
        %v1503 = vadd.f32 %v1229, %v1373
        %v1504 = vadd.f32 %v1230, %v1378
        %v1505 = vadd.f32 %v1231, %v1383
        %v1506 = vadd.f32 %v1232, %v1388
        %v1507 = vadd.f32 %v1233, %v1393
        %v1508 = vadd.f32 %v1234, %v1398
        %v1509 = vadd.f32 %v1235, %v1403
        %v1510 = vadd.f32 %v1236, %v1408
        %v1511 = vadd.f32 %v1237, %v1413
        %v1512 = vadd.f32 %v1238, %v1418
        %v1513 = vadd.f32 %v1239, %v1423
        %v1514 = vadd.f32 %v1240, %v1428
        %v1515 = vadd.f32 %v1241, %v1433
        %v1516 = vadd.f32 %v1242, %v1438
        %v1517 = vadd.f32 %v1243, %v1443
        %v1518 = vadd.f32 %v1244, %v1448
        %v1519 = vadd.f32 %v1245, %v1453
        %v1520 = vadd.f32 %v1246, %v1458
        %v1521 = vadd.f32 %v1247, %v1463
        %v1522 = vadd.f32 %v1248, %v1468
        %v1523 = vadd.f32 %v1249, %v1473
        %v1524 = vadd.f32 %v1250, %v1478
        %v1525 = vadd.f32 %v1251, %v1483
        %v1526 = vadd.f32 %v1252, %v1488
        %v1527 = vadd.f32 %v1253, %v1493
        %v1531 = vrot.slane %v217, 1
        %v1532 = vrot.slane %v218, 1
        %v1533 = vsel %vm287, %v1531, %v1532
        %v1534 = vrot.slane %v219, 1
        %v1535 = vsel %vm287, %v1532, %v1534
        %s1538 = scalar_lea.vmem %s1, 512
        %v1539 = vld [vmem:[%s1538] sm:$0xff]
        %v1540 = vld [vmem:[%s1538 + $0x8] sm:$0xff]
        %v1541 = vld [vmem:[%s1538 + $0x10] sm:$0xff]
        %v1542 = vld [vmem:[%s1538 + $0x18] sm:$0xff]
        %v1543 = vld [vmem:[%s1538 + $0x20] sm:$0xff]
        %v1544 = vld [vmem:[%s1538 + $0x28] sm:$0xff]
        %v1545 = vld [vmem:[%s1538 + $0x30] sm:$0xff]
        %v1546 = vld [vmem:[%s1538 + $0x38] sm:$0xff]
        %v1547 = vld [vmem:[%s1538 + $0x40] sm:$0xff]
        %v1548 = vld [vmem:[%s1538 + $0x48] sm:$0xff]
        %v1549 = vld [vmem:[%s1538 + $0x50] sm:$0xff]
        %v1550 = vld [vmem:[%s1538 + $0x58] sm:$0xff]
        %v1551 = vld [vmem:[%s1538 + $0x60] sm:$0xff]
        %v1552 = vld [vmem:[%s1538 + $0x68] sm:$0xff]
        %v1553 = vld [vmem:[%s1538 + $0x70] sm:$0xff]
        %v1554 = vld [vmem:[%s1538 + $0x78] sm:$0xff]
        %1555 = vmatprep.subr.mxu0 0.0
        %1556 = vmatpush1.msra.mxu0 %v1554
        %1557 = vmatprep.subr.mxu0 0.0
        %1558 = vmatpush1.msra.mxu0 %v1553
        %1559 = vmatprep.subr.mxu0 0.0
        %1560 = vmatpush1.msra.mxu0 %v1552
        %1561 = vmatprep.subr.mxu0 0.0
        %1562 = vmatpush1.msra.mxu0 %v1551
        %1563 = vmatprep.subr.mxu0 0.0
        %1564 = vmatpush1.msra.mxu0 %v1550
        %1565 = vmatprep.subr.mxu0 0.0
        %1566 = vmatpush1.msra.mxu0 %v1549
        %1567 = vmatprep.subr.mxu0 0.0
        %1568 = vmatpush1.msra.mxu0 %v1548
        %1569 = vmatprep.subr.mxu0 0.0
        %1570 = vmatpush1.msra.mxu0 %v1547
        %1571 = vmatprep.subr.mxu0 0.0
        %1572 = vmatpush1.msra.mxu0 %v1546
        %1573 = vmatprep.subr.mxu0 0.0
        %1574 = vmatpush1.msra.mxu0 %v1545
        %1575 = vmatprep.subr.mxu0 0.0
        %1576 = vmatpush1.msra.mxu0 %v1544
        %1577 = vmatprep.subr.mxu0 0.0
        %1578 = vmatpush1.msra.mxu0 %v1543
        %1579 = vmatprep.subr.mxu0 0.0
        %1580 = vmatpush1.msra.mxu0 %v1542
        %1581 = vmatprep.subr.mxu0 0.0
        %1582 = vmatpush1.msra.mxu0 %v1541
        %1583 = vmatprep.subr.mxu0 0.0
        %1584 = vmatpush1.msra.mxu0 %v1540
        %1585 = vmatprep.subr.mxu0 0.0
        %1586 = vmatpush1.msra.mxu0 %v1539
        %1587 = vmatprep.subr.mxu0 0.0
        %1588 = vmatpush2.msra.mxu0 0.0
        %1589 = vmatprep.subr.mxu0 0.0
        %1590 = vmatpush2.msra.mxu0 0.0
        %1591 = vmatprep.subr.mxu0 0.0
        %1592 = vmatpush2.msra.mxu0 0.0
        %1593 = vmatprep.subr.mxu0 0.0
        %1594 = vmatpush2.msra.mxu0 0.0
        %1595 = vmatprep.subr.mxu0 0.0
        %1596 = vmatpush2.msra.mxu0 0.0
        %1597 = vmatprep.subr.mxu0 0.0
        %1598 = vmatpush2.msra.mxu0 0.0
        %1599 = vmatprep.subr.mxu0 0.0
        %1600 = vmatpush2.msra.mxu0 0.0
        %1601 = vmatprep.subr.mxu0 0.0
        %1602 = vmatpush2.msra.mxu0 0.0
        %1603 = vmatprep.subr.mxu0 0.0
        %1604 = vmatpush2.msra.mxu0 0.0
        %1605 = vmatprep.subr.mxu0 0.0
        %1606 = vmatpush2.msra.mxu0 0.0
        %1607 = vmatprep.subr.mxu0 0.0
        %1608 = vmatpush2.msra.mxu0 0.0
        %1609 = vmatprep.subr.mxu0 0.0
        %1610 = vmatpush2.msra.mxu0 0.0
        %1611 = vmatprep.subr.mxu0 0.0
        %1612 = vmatpush2.msra.mxu0 0.0
        %1613 = vmatprep.subr.mxu0 0.0
        %1614 = vmatpush2.msra.mxu0 0.0
        %1615 = vmatprep.subr.mxu0 0.0
        %1616 = vmatpush2.msra.mxu0 0.0
        %1617 = vmatprep.subr.mxu0 0.0
        %1618 = vmatpush2.msra.mxu0 0.0
        %1619 = vmatprep.mubr.f32.mxu0 0.0
        %1620 = vmatmul.mubr.f32.gmra.mxu0 %v295
        %v1621 = vpop.f32.mrf.mxu0
        %v1622 = vadd.f32 0.0, %v1621
        %v1623 = vpop.f32.mrf.mxu0
        %1624 = vmatprep.mubr.f32.mxu0 0.0
        %1625 = vmatmul.mubr.f32.gmra.mxu0 %v297
        %v1626 = vpop.f32.mrf.mxu0
        %v1627 = vadd.f32 0.0, %v1626
        %v1628 = vpop.f32.mrf.mxu0
        %1629 = vmatprep.mubr.f32.mxu0 0.0
        %1630 = vmatmul.mubr.f32.gmra.mxu0 %v300
        %v1631 = vpop.f32.mrf.mxu0
        %v1632 = vadd.f32 0.0, %v1631
        %v1633 = vpop.f32.mrf.mxu0
        %1634 = vmatprep.mubr.f32.mxu0 0.0
        %1635 = vmatmul.mubr.f32.gmra.mxu0 %v302
        %v1636 = vpop.f32.mrf.mxu0
        %v1637 = vadd.f32 0.0, %v1636
        %v1638 = vpop.f32.mrf.mxu0
        %1639 = vmatprep.mubr.f32.mxu0 0.0
        %1640 = vmatmul.mubr.f32.gmra.mxu0 %v305
        %v1641 = vpop.f32.mrf.mxu0
        %v1642 = vadd.f32 0.0, %v1641
        %v1643 = vpop.f32.mrf.mxu0
        %1644 = vmatprep.mubr.f32.mxu0 0.0
        %1645 = vmatmul.mubr.f32.gmra.mxu0 %v307
        %v1646 = vpop.f32.mrf.mxu0
        %v1647 = vadd.f32 0.0, %v1646
        %v1648 = vpop.f32.mrf.mxu0
        %1649 = vmatprep.mubr.f32.mxu0 0.0
        %1650 = vmatmul.mubr.f32.gmra.mxu0 %v310
        %v1651 = vpop.f32.mrf.mxu0
        %v1652 = vadd.f32 0.0, %v1651
        %v1653 = vpop.f32.mrf.mxu0
        %1654 = vmatprep.mubr.f32.mxu0 0.0
        %1655 = vmatmul.mubr.f32.gmra.mxu0 %v312
        %v1656 = vpop.f32.mrf.mxu0
        %v1657 = vadd.f32 0.0, %v1656
        %v1658 = vpop.f32.mrf.mxu0
        %1659 = vmatprep.mubr.f32.mxu0 0.0
        %1660 = vmatmul.mubr.f32.gmra.mxu0 %v315
        %v1661 = vpop.f32.mrf.mxu0
        %v1662 = vadd.f32 0.0, %v1661
        %v1663 = vpop.f32.mrf.mxu0
        %1664 = vmatprep.mubr.f32.mxu0 0.0
        %1665 = vmatmul.mubr.f32.gmra.mxu0 %v317
        %v1666 = vpop.f32.mrf.mxu0
        %v1667 = vadd.f32 0.0, %v1666
        %v1668 = vpop.f32.mrf.mxu0
        %1669 = vmatprep.mubr.f32.mxu0 0.0
        %1670 = vmatmul.mubr.f32.gmra.mxu0 %v320
        %v1671 = vpop.f32.mrf.mxu0
        %v1672 = vadd.f32 0.0, %v1671
        %v1673 = vpop.f32.mrf.mxu0
        %1674 = vmatprep.mubr.f32.mxu0 0.0
        %1675 = vmatmul.mubr.f32.gmra.mxu0 %v322
        %v1676 = vpop.f32.mrf.mxu0
        %v1677 = vadd.f32 0.0, %v1676
        %v1678 = vpop.f32.mrf.mxu0
        %1679 = vmatprep.mubr.f32.mxu0 0.0
        %1680 = vmatmul.mubr.f32.gmra.mxu0 %v325
        %v1681 = vpop.f32.mrf.mxu0
        %v1682 = vadd.f32 0.0, %v1681
        %v1683 = vpop.f32.mrf.mxu0
        %1684 = vmatprep.mubr.f32.mxu0 0.0
        %1685 = vmatmul.mubr.f32.gmra.mxu0 %v327
        %v1686 = vpop.f32.mrf.mxu0
        %v1687 = vadd.f32 0.0, %v1686
        %v1688 = vpop.f32.mrf.mxu0
        %1689 = vmatprep.mubr.f32.mxu0 0.0
        %1690 = vmatmul.mubr.f32.gmra.mxu0 %v330
        %v1691 = vpop.f32.mrf.mxu0
        %v1692 = vadd.f32 0.0, %v1691
        %v1693 = vpop.f32.mrf.mxu0
        %1694 = vmatprep.mubr.f32.mxu0 0.0
        %1695 = vmatmul.mubr.f32.gmra.mxu0 %v332
        %v1696 = vpop.f32.mrf.mxu0
        %v1697 = vadd.f32 0.0, %v1696
        %v1698 = vpop.f32.mrf.mxu0
        %1699 = vmatprep.mubr.f32.mxu0 0.0
        %1700 = vmatmul.mubr.f32.gmra.mxu0 %v335
        %v1701 = vpop.f32.mrf.mxu0
        %v1702 = vadd.f32 0.0, %v1701
        %v1703 = vpop.f32.mrf.mxu0
        %1704 = vmatprep.mubr.f32.mxu0 0.0
        %1705 = vmatmul.mubr.f32.gmra.mxu0 %v337
        %v1706 = vpop.f32.mrf.mxu0
        %v1707 = vadd.f32 0.0, %v1706
        %v1708 = vpop.f32.mrf.mxu0
        %1709 = vmatprep.mubr.f32.mxu0 0.0
        %1710 = vmatmul.mubr.f32.gmra.mxu0 %v340
        %v1711 = vpop.f32.mrf.mxu0
        %v1712 = vadd.f32 0.0, %v1711
        %v1713 = vpop.f32.mrf.mxu0
        %1714 = vmatprep.mubr.f32.mxu0 0.0
        %1715 = vmatmul.mubr.f32.gmra.mxu0 %v342
        %v1716 = vpop.f32.mrf.mxu0
        %v1717 = vadd.f32 0.0, %v1716
        %v1718 = vpop.f32.mrf.mxu0
        %1719 = vmatprep.mubr.f32.mxu0 0.0
        %1720 = vmatmul.mubr.f32.gmra.mxu0 %v345
        %v1721 = vpop.f32.mrf.mxu0
        %v1722 = vadd.f32 0.0, %v1721
        %v1723 = vpop.f32.mrf.mxu0
        %1724 = vmatprep.mubr.f32.mxu0 0.0
        %1725 = vmatmul.mubr.f32.gmra.mxu0 %v347
        %v1726 = vpop.f32.mrf.mxu0
        %v1727 = vadd.f32 0.0, %v1726
        %v1728 = vpop.f32.mrf.mxu0
        %1729 = vmatprep.mubr.f32.mxu0 0.0
        %1730 = vmatmul.mubr.f32.gmra.mxu0 %v350
        %v1731 = vpop.f32.mrf.mxu0
        %v1732 = vadd.f32 0.0, %v1731
        %v1733 = vpop.f32.mrf.mxu0
        %1734 = vmatprep.mubr.f32.mxu0 0.0
        %1735 = vmatmul.mubr.f32.gmra.mxu0 %v352
        %v1736 = vpop.f32.mrf.mxu0
        %v1737 = vadd.f32 0.0, %v1736
        %v1738 = vpop.f32.mrf.mxu0
        %1739 = vmatprep.mubr.f32.mxu0 0.0
        %1740 = vmatmul.mubr.f32.gmra.mxu0 %v355
        %v1741 = vpop.f32.mrf.mxu0
        %v1742 = vadd.f32 0.0, %v1741
        %v1743 = vpop.f32.mrf.mxu0
        %1744 = vmatprep.mubr.f32.mxu0 0.0
        %1745 = vmatmul.mubr.f32.gmra.mxu0 %v357
        %v1746 = vpop.f32.mrf.mxu0
        %v1747 = vadd.f32 0.0, %v1746
        %v1748 = vpop.f32.mrf.mxu0
        %1749 = vmatprep.mubr.f32.mxu0 0.0
        %1750 = vmatmul.mubr.f32.gmra.mxu0 %v360
        %v1751 = vpop.f32.mrf.mxu0
        %v1752 = vadd.f32 0.0, %v1751
        %v1753 = vpop.f32.mrf.mxu0
        %1754 = vmatprep.mubr.f32.mxu0 0.0
        %1755 = vmatmul.mubr.f32.gmra.mxu0 %v362
        %v1756 = vpop.f32.mrf.mxu0
        %v1757 = vadd.f32 0.0, %v1756
        %v1758 = vpop.f32.mrf.mxu0
        %1759 = vmatprep.mubr.f32.mxu0 0.0
        %1760 = vmatmul.mubr.f32.gmra.mxu0 %v365
        %v1761 = vpop.f32.mrf.mxu0
        %v1762 = vadd.f32 0.0, %v1761
        %v1763 = vpop.f32.mrf.mxu0
        %1764 = vmatprep.mubr.f32.mxu0 0.0
        %1765 = vmatmul.mubr.f32.gmra.mxu0 %v367
        %v1766 = vpop.f32.mrf.mxu0
        %v1767 = vadd.f32 0.0, %v1766
        %v1768 = vpop.f32.mrf.mxu0
        %1769 = vmatprep.mubr.f32.mxu0 0.0
        %1770 = vmatmul.mubr.f32.gmra.mxu0 %v1533
        %v1771 = vpop.f32.mrf.mxu0
        %v1772 = vadd.f32 0.0, %v1771
        %v1773 = vpop.f32.mrf.mxu0
        %1774 = vmatprep.mubr.f32.mxu0 0.0
        %1775 = vmatmul.mubr.f32.gmra.mxu0 %v1535
        %v1776 = vpop.f32.mrf.mxu0
        %v1777 = vadd.f32 0.0, %v1776
        %v1778 = vpop.f32.mrf.mxu0
        %1779 = vdwg.mxu0
        %v1780 = vadd.f32 %v1496, %v1622
        %v1781 = vadd.f32 %v1497, %v1627
        %v1782 = vadd.f32 %v1498, %v1632
        %v1783 = vadd.f32 %v1499, %v1637
        %v1784 = vadd.f32 %v1500, %v1642
        %v1785 = vadd.f32 %v1501, %v1647
        %v1786 = vadd.f32 %v1502, %v1652
        %v1787 = vadd.f32 %v1503, %v1657
        %v1788 = vadd.f32 %v1504, %v1662
        %v1789 = vadd.f32 %v1505, %v1667
        %v1790 = vadd.f32 %v1506, %v1672
        %v1791 = vadd.f32 %v1507, %v1677
        %v1792 = vadd.f32 %v1508, %v1682
        %v1793 = vadd.f32 %v1509, %v1687
        %v1794 = vadd.f32 %v1510, %v1692
        %v1795 = vadd.f32 %v1511, %v1697
        %v1796 = vadd.f32 %v1512, %v1702
        %v1797 = vadd.f32 %v1513, %v1707
        %v1798 = vadd.f32 %v1514, %v1712
        %v1799 = vadd.f32 %v1515, %v1717
        %v1800 = vadd.f32 %v1516, %v1722
        %v1801 = vadd.f32 %v1517, %v1727
        %v1802 = vadd.f32 %v1518, %v1732
        %v1803 = vadd.f32 %v1519, %v1737
        %v1804 = vadd.f32 %v1520, %v1742
        %v1805 = vadd.f32 %v1521, %v1747
        %v1806 = vadd.f32 %v1522, %v1752
        %v1807 = vadd.f32 %v1523, %v1757
        %v1808 = vadd.f32 %v1524, %v1762
        %v1809 = vadd.f32 %v1525, %v1767
        %v1810 = vadd.f32 %v1526, %v1772
        %v1811 = vadd.f32 %v1527, %v1777
        %v1812 = vrot.slane %v217, 2
        %v1813 = vrot.slane %v218, 2
        %v1814 = vsel %vm867, %v1812, %v1813
        %v1815 = vrot.slane %v219, 2
        %v1816 = vsel %vm867, %v1813, %v1815
        %s1819 = scalar_lea.vmem %s1, 640
        %v1820 = vld [vmem:[%s1819] sm:$0xff]
        %v1821 = vld [vmem:[%s1819 + $0x8] sm:$0xff]
        %v1822 = vld [vmem:[%s1819 + $0x10] sm:$0xff]
        %v1823 = vld [vmem:[%s1819 + $0x18] sm:$0xff]
        %v1824 = vld [vmem:[%s1819 + $0x20] sm:$0xff]
        %v1825 = vld [vmem:[%s1819 + $0x28] sm:$0xff]
        %v1826 = vld [vmem:[%s1819 + $0x30] sm:$0xff]
        %v1827 = vld [vmem:[%s1819 + $0x38] sm:$0xff]
        %v1828 = vld [vmem:[%s1819 + $0x40] sm:$0xff]
        %v1829 = vld [vmem:[%s1819 + $0x48] sm:$0xff]
        %v1830 = vld [vmem:[%s1819 + $0x50] sm:$0xff]
        %v1831 = vld [vmem:[%s1819 + $0x58] sm:$0xff]
        %v1832 = vld [vmem:[%s1819 + $0x60] sm:$0xff]
        %v1833 = vld [vmem:[%s1819 + $0x68] sm:$0xff]
        %v1834 = vld [vmem:[%s1819 + $0x70] sm:$0xff]
        %v1835 = vld [vmem:[%s1819 + $0x78] sm:$0xff]
        %1836 = vmatprep.subr.mxu0 0.0
        %1837 = vmatpush1.msra.mxu0 %v1835
        %1838 = vmatprep.subr.mxu0 0.0
        %1839 = vmatpush1.msra.mxu0 %v1834
        %1840 = vmatprep.subr.mxu0 0.0
        %1841 = vmatpush1.msra.mxu0 %v1833
        %1842 = vmatprep.subr.mxu0 0.0
        %1843 = vmatpush1.msra.mxu0 %v1832
        %1844 = vmatprep.subr.mxu0 0.0
        %1845 = vmatpush1.msra.mxu0 %v1831
        %1846 = vmatprep.subr.mxu0 0.0
        %1847 = vmatpush1.msra.mxu0 %v1830
        %1848 = vmatprep.subr.mxu0 0.0
        %1849 = vmatpush1.msra.mxu0 %v1829
        %1850 = vmatprep.subr.mxu0 0.0
        %1851 = vmatpush1.msra.mxu0 %v1828
        %1852 = vmatprep.subr.mxu0 0.0
        %1853 = vmatpush1.msra.mxu0 %v1827
        %1854 = vmatprep.subr.mxu0 0.0
        %1855 = vmatpush1.msra.mxu0 %v1826
        %1856 = vmatprep.subr.mxu0 0.0
        %1857 = vmatpush1.msra.mxu0 %v1825
        %1858 = vmatprep.subr.mxu0 0.0
        %1859 = vmatpush1.msra.mxu0 %v1824
        %1860 = vmatprep.subr.mxu0 0.0
        %1861 = vmatpush1.msra.mxu0 %v1823
        %1862 = vmatprep.subr.mxu0 0.0
        %1863 = vmatpush1.msra.mxu0 %v1822
        %1864 = vmatprep.subr.mxu0 0.0
        %1865 = vmatpush1.msra.mxu0 %v1821
        %1866 = vmatprep.subr.mxu0 0.0
        %1867 = vmatpush1.msra.mxu0 %v1820
        %1868 = vmatprep.subr.mxu0 0.0
        %1869 = vmatpush2.msra.mxu0 0.0
        %1870 = vmatprep.subr.mxu0 0.0
        %1871 = vmatpush2.msra.mxu0 0.0
        %1872 = vmatprep.subr.mxu0 0.0
        %1873 = vmatpush2.msra.mxu0 0.0
        %1874 = vmatprep.subr.mxu0 0.0
        %1875 = vmatpush2.msra.mxu0 0.0
        %1876 = vmatprep.subr.mxu0 0.0
        %1877 = vmatpush2.msra.mxu0 0.0
        %1878 = vmatprep.subr.mxu0 0.0
        %1879 = vmatpush2.msra.mxu0 0.0
        %1880 = vmatprep.subr.mxu0 0.0
        %1881 = vmatpush2.msra.mxu0 0.0
        %1882 = vmatprep.subr.mxu0 0.0
        %1883 = vmatpush2.msra.mxu0 0.0
        %1884 = vmatprep.subr.mxu0 0.0
        %1885 = vmatpush2.msra.mxu0 0.0
        %1886 = vmatprep.subr.mxu0 0.0
        %1887 = vmatpush2.msra.mxu0 0.0
        %1888 = vmatprep.subr.mxu0 0.0
        %1889 = vmatpush2.msra.mxu0 0.0
        %1890 = vmatprep.subr.mxu0 0.0
        %1891 = vmatpush2.msra.mxu0 0.0
        %1892 = vmatprep.subr.mxu0 0.0
        %1893 = vmatpush2.msra.mxu0 0.0
        %1894 = vmatprep.subr.mxu0 0.0
        %1895 = vmatpush2.msra.mxu0 0.0
        %1896 = vmatprep.subr.mxu0 0.0
        %1897 = vmatpush2.msra.mxu0 0.0
        %1898 = vmatprep.subr.mxu0 0.0
        %1899 = vmatpush2.msra.mxu0 0.0
        %1900 = vmatprep.mubr.f32.mxu0 0.0
        %1901 = vmatmul.mubr.f32.gmra.mxu0 %v875
        %v1902 = vpop.f32.mrf.mxu0
        %v1903 = vadd.f32 0.0, %v1902
        %v1904 = vpop.f32.mrf.mxu0
        %1905 = vmatprep.mubr.f32.mxu0 0.0
        %1906 = vmatmul.mubr.f32.gmra.mxu0 %v877
        %v1907 = vpop.f32.mrf.mxu0
        %v1908 = vadd.f32 0.0, %v1907
        %v1909 = vpop.f32.mrf.mxu0
        %1910 = vmatprep.mubr.f32.mxu0 0.0
        %1911 = vmatmul.mubr.f32.gmra.mxu0 %v880
        %v1912 = vpop.f32.mrf.mxu0
        %v1913 = vadd.f32 0.0, %v1912
        %v1914 = vpop.f32.mrf.mxu0
        %1915 = vmatprep.mubr.f32.mxu0 0.0
        %1916 = vmatmul.mubr.f32.gmra.mxu0 %v882
        %v1917 = vpop.f32.mrf.mxu0
        %v1918 = vadd.f32 0.0, %v1917
        %v1919 = vpop.f32.mrf.mxu0
        %1920 = vmatprep.mubr.f32.mxu0 0.0
        %1921 = vmatmul.mubr.f32.gmra.mxu0 %v885
        %v1922 = vpop.f32.mrf.mxu0
        %v1923 = vadd.f32 0.0, %v1922
        %v1924 = vpop.f32.mrf.mxu0
        %1925 = vmatprep.mubr.f32.mxu0 0.0
        %1926 = vmatmul.mubr.f32.gmra.mxu0 %v887
        %v1927 = vpop.f32.mrf.mxu0
        %v1928 = vadd.f32 0.0, %v1927
        %v1929 = vpop.f32.mrf.mxu0
        %1930 = vmatprep.mubr.f32.mxu0 0.0
        %1931 = vmatmul.mubr.f32.gmra.mxu0 %v890
        %v1932 = vpop.f32.mrf.mxu0
        %v1933 = vadd.f32 0.0, %v1932
        %v1934 = vpop.f32.mrf.mxu0
        %1935 = vmatprep.mubr.f32.mxu0 0.0
        %1936 = vmatmul.mubr.f32.gmra.mxu0 %v892
        %v1937 = vpop.f32.mrf.mxu0
        %v1938 = vadd.f32 0.0, %v1937
        %v1939 = vpop.f32.mrf.mxu0
        %1940 = vmatprep.mubr.f32.mxu0 0.0
        %1941 = vmatmul.mubr.f32.gmra.mxu0 %v895
        %v1942 = vpop.f32.mrf.mxu0
        %v1943 = vadd.f32 0.0, %v1942
        %v1944 = vpop.f32.mrf.mxu0
        %1945 = vmatprep.mubr.f32.mxu0 0.0
        %1946 = vmatmul.mubr.f32.gmra.mxu0 %v897
        %v1947 = vpop.f32.mrf.mxu0
        %v1948 = vadd.f32 0.0, %v1947
        %v1949 = vpop.f32.mrf.mxu0
        %1950 = vmatprep.mubr.f32.mxu0 0.0
        %1951 = vmatmul.mubr.f32.gmra.mxu0 %v900
        %v1952 = vpop.f32.mrf.mxu0
        %v1953 = vadd.f32 0.0, %v1952
        %v1954 = vpop.f32.mrf.mxu0
        %1955 = vmatprep.mubr.f32.mxu0 0.0
        %1956 = vmatmul.mubr.f32.gmra.mxu0 %v902
        %v1957 = vpop.f32.mrf.mxu0
        %v1958 = vadd.f32 0.0, %v1957
        %v1959 = vpop.f32.mrf.mxu0
        %1960 = vmatprep.mubr.f32.mxu0 0.0
        %1961 = vmatmul.mubr.f32.gmra.mxu0 %v905
        %v1962 = vpop.f32.mrf.mxu0
        %v1963 = vadd.f32 0.0, %v1962
        %v1964 = vpop.f32.mrf.mxu0
        %1965 = vmatprep.mubr.f32.mxu0 0.0
        %1966 = vmatmul.mubr.f32.gmra.mxu0 %v907
        %v1967 = vpop.f32.mrf.mxu0
        %v1968 = vadd.f32 0.0, %v1967
        %v1969 = vpop.f32.mrf.mxu0
        %1970 = vmatprep.mubr.f32.mxu0 0.0
        %1971 = vmatmul.mubr.f32.gmra.mxu0 %v910
        %v1972 = vpop.f32.mrf.mxu0
        %v1973 = vadd.f32 0.0, %v1972
        %v1974 = vpop.f32.mrf.mxu0
        %1975 = vmatprep.mubr.f32.mxu0 0.0
        %1976 = vmatmul.mubr.f32.gmra.mxu0 %v912
        %v1977 = vpop.f32.mrf.mxu0
        %v1978 = vadd.f32 0.0, %v1977
        %v1979 = vpop.f32.mrf.mxu0
        %1980 = vmatprep.mubr.f32.mxu0 0.0
        %1981 = vmatmul.mubr.f32.gmra.mxu0 %v915
        %v1982 = vpop.f32.mrf.mxu0
        %v1983 = vadd.f32 0.0, %v1982
        %v1984 = vpop.f32.mrf.mxu0
        %1985 = vmatprep.mubr.f32.mxu0 0.0
        %1986 = vmatmul.mubr.f32.gmra.mxu0 %v917
        %v1987 = vpop.f32.mrf.mxu0
        %v1988 = vadd.f32 0.0, %v1987
        %v1989 = vpop.f32.mrf.mxu0
        %1990 = vmatprep.mubr.f32.mxu0 0.0
        %1991 = vmatmul.mubr.f32.gmra.mxu0 %v920
        %v1992 = vpop.f32.mrf.mxu0
        %v1993 = vadd.f32 0.0, %v1992
        %v1994 = vpop.f32.mrf.mxu0
        %1995 = vmatprep.mubr.f32.mxu0 0.0
        %1996 = vmatmul.mubr.f32.gmra.mxu0 %v922
        %v1997 = vpop.f32.mrf.mxu0
        %v1998 = vadd.f32 0.0, %v1997
        %v1999 = vpop.f32.mrf.mxu0
        %2000 = vmatprep.mubr.f32.mxu0 0.0
        %2001 = vmatmul.mubr.f32.gmra.mxu0 %v925
        %v2002 = vpop.f32.mrf.mxu0
        %v2003 = vadd.f32 0.0, %v2002
        %v2004 = vpop.f32.mrf.mxu0
        %2005 = vmatprep.mubr.f32.mxu0 0.0
        %2006 = vmatmul.mubr.f32.gmra.mxu0 %v927
        %v2007 = vpop.f32.mrf.mxu0
        %v2008 = vadd.f32 0.0, %v2007
        %v2009 = vpop.f32.mrf.mxu0
        %2010 = vmatprep.mubr.f32.mxu0 0.0
        %2011 = vmatmul.mubr.f32.gmra.mxu0 %v930
        %v2012 = vpop.f32.mrf.mxu0
        %v2013 = vadd.f32 0.0, %v2012
        %v2014 = vpop.f32.mrf.mxu0
        %2015 = vmatprep.mubr.f32.mxu0 0.0
        %2016 = vmatmul.mubr.f32.gmra.mxu0 %v932
        %v2017 = vpop.f32.mrf.mxu0
        %v2018 = vadd.f32 0.0, %v2017
        %v2019 = vpop.f32.mrf.mxu0
        %2020 = vmatprep.mubr.f32.mxu0 0.0
        %2021 = vmatmul.mubr.f32.gmra.mxu0 %v935
        %v2022 = vpop.f32.mrf.mxu0
        %v2023 = vadd.f32 0.0, %v2022
        %v2024 = vpop.f32.mrf.mxu0
        %2025 = vmatprep.mubr.f32.mxu0 0.0
        %2026 = vmatmul.mubr.f32.gmra.mxu0 %v937
        %v2027 = vpop.f32.mrf.mxu0
        %v2028 = vadd.f32 0.0, %v2027
        %v2029 = vpop.f32.mrf.mxu0
        %2030 = vmatprep.mubr.f32.mxu0 0.0
        %2031 = vmatmul.mubr.f32.gmra.mxu0 %v940
        %v2032 = vpop.f32.mrf.mxu0
        %v2033 = vadd.f32 0.0, %v2032
        %v2034 = vpop.f32.mrf.mxu0
        %2035 = vmatprep.mubr.f32.mxu0 0.0
        %2036 = vmatmul.mubr.f32.gmra.mxu0 %v942
        %v2037 = vpop.f32.mrf.mxu0
        %v2038 = vadd.f32 0.0, %v2037
        %v2039 = vpop.f32.mrf.mxu0
        %2040 = vmatprep.mubr.f32.mxu0 0.0
        %2041 = vmatmul.mubr.f32.gmra.mxu0 %v945
        %v2042 = vpop.f32.mrf.mxu0
        %v2043 = vadd.f32 0.0, %v2042
        %v2044 = vpop.f32.mrf.mxu0
        %2045 = vmatprep.mubr.f32.mxu0 0.0
        %2046 = vmatmul.mubr.f32.gmra.mxu0 %v947
        %v2047 = vpop.f32.mrf.mxu0
        %v2048 = vadd.f32 0.0, %v2047
        %v2049 = vpop.f32.mrf.mxu0
        %2050 = vmatprep.mubr.f32.mxu0 0.0
        %2051 = vmatmul.mubr.f32.gmra.mxu0 %v1814
        %v2052 = vpop.f32.mrf.mxu0
        %v2053 = vadd.f32 0.0, %v2052
        %v2054 = vpop.f32.mrf.mxu0
        %2055 = vmatprep.mubr.f32.mxu0 0.0
        %2056 = vmatmul.mubr.f32.gmra.mxu0 %v1816
        %v2057 = vpop.f32.mrf.mxu0
        %v2058 = vadd.f32 0.0, %v2057
        %v2059 = vpop.f32.mrf.mxu0
        %2060 = vdwg.mxu0
        %v2061 = vadd.f32 %v1780, %v1903
        %v2062 = vadd.f32 %v1781, %v1908
        %v2063 = vadd.f32 %v1782, %v1913
        %v2064 = vadd.f32 %v1783, %v1918
        %v2065 = vadd.f32 %v1784, %v1923
        %v2066 = vadd.f32 %v1785, %v1928
        %v2067 = vadd.f32 %v1786, %v1933
        %v2068 = vadd.f32 %v1787, %v1938
        %v2069 = vadd.f32 %v1788, %v1943
        %v2070 = vadd.f32 %v1789, %v1948
        %v2071 = vadd.f32 %v1790, %v1953
        %v2072 = vadd.f32 %v1791, %v1958
        %v2073 = vadd.f32 %v1792, %v1963
        %v2074 = vadd.f32 %v1793, %v1968
        %v2075 = vadd.f32 %v1794, %v1973
        %v2076 = vadd.f32 %v1795, %v1978
        %v2077 = vadd.f32 %v1796, %v1983
        %v2078 = vadd.f32 %v1797, %v1988
        %v2079 = vadd.f32 %v1798, %v1993
        %v2080 = vadd.f32 %v1799, %v1998
        %v2081 = vadd.f32 %v1800, %v2003
        %v2082 = vadd.f32 %v1801, %v2008
        %v2083 = vadd.f32 %v1802, %v2013
        %v2084 = vadd.f32 %v1803, %v2018
        %v2085 = vadd.f32 %v1804, %v2023
        %v2086 = vadd.f32 %v1805, %v2028
        %v2087 = vadd.f32 %v1806, %v2033
        %v2088 = vadd.f32 %v1807, %v2038
        %v2089 = vadd.f32 %v1808, %v2043
        %v2090 = vadd.f32 %v1809, %v2048
        %v2091 = vadd.f32 %v1810, %v2053
        %v2092 = vadd.f32 %v1811, %v2058
        %s2093 = scalar_lea.vmem %s1, 768
        %v2094 = vld [vmem:[%s2093] sm:$0xff]
        %v2095 = vld [vmem:[%s2093 + $0x8] sm:$0xff]
        %v2096 = vld [vmem:[%s2093 + $0x10] sm:$0xff]
        %v2097 = vld [vmem:[%s2093 + $0x18] sm:$0xff]
        %v2098 = vld [vmem:[%s2093 + $0x20] sm:$0xff]
        %v2099 = vld [vmem:[%s2093 + $0x28] sm:$0xff]
        %v2100 = vld [vmem:[%s2093 + $0x30] sm:$0xff]
        %v2101 = vld [vmem:[%s2093 + $0x38] sm:$0xff]
        %v2102 = vld [vmem:[%s2093 + $0x40] sm:$0xff]
        %v2103 = vld [vmem:[%s2093 + $0x48] sm:$0xff]
        %v2104 = vld [vmem:[%s2093 + $0x50] sm:$0xff]
        %v2105 = vld [vmem:[%s2093 + $0x58] sm:$0xff]
        %v2106 = vld [vmem:[%s2093 + $0x60] sm:$0xff]
        %v2107 = vld [vmem:[%s2093 + $0x68] sm:$0xff]
        %v2108 = vld [vmem:[%s2093 + $0x70] sm:$0xff]
        %v2109 = vld [vmem:[%s2093 + $0x78] sm:$0xff]
        %2110 = vmatprep.subr.mxu0 0.0
        %2111 = vmatpush1.msra.mxu0 %v2109
        %2112 = vmatprep.subr.mxu0 0.0
        %2113 = vmatpush1.msra.mxu0 %v2108
        %2114 = vmatprep.subr.mxu0 0.0
        %2115 = vmatpush1.msra.mxu0 %v2107
        %2116 = vmatprep.subr.mxu0 0.0
        %2117 = vmatpush1.msra.mxu0 %v2106
        %2118 = vmatprep.subr.mxu0 0.0
        %2119 = vmatpush1.msra.mxu0 %v2105
        %2120 = vmatprep.subr.mxu0 0.0
        %2121 = vmatpush1.msra.mxu0 %v2104
        %2122 = vmatprep.subr.mxu0 0.0
        %2123 = vmatpush1.msra.mxu0 %v2103
        %2124 = vmatprep.subr.mxu0 0.0
        %2125 = vmatpush1.msra.mxu0 %v2102
        %2126 = vmatprep.subr.mxu0 0.0
        %2127 = vmatpush1.msra.mxu0 %v2101
        %2128 = vmatprep.subr.mxu0 0.0
        %2129 = vmatpush1.msra.mxu0 %v2100
        %2130 = vmatprep.subr.mxu0 0.0
        %2131 = vmatpush1.msra.mxu0 %v2099
        %2132 = vmatprep.subr.mxu0 0.0
        %2133 = vmatpush1.msra.mxu0 %v2098
        %2134 = vmatprep.subr.mxu0 0.0
        %2135 = vmatpush1.msra.mxu0 %v2097
        %2136 = vmatprep.subr.mxu0 0.0
        %2137 = vmatpush1.msra.mxu0 %v2096
        %2138 = vmatprep.subr.mxu0 0.0
        %2139 = vmatpush1.msra.mxu0 %v2095
        %2140 = vmatprep.subr.mxu0 0.0
        %2141 = vmatpush1.msra.mxu0 %v2094
        %2142 = vmatprep.subr.mxu0 0.0
        %2143 = vmatpush2.msra.mxu0 0.0
        %2144 = vmatprep.subr.mxu0 0.0
        %2145 = vmatpush2.msra.mxu0 0.0
        %2146 = vmatprep.subr.mxu0 0.0
        %2147 = vmatpush2.msra.mxu0 0.0
        %2148 = vmatprep.subr.mxu0 0.0
        %2149 = vmatpush2.msra.mxu0 0.0
        %2150 = vmatprep.subr.mxu0 0.0
        %2151 = vmatpush2.msra.mxu0 0.0
        %2152 = vmatprep.subr.mxu0 0.0
        %2153 = vmatpush2.msra.mxu0 0.0
        %2154 = vmatprep.subr.mxu0 0.0
        %2155 = vmatpush2.msra.mxu0 0.0
        %2156 = vmatprep.subr.mxu0 0.0
        %2157 = vmatpush2.msra.mxu0 0.0
        %2158 = vmatprep.subr.mxu0 0.0
        %2159 = vmatpush2.msra.mxu0 0.0
        %2160 = vmatprep.subr.mxu0 0.0
        %2161 = vmatpush2.msra.mxu0 0.0
        %2162 = vmatprep.subr.mxu0 0.0
        %2163 = vmatpush2.msra.mxu0 0.0
        %2164 = vmatprep.subr.mxu0 0.0
        %2165 = vmatpush2.msra.mxu0 0.0
        %2166 = vmatprep.subr.mxu0 0.0
        %2167 = vmatpush2.msra.mxu0 0.0
        %2168 = vmatprep.subr.mxu0 0.0
        %2169 = vmatpush2.msra.mxu0 0.0
        %2170 = vmatprep.subr.mxu0 0.0
        %2171 = vmatpush2.msra.mxu0 0.0
        %2172 = vmatprep.subr.mxu0 0.0
        %2173 = vmatpush2.msra.mxu0 0.0
        %2174 = vmatprep.mubr.f32.mxu0 0.0
        %2175 = vmatmul.mubr.f32.gmra.mxu0 %v175
        %v2176 = vpop.f32.mrf.mxu0
        %v2177 = vadd.f32 0.0, %v2176
        %v2178 = vpop.f32.mrf.mxu0
        %2179 = vmatprep.mubr.f32.mxu0 0.0
        %2180 = vmatmul.mubr.f32.gmra.mxu0 %v176
        %v2181 = vpop.f32.mrf.mxu0
        %v2182 = vadd.f32 0.0, %v2181
        %v2183 = vpop.f32.mrf.mxu0
        %2184 = vmatprep.mubr.f32.mxu0 0.0
        %2185 = vmatmul.mubr.f32.gmra.mxu0 %v178
        %v2186 = vpop.f32.mrf.mxu0
        %v2187 = vadd.f32 0.0, %v2186
        %v2188 = vpop.f32.mrf.mxu0
        %2189 = vmatprep.mubr.f32.mxu0 0.0
        %2190 = vmatmul.mubr.f32.gmra.mxu0 %v179
        %v2191 = vpop.f32.mrf.mxu0
        %v2192 = vadd.f32 0.0, %v2191
        %v2193 = vpop.f32.mrf.mxu0
        %2194 = vmatprep.mubr.f32.mxu0 0.0
        %2195 = vmatmul.mubr.f32.gmra.mxu0 %v181
        %v2196 = vpop.f32.mrf.mxu0
        %v2197 = vadd.f32 0.0, %v2196
        %v2198 = vpop.f32.mrf.mxu0
        %2199 = vmatprep.mubr.f32.mxu0 0.0
        %2200 = vmatmul.mubr.f32.gmra.mxu0 %v182
        %v2201 = vpop.f32.mrf.mxu0
        %v2202 = vadd.f32 0.0, %v2201
        %v2203 = vpop.f32.mrf.mxu0
        %2204 = vmatprep.mubr.f32.mxu0 0.0
        %2205 = vmatmul.mubr.f32.gmra.mxu0 %v184
        %v2206 = vpop.f32.mrf.mxu0
        %v2207 = vadd.f32 0.0, %v2206
        %v2208 = vpop.f32.mrf.mxu0
        %2209 = vmatprep.mubr.f32.mxu0 0.0
        %2210 = vmatmul.mubr.f32.gmra.mxu0 %v185
        %v2211 = vpop.f32.mrf.mxu0
        %v2212 = vadd.f32 0.0, %v2211
        %v2213 = vpop.f32.mrf.mxu0
        %2214 = vmatprep.mubr.f32.mxu0 0.0
        %2215 = vmatmul.mubr.f32.gmra.mxu0 %v187
        %v2216 = vpop.f32.mrf.mxu0
        %v2217 = vadd.f32 0.0, %v2216
        %v2218 = vpop.f32.mrf.mxu0
        %2219 = vmatprep.mubr.f32.mxu0 0.0
        %2220 = vmatmul.mubr.f32.gmra.mxu0 %v188
        %v2221 = vpop.f32.mrf.mxu0
        %v2222 = vadd.f32 0.0, %v2221
        %v2223 = vpop.f32.mrf.mxu0
        %2224 = vmatprep.mubr.f32.mxu0 0.0
        %2225 = vmatmul.mubr.f32.gmra.mxu0 %v190
        %v2226 = vpop.f32.mrf.mxu0
        %v2227 = vadd.f32 0.0, %v2226
        %v2228 = vpop.f32.mrf.mxu0
        %2229 = vmatprep.mubr.f32.mxu0 0.0
        %2230 = vmatmul.mubr.f32.gmra.mxu0 %v191
        %v2231 = vpop.f32.mrf.mxu0
        %v2232 = vadd.f32 0.0, %v2231
        %v2233 = vpop.f32.mrf.mxu0
        %2234 = vmatprep.mubr.f32.mxu0 0.0
        %2235 = vmatmul.mubr.f32.gmra.mxu0 %v193
        %v2236 = vpop.f32.mrf.mxu0
        %v2237 = vadd.f32 0.0, %v2236
        %v2238 = vpop.f32.mrf.mxu0
        %2239 = vmatprep.mubr.f32.mxu0 0.0
        %2240 = vmatmul.mubr.f32.gmra.mxu0 %v194
        %v2241 = vpop.f32.mrf.mxu0
        %v2242 = vadd.f32 0.0, %v2241
        %v2243 = vpop.f32.mrf.mxu0
        %2244 = vmatprep.mubr.f32.mxu0 0.0
        %2245 = vmatmul.mubr.f32.gmra.mxu0 %v196
        %v2246 = vpop.f32.mrf.mxu0
        %v2247 = vadd.f32 0.0, %v2246
        %v2248 = vpop.f32.mrf.mxu0
        %2249 = vmatprep.mubr.f32.mxu0 0.0
        %2250 = vmatmul.mubr.f32.gmra.mxu0 %v197
        %v2251 = vpop.f32.mrf.mxu0
        %v2252 = vadd.f32 0.0, %v2251
        %v2253 = vpop.f32.mrf.mxu0
        %2254 = vmatprep.mubr.f32.mxu0 0.0
        %2255 = vmatmul.mubr.f32.gmra.mxu0 %v199
        %v2256 = vpop.f32.mrf.mxu0
        %v2257 = vadd.f32 0.0, %v2256
        %v2258 = vpop.f32.mrf.mxu0
        %2259 = vmatprep.mubr.f32.mxu0 0.0
        %2260 = vmatmul.mubr.f32.gmra.mxu0 %v200
        %v2261 = vpop.f32.mrf.mxu0
        %v2262 = vadd.f32 0.0, %v2261
        %v2263 = vpop.f32.mrf.mxu0
        %2264 = vmatprep.mubr.f32.mxu0 0.0
        %2265 = vmatmul.mubr.f32.gmra.mxu0 %v202
        %v2266 = vpop.f32.mrf.mxu0
        %v2267 = vadd.f32 0.0, %v2266
        %v2268 = vpop.f32.mrf.mxu0
        %2269 = vmatprep.mubr.f32.mxu0 0.0
        %2270 = vmatmul.mubr.f32.gmra.mxu0 %v203
        %v2271 = vpop.f32.mrf.mxu0
        %v2272 = vadd.f32 0.0, %v2271
        %v2273 = vpop.f32.mrf.mxu0
        %2274 = vmatprep.mubr.f32.mxu0 0.0
        %2275 = vmatmul.mubr.f32.gmra.mxu0 %v205
        %v2276 = vpop.f32.mrf.mxu0
        %v2277 = vadd.f32 0.0, %v2276
        %v2278 = vpop.f32.mrf.mxu0
        %2279 = vmatprep.mubr.f32.mxu0 0.0
        %2280 = vmatmul.mubr.f32.gmra.mxu0 %v206
        %v2281 = vpop.f32.mrf.mxu0
        %v2282 = vadd.f32 0.0, %v2281
        %v2283 = vpop.f32.mrf.mxu0
        %2284 = vmatprep.mubr.f32.mxu0 0.0
        %2285 = vmatmul.mubr.f32.gmra.mxu0 %v208
        %v2286 = vpop.f32.mrf.mxu0
        %v2287 = vadd.f32 0.0, %v2286
        %v2288 = vpop.f32.mrf.mxu0
        %2289 = vmatprep.mubr.f32.mxu0 0.0
        %2290 = vmatmul.mubr.f32.gmra.mxu0 %v209
        %v2291 = vpop.f32.mrf.mxu0
        %v2292 = vadd.f32 0.0, %v2291
        %v2293 = vpop.f32.mrf.mxu0
        %2294 = vmatprep.mubr.f32.mxu0 0.0
        %2295 = vmatmul.mubr.f32.gmra.mxu0 %v211
        %v2296 = vpop.f32.mrf.mxu0
        %v2297 = vadd.f32 0.0, %v2296
        %v2298 = vpop.f32.mrf.mxu0
        %2299 = vmatprep.mubr.f32.mxu0 0.0
        %2300 = vmatmul.mubr.f32.gmra.mxu0 %v212
        %v2301 = vpop.f32.mrf.mxu0
        %v2302 = vadd.f32 0.0, %v2301
        %v2303 = vpop.f32.mrf.mxu0
        %2304 = vmatprep.mubr.f32.mxu0 0.0
        %2305 = vmatmul.mubr.f32.gmra.mxu0 %v214
        %v2306 = vpop.f32.mrf.mxu0
        %v2307 = vadd.f32 0.0, %v2306
        %v2308 = vpop.f32.mrf.mxu0
        %2309 = vmatprep.mubr.f32.mxu0 0.0
        %2310 = vmatmul.mubr.f32.gmra.mxu0 %v215
        %v2311 = vpop.f32.mrf.mxu0
        %v2312 = vadd.f32 0.0, %v2311
        %v2313 = vpop.f32.mrf.mxu0
        %2314 = vmatprep.mubr.f32.mxu0 0.0
        %2315 = vmatmul.mubr.f32.gmra.mxu0 %v217
        %v2316 = vpop.f32.mrf.mxu0
        %v2317 = vadd.f32 0.0, %v2316
        %v2318 = vpop.f32.mrf.mxu0
        %2319 = vmatprep.mubr.f32.mxu0 0.0
        %2320 = vmatmul.mubr.f32.gmra.mxu0 %v218
        %v2321 = vpop.f32.mrf.mxu0
        %v2322 = vadd.f32 0.0, %v2321
        %v2323 = vpop.f32.mrf.mxu0
        %2324 = vmatprep.mubr.f32.mxu0 0.0
        %2325 = vmatmul.mubr.f32.gmra.mxu0 %v220
        %v2326 = vpop.f32.mrf.mxu0
        %v2327 = vadd.f32 0.0, %v2326
        %v2328 = vpop.f32.mrf.mxu0
        %2329 = vmatprep.mubr.f32.mxu0 0.0
        %2330 = vmatmul.mubr.f32.gmra.mxu0 %v221
        %v2331 = vpop.f32.mrf.mxu0
        %v2332 = vadd.f32 0.0, %v2331
        %v2333 = vpop.f32.mrf.mxu0
        %2334 = vdwg.mxu0
        %v2335 = vadd.f32 %v2061, %v2177
        %v2336 = vadd.f32 %v2062, %v2182
        %v2337 = vadd.f32 %v2063, %v2187
        %v2338 = vadd.f32 %v2064, %v2192
        %v2339 = vadd.f32 %v2065, %v2197
        %v2340 = vadd.f32 %v2066, %v2202
        %v2341 = vadd.f32 %v2067, %v2207
        %v2342 = vadd.f32 %v2068, %v2212
        %v2343 = vadd.f32 %v2069, %v2217
        %v2344 = vadd.f32 %v2070, %v2222
        %v2345 = vadd.f32 %v2071, %v2227
        %v2346 = vadd.f32 %v2072, %v2232
        %v2347 = vadd.f32 %v2073, %v2237
        %v2348 = vadd.f32 %v2074, %v2242
        %v2349 = vadd.f32 %v2075, %v2247
        %v2350 = vadd.f32 %v2076, %v2252
        %v2351 = vadd.f32 %v2077, %v2257
        %v2352 = vadd.f32 %v2078, %v2262
        %v2353 = vadd.f32 %v2079, %v2267
        %v2354 = vadd.f32 %v2080, %v2272
        %v2355 = vadd.f32 %v2081, %v2277
        %v2356 = vadd.f32 %v2082, %v2282
        %v2357 = vadd.f32 %v2083, %v2287
        %v2358 = vadd.f32 %v2084, %v2292
        %v2359 = vadd.f32 %v2085, %v2297
        %v2360 = vadd.f32 %v2086, %v2302
        %v2361 = vadd.f32 %v2087, %v2307
        %v2362 = vadd.f32 %v2088, %v2312
        %v2363 = vadd.f32 %v2089, %v2317
        %v2364 = vadd.f32 %v2090, %v2322
        %v2365 = vadd.f32 %v2091, %v2327
        %v2366 = vadd.f32 %v2092, %v2332
        %v2370 = vrot.slane %v220, 1
        %v2371 = vrot.slane %v221, 1
        %v2372 = vsel %vm287, %v2370, %v2371
        %v2373 = vrot.slane %v222, 1
        %v2374 = vsel %vm287, %v2371, %v2373
        %s2377 = scalar_lea.vmem %s1, 896
        %v2378 = vld [vmem:[%s2377] sm:$0xff]
        %v2379 = vld [vmem:[%s2377 + $0x8] sm:$0xff]
        %v2380 = vld [vmem:[%s2377 + $0x10] sm:$0xff]
        %v2381 = vld [vmem:[%s2377 + $0x18] sm:$0xff]
        %v2382 = vld [vmem:[%s2377 + $0x20] sm:$0xff]
        %v2383 = vld [vmem:[%s2377 + $0x28] sm:$0xff]
        %v2384 = vld [vmem:[%s2377 + $0x30] sm:$0xff]
        %v2385 = vld [vmem:[%s2377 + $0x38] sm:$0xff]
        %v2386 = vld [vmem:[%s2377 + $0x40] sm:$0xff]
        %v2387 = vld [vmem:[%s2377 + $0x48] sm:$0xff]
        %v2388 = vld [vmem:[%s2377 + $0x50] sm:$0xff]
        %v2389 = vld [vmem:[%s2377 + $0x58] sm:$0xff]
        %v2390 = vld [vmem:[%s2377 + $0x60] sm:$0xff]
        %v2391 = vld [vmem:[%s2377 + $0x68] sm:$0xff]
        %v2392 = vld [vmem:[%s2377 + $0x70] sm:$0xff]
        %v2393 = vld [vmem:[%s2377 + $0x78] sm:$0xff]
        %2394 = vmatprep.subr.mxu0 0.0
        %2395 = vmatpush1.msra.mxu0 %v2393
        %2396 = vmatprep.subr.mxu0 0.0
        %2397 = vmatpush1.msra.mxu0 %v2392
        %2398 = vmatprep.subr.mxu0 0.0
        %2399 = vmatpush1.msra.mxu0 %v2391
        %2400 = vmatprep.subr.mxu0 0.0
        %2401 = vmatpush1.msra.mxu0 %v2390
        %2402 = vmatprep.subr.mxu0 0.0
        %2403 = vmatpush1.msra.mxu0 %v2389
        %2404 = vmatprep.subr.mxu0 0.0
        %2405 = vmatpush1.msra.mxu0 %v2388
        %2406 = vmatprep.subr.mxu0 0.0
        %2407 = vmatpush1.msra.mxu0 %v2387
        %2408 = vmatprep.subr.mxu0 0.0
        %2409 = vmatpush1.msra.mxu0 %v2386
        %2410 = vmatprep.subr.mxu0 0.0
        %2411 = vmatpush1.msra.mxu0 %v2385
        %2412 = vmatprep.subr.mxu0 0.0
        %2413 = vmatpush1.msra.mxu0 %v2384
        %2414 = vmatprep.subr.mxu0 0.0
        %2415 = vmatpush1.msra.mxu0 %v2383
        %2416 = vmatprep.subr.mxu0 0.0
        %2417 = vmatpush1.msra.mxu0 %v2382
        %2418 = vmatprep.subr.mxu0 0.0
        %2419 = vmatpush1.msra.mxu0 %v2381
        %2420 = vmatprep.subr.mxu0 0.0
        %2421 = vmatpush1.msra.mxu0 %v2380
        %2422 = vmatprep.subr.mxu0 0.0
        %2423 = vmatpush1.msra.mxu0 %v2379
        %2424 = vmatprep.subr.mxu0 0.0
        %2425 = vmatpush1.msra.mxu0 %v2378
        %2426 = vmatprep.subr.mxu0 0.0
        %2427 = vmatpush2.msra.mxu0 0.0
        %2428 = vmatprep.subr.mxu0 0.0
        %2429 = vmatpush2.msra.mxu0 0.0
        %2430 = vmatprep.subr.mxu0 0.0
        %2431 = vmatpush2.msra.mxu0 0.0
        %2432 = vmatprep.subr.mxu0 0.0
        %2433 = vmatpush2.msra.mxu0 0.0
        %2434 = vmatprep.subr.mxu0 0.0
        %2435 = vmatpush2.msra.mxu0 0.0
        %2436 = vmatprep.subr.mxu0 0.0
        %2437 = vmatpush2.msra.mxu0 0.0
        %2438 = vmatprep.subr.mxu0 0.0
        %2439 = vmatpush2.msra.mxu0 0.0
        %2440 = vmatprep.subr.mxu0 0.0
        %2441 = vmatpush2.msra.mxu0 0.0
        %2442 = vmatprep.subr.mxu0 0.0
        %2443 = vmatpush2.msra.mxu0 0.0
        %2444 = vmatprep.subr.mxu0 0.0
        %2445 = vmatpush2.msra.mxu0 0.0
        %2446 = vmatprep.subr.mxu0 0.0
        %2447 = vmatpush2.msra.mxu0 0.0
        %2448 = vmatprep.subr.mxu0 0.0
        %2449 = vmatpush2.msra.mxu0 0.0
        %2450 = vmatprep.subr.mxu0 0.0
        %2451 = vmatpush2.msra.mxu0 0.0
        %2452 = vmatprep.subr.mxu0 0.0
        %2453 = vmatpush2.msra.mxu0 0.0
        %2454 = vmatprep.subr.mxu0 0.0
        %2455 = vmatpush2.msra.mxu0 0.0
        %2456 = vmatprep.subr.mxu0 0.0
        %2457 = vmatpush2.msra.mxu0 0.0
        %2458 = vmatprep.mubr.f32.mxu0 0.0
        %2459 = vmatmul.mubr.f32.gmra.mxu0 %v300
        %v2460 = vpop.f32.mrf.mxu0
        %v2461 = vadd.f32 0.0, %v2460
        %v2462 = vpop.f32.mrf.mxu0
        %2463 = vmatprep.mubr.f32.mxu0 0.0
        %2464 = vmatmul.mubr.f32.gmra.mxu0 %v302
        %v2465 = vpop.f32.mrf.mxu0
        %v2466 = vadd.f32 0.0, %v2465
        %v2467 = vpop.f32.mrf.mxu0
        %2468 = vmatprep.mubr.f32.mxu0 0.0
        %2469 = vmatmul.mubr.f32.gmra.mxu0 %v305
        %v2470 = vpop.f32.mrf.mxu0
        %v2471 = vadd.f32 0.0, %v2470
        %v2472 = vpop.f32.mrf.mxu0
        %2473 = vmatprep.mubr.f32.mxu0 0.0
        %2474 = vmatmul.mubr.f32.gmra.mxu0 %v307
        %v2475 = vpop.f32.mrf.mxu0
        %v2476 = vadd.f32 0.0, %v2475
        %v2477 = vpop.f32.mrf.mxu0
        %2478 = vmatprep.mubr.f32.mxu0 0.0
        %2479 = vmatmul.mubr.f32.gmra.mxu0 %v310
        %v2480 = vpop.f32.mrf.mxu0
        %v2481 = vadd.f32 0.0, %v2480
        %v2482 = vpop.f32.mrf.mxu0
        %2483 = vmatprep.mubr.f32.mxu0 0.0
        %2484 = vmatmul.mubr.f32.gmra.mxu0 %v312
        %v2485 = vpop.f32.mrf.mxu0
        %v2486 = vadd.f32 0.0, %v2485
        %v2487 = vpop.f32.mrf.mxu0
        %2488 = vmatprep.mubr.f32.mxu0 0.0
        %2489 = vmatmul.mubr.f32.gmra.mxu0 %v315
        %v2490 = vpop.f32.mrf.mxu0
        %v2491 = vadd.f32 0.0, %v2490
        %v2492 = vpop.f32.mrf.mxu0
        %2493 = vmatprep.mubr.f32.mxu0 0.0
        %2494 = vmatmul.mubr.f32.gmra.mxu0 %v317
        %v2495 = vpop.f32.mrf.mxu0
        %v2496 = vadd.f32 0.0, %v2495
        %v2497 = vpop.f32.mrf.mxu0
        %2498 = vmatprep.mubr.f32.mxu0 0.0
        %2499 = vmatmul.mubr.f32.gmra.mxu0 %v320
        %v2500 = vpop.f32.mrf.mxu0
        %v2501 = vadd.f32 0.0, %v2500
        %v2502 = vpop.f32.mrf.mxu0
        %2503 = vmatprep.mubr.f32.mxu0 0.0
        %2504 = vmatmul.mubr.f32.gmra.mxu0 %v322
        %v2505 = vpop.f32.mrf.mxu0
        %v2506 = vadd.f32 0.0, %v2505
        %v2507 = vpop.f32.mrf.mxu0
        %2508 = vmatprep.mubr.f32.mxu0 0.0
        %2509 = vmatmul.mubr.f32.gmra.mxu0 %v325
        %v2510 = vpop.f32.mrf.mxu0
        %v2511 = vadd.f32 0.0, %v2510
        %v2512 = vpop.f32.mrf.mxu0
        %2513 = vmatprep.mubr.f32.mxu0 0.0
        %2514 = vmatmul.mubr.f32.gmra.mxu0 %v327
        %v2515 = vpop.f32.mrf.mxu0
        %v2516 = vadd.f32 0.0, %v2515
        %v2517 = vpop.f32.mrf.mxu0
        %2518 = vmatprep.mubr.f32.mxu0 0.0
        %2519 = vmatmul.mubr.f32.gmra.mxu0 %v330
        %v2520 = vpop.f32.mrf.mxu0
        %v2521 = vadd.f32 0.0, %v2520
        %v2522 = vpop.f32.mrf.mxu0
        %2523 = vmatprep.mubr.f32.mxu0 0.0
        %2524 = vmatmul.mubr.f32.gmra.mxu0 %v332
        %v2525 = vpop.f32.mrf.mxu0
        %v2526 = vadd.f32 0.0, %v2525
        %v2527 = vpop.f32.mrf.mxu0
        %2528 = vmatprep.mubr.f32.mxu0 0.0
        %2529 = vmatmul.mubr.f32.gmra.mxu0 %v335
        %v2530 = vpop.f32.mrf.mxu0
        %v2531 = vadd.f32 0.0, %v2530
        %v2532 = vpop.f32.mrf.mxu0
        %2533 = vmatprep.mubr.f32.mxu0 0.0
        %2534 = vmatmul.mubr.f32.gmra.mxu0 %v337
        %v2535 = vpop.f32.mrf.mxu0
        %v2536 = vadd.f32 0.0, %v2535
        %v2537 = vpop.f32.mrf.mxu0
        %2538 = vmatprep.mubr.f32.mxu0 0.0
        %2539 = vmatmul.mubr.f32.gmra.mxu0 %v340
        %v2540 = vpop.f32.mrf.mxu0
        %v2541 = vadd.f32 0.0, %v2540
        %v2542 = vpop.f32.mrf.mxu0
        %2543 = vmatprep.mubr.f32.mxu0 0.0
        %2544 = vmatmul.mubr.f32.gmra.mxu0 %v342
        %v2545 = vpop.f32.mrf.mxu0
        %v2546 = vadd.f32 0.0, %v2545
        %v2547 = vpop.f32.mrf.mxu0
        %2548 = vmatprep.mubr.f32.mxu0 0.0
        %2549 = vmatmul.mubr.f32.gmra.mxu0 %v345
        %v2550 = vpop.f32.mrf.mxu0
        %v2551 = vadd.f32 0.0, %v2550
        %v2552 = vpop.f32.mrf.mxu0
        %2553 = vmatprep.mubr.f32.mxu0 0.0
        %2554 = vmatmul.mubr.f32.gmra.mxu0 %v347
        %v2555 = vpop.f32.mrf.mxu0
        %v2556 = vadd.f32 0.0, %v2555
        %v2557 = vpop.f32.mrf.mxu0
        %2558 = vmatprep.mubr.f32.mxu0 0.0
        %2559 = vmatmul.mubr.f32.gmra.mxu0 %v350
        %v2560 = vpop.f32.mrf.mxu0
        %v2561 = vadd.f32 0.0, %v2560
        %v2562 = vpop.f32.mrf.mxu0
        %2563 = vmatprep.mubr.f32.mxu0 0.0
        %2564 = vmatmul.mubr.f32.gmra.mxu0 %v352
        %v2565 = vpop.f32.mrf.mxu0
        %v2566 = vadd.f32 0.0, %v2565
        %v2567 = vpop.f32.mrf.mxu0
        %2568 = vmatprep.mubr.f32.mxu0 0.0
        %2569 = vmatmul.mubr.f32.gmra.mxu0 %v355
        %v2570 = vpop.f32.mrf.mxu0
        %v2571 = vadd.f32 0.0, %v2570
        %v2572 = vpop.f32.mrf.mxu0
        %2573 = vmatprep.mubr.f32.mxu0 0.0
        %2574 = vmatmul.mubr.f32.gmra.mxu0 %v357
        %v2575 = vpop.f32.mrf.mxu0
        %v2576 = vadd.f32 0.0, %v2575
        %v2577 = vpop.f32.mrf.mxu0
        %2578 = vmatprep.mubr.f32.mxu0 0.0
        %2579 = vmatmul.mubr.f32.gmra.mxu0 %v360
        %v2580 = vpop.f32.mrf.mxu0
        %v2581 = vadd.f32 0.0, %v2580
        %v2582 = vpop.f32.mrf.mxu0
        %2583 = vmatprep.mubr.f32.mxu0 0.0
        %2584 = vmatmul.mubr.f32.gmra.mxu0 %v362
        %v2585 = vpop.f32.mrf.mxu0
        %v2586 = vadd.f32 0.0, %v2585
        %v2587 = vpop.f32.mrf.mxu0
        %2588 = vmatprep.mubr.f32.mxu0 0.0
        %2589 = vmatmul.mubr.f32.gmra.mxu0 %v365
        %v2590 = vpop.f32.mrf.mxu0
        %v2591 = vadd.f32 0.0, %v2590
        %v2592 = vpop.f32.mrf.mxu0
        %2593 = vmatprep.mubr.f32.mxu0 0.0
        %2594 = vmatmul.mubr.f32.gmra.mxu0 %v367
        %v2595 = vpop.f32.mrf.mxu0
        %v2596 = vadd.f32 0.0, %v2595
        %v2597 = vpop.f32.mrf.mxu0
        %2598 = vmatprep.mubr.f32.mxu0 0.0
        %2599 = vmatmul.mubr.f32.gmra.mxu0 %v1533
        %v2600 = vpop.f32.mrf.mxu0
        %v2601 = vadd.f32 0.0, %v2600
        %v2602 = vpop.f32.mrf.mxu0
        %2603 = vmatprep.mubr.f32.mxu0 0.0
        %2604 = vmatmul.mubr.f32.gmra.mxu0 %v1535
        %v2605 = vpop.f32.mrf.mxu0
        %v2606 = vadd.f32 0.0, %v2605
        %v2607 = vpop.f32.mrf.mxu0
        %2608 = vmatprep.mubr.f32.mxu0 0.0
        %2609 = vmatmul.mubr.f32.gmra.mxu0 %v2372
        %v2610 = vpop.f32.mrf.mxu0
        %v2611 = vadd.f32 0.0, %v2610
        %v2612 = vpop.f32.mrf.mxu0
        %2613 = vmatprep.mubr.f32.mxu0 0.0
        %2614 = vmatmul.mubr.f32.gmra.mxu0 %v2374
        %v2615 = vpop.f32.mrf.mxu0
        %v2616 = vadd.f32 0.0, %v2615
        %v2617 = vpop.f32.mrf.mxu0
        %2618 = vdwg.mxu0
        %v2619 = vadd.f32 %v2335, %v2461
        %v2620 = vadd.f32 %v2336, %v2466
        %v2621 = vadd.f32 %v2337, %v2471
        %v2622 = vadd.f32 %v2338, %v2476
        %v2623 = vadd.f32 %v2339, %v2481
        %v2624 = vadd.f32 %v2340, %v2486
        %v2625 = vadd.f32 %v2341, %v2491
        %v2626 = vadd.f32 %v2342, %v2496
        %v2627 = vadd.f32 %v2343, %v2501
        %v2628 = vadd.f32 %v2344, %v2506
        %v2629 = vadd.f32 %v2345, %v2511
        %v2630 = vadd.f32 %v2346, %v2516
        %v2631 = vadd.f32 %v2347, %v2521
        %v2632 = vadd.f32 %v2348, %v2526
        %v2633 = vadd.f32 %v2349, %v2531
        %v2634 = vadd.f32 %v2350, %v2536
        %v2635 = vadd.f32 %v2351, %v2541
        %v2636 = vadd.f32 %v2352, %v2546
        %v2637 = vadd.f32 %v2353, %v2551
        %v2638 = vadd.f32 %v2354, %v2556
        %v2639 = vadd.f32 %v2355, %v2561
        %v2640 = vadd.f32 %v2356, %v2566
        %v2641 = vadd.f32 %v2357, %v2571
        %v2642 = vadd.f32 %v2358, %v2576
        %v2643 = vadd.f32 %v2359, %v2581
        %v2644 = vadd.f32 %v2360, %v2586
        %v2645 = vadd.f32 %v2361, %v2591
        %v2646 = vadd.f32 %v2362, %v2596
        %v2647 = vadd.f32 %v2363, %v2601
        %v2648 = vadd.f32 %v2364, %v2606
        %v2649 = vadd.f32 %v2365, %v2611
        %v2650 = vadd.f32 %v2366, %v2616
        %v2651 = vrot.slane %v220, 2
        %v2652 = vrot.slane %v221, 2
        %v2653 = vsel %vm867, %v2651, %v2652
        %v2654 = vrot.slane %v222, 2
        %v2655 = vsel %vm867, %v2652, %v2654
        %s2658 = scalar_lea.vmem %s1, 1024
        %v2659 = vld [vmem:[%s2658] sm:$0xff]
        %v2660 = vld [vmem:[%s2658 + $0x8] sm:$0xff]
        %v2661 = vld [vmem:[%s2658 + $0x10] sm:$0xff]
        %v2662 = vld [vmem:[%s2658 + $0x18] sm:$0xff]
        %v2663 = vld [vmem:[%s2658 + $0x20] sm:$0xff]
        %v2664 = vld [vmem:[%s2658 + $0x28] sm:$0xff]
        %v2665 = vld [vmem:[%s2658 + $0x30] sm:$0xff]
        %v2666 = vld [vmem:[%s2658 + $0x38] sm:$0xff]
        %v2667 = vld [vmem:[%s2658 + $0x40] sm:$0xff]
        %v2668 = vld [vmem:[%s2658 + $0x48] sm:$0xff]
        %v2669 = vld [vmem:[%s2658 + $0x50] sm:$0xff]
        %v2670 = vld [vmem:[%s2658 + $0x58] sm:$0xff]
        %v2671 = vld [vmem:[%s2658 + $0x60] sm:$0xff]
        %v2672 = vld [vmem:[%s2658 + $0x68] sm:$0xff]
        %v2673 = vld [vmem:[%s2658 + $0x70] sm:$0xff]
        %v2674 = vld [vmem:[%s2658 + $0x78] sm:$0xff]
        %2675 = vmatprep.subr.mxu0 0.0
        %2676 = vmatpush1.msra.mxu0 %v2674
        %2677 = vmatprep.subr.mxu0 0.0
        %2678 = vmatpush1.msra.mxu0 %v2673
        %2679 = vmatprep.subr.mxu0 0.0
        %2680 = vmatpush1.msra.mxu0 %v2672
        %2681 = vmatprep.subr.mxu0 0.0
        %2682 = vmatpush1.msra.mxu0 %v2671
        %2683 = vmatprep.subr.mxu0 0.0
        %2684 = vmatpush1.msra.mxu0 %v2670
        %2685 = vmatprep.subr.mxu0 0.0
        %2686 = vmatpush1.msra.mxu0 %v2669
        %2687 = vmatprep.subr.mxu0 0.0
        %2688 = vmatpush1.msra.mxu0 %v2668
        %2689 = vmatprep.subr.mxu0 0.0
        %2690 = vmatpush1.msra.mxu0 %v2667
        %2691 = vmatprep.subr.mxu0 0.0
        %2692 = vmatpush1.msra.mxu0 %v2666
        %2693 = vmatprep.subr.mxu0 0.0
        %2694 = vmatpush1.msra.mxu0 %v2665
        %2695 = vmatprep.subr.mxu0 0.0
        %2696 = vmatpush1.msra.mxu0 %v2664
        %2697 = vmatprep.subr.mxu0 0.0
        %2698 = vmatpush1.msra.mxu0 %v2663
        %2699 = vmatprep.subr.mxu0 0.0
        %2700 = vmatpush1.msra.mxu0 %v2662
        %2701 = vmatprep.subr.mxu0 0.0
        %2702 = vmatpush1.msra.mxu0 %v2661
        %2703 = vmatprep.subr.mxu0 0.0
        %2704 = vmatpush1.msra.mxu0 %v2660
        %2705 = vmatprep.subr.mxu0 0.0
        %2706 = vmatpush1.msra.mxu0 %v2659
        %2707 = vmatprep.subr.mxu0 0.0
        %2708 = vmatpush2.msra.mxu0 0.0
        %2709 = vmatprep.subr.mxu0 0.0
        %2710 = vmatpush2.msra.mxu0 0.0
        %2711 = vmatprep.subr.mxu0 0.0
        %2712 = vmatpush2.msra.mxu0 0.0
        %2713 = vmatprep.subr.mxu0 0.0
        %2714 = vmatpush2.msra.mxu0 0.0
        %2715 = vmatprep.subr.mxu0 0.0
        %2716 = vmatpush2.msra.mxu0 0.0
        %2717 = vmatprep.subr.mxu0 0.0
        %2718 = vmatpush2.msra.mxu0 0.0
        %2719 = vmatprep.subr.mxu0 0.0
        %2720 = vmatpush2.msra.mxu0 0.0
        %2721 = vmatprep.subr.mxu0 0.0
        %2722 = vmatpush2.msra.mxu0 0.0
        %2723 = vmatprep.subr.mxu0 0.0
        %2724 = vmatpush2.msra.mxu0 0.0
        %2725 = vmatprep.subr.mxu0 0.0
        %2726 = vmatpush2.msra.mxu0 0.0
        %2727 = vmatprep.subr.mxu0 0.0
        %2728 = vmatpush2.msra.mxu0 0.0
        %2729 = vmatprep.subr.mxu0 0.0
        %2730 = vmatpush2.msra.mxu0 0.0
        %2731 = vmatprep.subr.mxu0 0.0
        %2732 = vmatpush2.msra.mxu0 0.0
        %2733 = vmatprep.subr.mxu0 0.0
        %2734 = vmatpush2.msra.mxu0 0.0
        %2735 = vmatprep.subr.mxu0 0.0
        %2736 = vmatpush2.msra.mxu0 0.0
        %2737 = vmatprep.subr.mxu0 0.0
        %2738 = vmatpush2.msra.mxu0 0.0
        %2739 = vmatprep.mubr.f32.mxu0 0.0
        %2740 = vmatmul.mubr.f32.gmra.mxu0 %v880
        %v2741 = vpop.f32.mrf.mxu0
        %v2742 = vadd.f32 0.0, %v2741
        %v2743 = vpop.f32.mrf.mxu0
        %2744 = vmatprep.mubr.f32.mxu0 0.0
        %2745 = vmatmul.mubr.f32.gmra.mxu0 %v882
        %v2746 = vpop.f32.mrf.mxu0
        %v2747 = vadd.f32 0.0, %v2746
        %v2748 = vpop.f32.mrf.mxu0
        %2749 = vmatprep.mubr.f32.mxu0 0.0
        %2750 = vmatmul.mubr.f32.gmra.mxu0 %v885
        %v2751 = vpop.f32.mrf.mxu0
        %v2752 = vadd.f32 0.0, %v2751
        %v2753 = vpop.f32.mrf.mxu0
        %2754 = vmatprep.mubr.f32.mxu0 0.0
        %2755 = vmatmul.mubr.f32.gmra.mxu0 %v887
        %v2756 = vpop.f32.mrf.mxu0
        %v2757 = vadd.f32 0.0, %v2756
        %v2758 = vpop.f32.mrf.mxu0
        %2759 = vmatprep.mubr.f32.mxu0 0.0
        %2760 = vmatmul.mubr.f32.gmra.mxu0 %v890
        %v2761 = vpop.f32.mrf.mxu0
        %v2762 = vadd.f32 0.0, %v2761
        %v2763 = vpop.f32.mrf.mxu0
        %2764 = vmatprep.mubr.f32.mxu0 0.0
        %2765 = vmatmul.mubr.f32.gmra.mxu0 %v892
        %v2766 = vpop.f32.mrf.mxu0
        %v2767 = vadd.f32 0.0, %v2766
        %v2768 = vpop.f32.mrf.mxu0
        %2769 = vmatprep.mubr.f32.mxu0 0.0
        %2770 = vmatmul.mubr.f32.gmra.mxu0 %v895
        %v2771 = vpop.f32.mrf.mxu0
        %v2772 = vadd.f32 0.0, %v2771
        %v2773 = vpop.f32.mrf.mxu0
        %2774 = vmatprep.mubr.f32.mxu0 0.0
        %2775 = vmatmul.mubr.f32.gmra.mxu0 %v897
        %v2776 = vpop.f32.mrf.mxu0
        %v2777 = vadd.f32 0.0, %v2776
        %v2778 = vpop.f32.mrf.mxu0
        %2779 = vmatprep.mubr.f32.mxu0 0.0
        %2780 = vmatmul.mubr.f32.gmra.mxu0 %v900
        %v2781 = vpop.f32.mrf.mxu0
        %v2782 = vadd.f32 0.0, %v2781
        %v2783 = vpop.f32.mrf.mxu0
        %2784 = vmatprep.mubr.f32.mxu0 0.0
        %2785 = vmatmul.mubr.f32.gmra.mxu0 %v902
        %v2786 = vpop.f32.mrf.mxu0
        %v2787 = vadd.f32 0.0, %v2786
        %v2788 = vpop.f32.mrf.mxu0
        %2789 = vmatprep.mubr.f32.mxu0 0.0
        %2790 = vmatmul.mubr.f32.gmra.mxu0 %v905
        %v2791 = vpop.f32.mrf.mxu0
        %v2792 = vadd.f32 0.0, %v2791
        %v2793 = vpop.f32.mrf.mxu0
        %2794 = vmatprep.mubr.f32.mxu0 0.0
        %2795 = vmatmul.mubr.f32.gmra.mxu0 %v907
        %v2796 = vpop.f32.mrf.mxu0
        %v2797 = vadd.f32 0.0, %v2796
        %v2798 = vpop.f32.mrf.mxu0
        %2799 = vmatprep.mubr.f32.mxu0 0.0
        %2800 = vmatmul.mubr.f32.gmra.mxu0 %v910
        %v2801 = vpop.f32.mrf.mxu0
        %v2802 = vadd.f32 0.0, %v2801
        %v2803 = vpop.f32.mrf.mxu0
        %2804 = vmatprep.mubr.f32.mxu0 0.0
        %2805 = vmatmul.mubr.f32.gmra.mxu0 %v912
        %v2806 = vpop.f32.mrf.mxu0
        %v2807 = vadd.f32 0.0, %v2806
        %v2808 = vpop.f32.mrf.mxu0
        %2809 = vmatprep.mubr.f32.mxu0 0.0
        %2810 = vmatmul.mubr.f32.gmra.mxu0 %v915
        %v2811 = vpop.f32.mrf.mxu0
        %v2812 = vadd.f32 0.0, %v2811
        %v2813 = vpop.f32.mrf.mxu0
        %2814 = vmatprep.mubr.f32.mxu0 0.0
        %2815 = vmatmul.mubr.f32.gmra.mxu0 %v917
        %v2816 = vpop.f32.mrf.mxu0
        %v2817 = vadd.f32 0.0, %v2816
        %v2818 = vpop.f32.mrf.mxu0
        %2819 = vmatprep.mubr.f32.mxu0 0.0
        %2820 = vmatmul.mubr.f32.gmra.mxu0 %v920
        %v2821 = vpop.f32.mrf.mxu0
        %v2822 = vadd.f32 0.0, %v2821
        %v2823 = vpop.f32.mrf.mxu0
        %2824 = vmatprep.mubr.f32.mxu0 0.0
        %2825 = vmatmul.mubr.f32.gmra.mxu0 %v922
        %v2826 = vpop.f32.mrf.mxu0
        %v2827 = vadd.f32 0.0, %v2826
        %v2828 = vpop.f32.mrf.mxu0
        %2829 = vmatprep.mubr.f32.mxu0 0.0
        %2830 = vmatmul.mubr.f32.gmra.mxu0 %v925
        %v2831 = vpop.f32.mrf.mxu0
        %v2832 = vadd.f32 0.0, %v2831
        %v2833 = vpop.f32.mrf.mxu0
        %2834 = vmatprep.mubr.f32.mxu0 0.0
        %2835 = vmatmul.mubr.f32.gmra.mxu0 %v927
        %v2836 = vpop.f32.mrf.mxu0
        %v2837 = vadd.f32 0.0, %v2836
        %v2838 = vpop.f32.mrf.mxu0
        %2839 = vmatprep.mubr.f32.mxu0 0.0
        %2840 = vmatmul.mubr.f32.gmra.mxu0 %v930
        %v2841 = vpop.f32.mrf.mxu0
        %v2842 = vadd.f32 0.0, %v2841
        %v2843 = vpop.f32.mrf.mxu0
        %2844 = vmatprep.mubr.f32.mxu0 0.0
        %2845 = vmatmul.mubr.f32.gmra.mxu0 %v932
        %v2846 = vpop.f32.mrf.mxu0
        %v2847 = vadd.f32 0.0, %v2846
        %v2848 = vpop.f32.mrf.mxu0
        %2849 = vmatprep.mubr.f32.mxu0 0.0
        %2850 = vmatmul.mubr.f32.gmra.mxu0 %v935
        %v2851 = vpop.f32.mrf.mxu0
        %v2852 = vadd.f32 0.0, %v2851
        %v2853 = vpop.f32.mrf.mxu0
        %2854 = vmatprep.mubr.f32.mxu0 0.0
        %2855 = vmatmul.mubr.f32.gmra.mxu0 %v937
        %v2856 = vpop.f32.mrf.mxu0
        %v2857 = vadd.f32 0.0, %v2856
        %v2858 = vpop.f32.mrf.mxu0
        %2859 = vmatprep.mubr.f32.mxu0 0.0
        %2860 = vmatmul.mubr.f32.gmra.mxu0 %v940
        %v2861 = vpop.f32.mrf.mxu0
        %v2862 = vadd.f32 0.0, %v2861
        %v2863 = vpop.f32.mrf.mxu0
        %2864 = vmatprep.mubr.f32.mxu0 0.0
        %2865 = vmatmul.mubr.f32.gmra.mxu0 %v942
        %v2866 = vpop.f32.mrf.mxu0
        %v2867 = vadd.f32 0.0, %v2866
        %v2868 = vpop.f32.mrf.mxu0
        %2869 = vmatprep.mubr.f32.mxu0 0.0
        %2870 = vmatmul.mubr.f32.gmra.mxu0 %v945
        %v2871 = vpop.f32.mrf.mxu0
        %v2872 = vadd.f32 0.0, %v2871
        %v2873 = vpop.f32.mrf.mxu0
        %2874 = vmatprep.mubr.f32.mxu0 0.0
        %2875 = vmatmul.mubr.f32.gmra.mxu0 %v947
        %v2876 = vpop.f32.mrf.mxu0
        %v2877 = vadd.f32 0.0, %v2876
        %v2878 = vpop.f32.mrf.mxu0
        %2879 = vmatprep.mubr.f32.mxu0 0.0
        %2880 = vmatmul.mubr.f32.gmra.mxu0 %v1814
        %v2881 = vpop.f32.mrf.mxu0
        %v2882 = vadd.f32 0.0, %v2881
        %v2883 = vpop.f32.mrf.mxu0
        %2884 = vmatprep.mubr.f32.mxu0 0.0
        %2885 = vmatmul.mubr.f32.gmra.mxu0 %v1816
        %v2886 = vpop.f32.mrf.mxu0
        %v2887 = vadd.f32 0.0, %v2886
        %v2888 = vpop.f32.mrf.mxu0
        %2889 = vmatprep.mubr.f32.mxu0 0.0
        %2890 = vmatmul.mubr.f32.gmra.mxu0 %v2653
        %v2891 = vpop.f32.mrf.mxu0
        %v2892 = vadd.f32 0.0, %v2891
        %v2893 = vpop.f32.mrf.mxu0
        %2894 = vmatprep.mubr.f32.mxu0 0.0
        %2895 = vmatmul.mubr.f32.gmra.mxu0 %v2655
        %v2896 = vpop.f32.mrf.mxu0
        %v2897 = vadd.f32 0.0, %v2896
        %v2898 = vpop.f32.mrf.mxu0
        %2899 = vdwg.mxu0
        %v2900 = vadd.f32 %v2619, %v2742
        %v2901 = vadd.f32 %v2620, %v2747
        %v2902 = vadd.f32 %v2621, %v2752
        %v2903 = vadd.f32 %v2622, %v2757
        %v2904 = vadd.f32 %v2623, %v2762
        %v2905 = vadd.f32 %v2624, %v2767
        %v2906 = vadd.f32 %v2625, %v2772
        %v2907 = vadd.f32 %v2626, %v2777
        %v2908 = vadd.f32 %v2627, %v2782
        %v2909 = vadd.f32 %v2628, %v2787
        %v2910 = vadd.f32 %v2629, %v2792
        %v2911 = vadd.f32 %v2630, %v2797
        %v2912 = vadd.f32 %v2631, %v2802
        %v2913 = vadd.f32 %v2632, %v2807
        %v2914 = vadd.f32 %v2633, %v2812
        %v2915 = vadd.f32 %v2634, %v2817
        %v2916 = vadd.f32 %v2635, %v2822
        %v2917 = vadd.f32 %v2636, %v2827
        %v2918 = vadd.f32 %v2637, %v2832
        %v2919 = vadd.f32 %v2638, %v2837
        %v2920 = vadd.f32 %v2639, %v2842
        %v2921 = vadd.f32 %v2640, %v2847
        %v2922 = vadd.f32 %v2641, %v2852
        %v2923 = vadd.f32 %v2642, %v2857
        %v2924 = vadd.f32 %v2643, %v2862
        %v2925 = vadd.f32 %v2644, %v2867
        %v2926 = vadd.f32 %v2645, %v2872
        %v2927 = vadd.f32 %v2646, %v2877
        %v2928 = vadd.f32 %v2647, %v2882
        %v2929 = vadd.f32 %v2648, %v2887
        %v2930 = vadd.f32 %v2649, %v2892
        %v2931 = vadd.f32 %v2650, %v2897
        %v2932 = vld [vmem:[%s2] sm:$0x1]
        %v2934 = vlaneseq
        %v2935 = vshrl.u32 %v2934, 7
        %v2936 = vsub.s32 0, %v2935
        %v2937 = vrot.slane %v2932, %v2936
        %v2939 = vadd.f32 %v2900, %v2937
        %v2940 = vadd.f32 %v2901, %v2937
        %v2941 = vadd.f32 %v2902, %v2937
        %v2942 = vadd.f32 %v2903, %v2937
        %v2943 = vadd.f32 %v2904, %v2937
        %v2944 = vadd.f32 %v2905, %v2937
        %v2945 = vadd.f32 %v2906, %v2937
        %v2946 = vadd.f32 %v2907, %v2937
        %v2947 = vadd.f32 %v2908, %v2937
        %v2948 = vadd.f32 %v2909, %v2937
        %v2949 = vadd.f32 %v2910, %v2937
        %v2950 = vadd.f32 %v2911, %v2937
        %v2951 = vadd.f32 %v2912, %v2937
        %v2952 = vadd.f32 %v2913, %v2937
        %v2953 = vadd.f32 %v2914, %v2937
        %v2954 = vadd.f32 %v2915, %v2937
        %v2955 = vadd.f32 %v2916, %v2937
        %v2956 = vadd.f32 %v2917, %v2937
        %v2957 = vadd.f32 %v2918, %v2937
        %v2958 = vadd.f32 %v2919, %v2937
        %v2959 = vadd.f32 %v2920, %v2937
        %v2960 = vadd.f32 %v2921, %v2937
        %v2961 = vadd.f32 %v2922, %v2937
        %v2962 = vadd.f32 %v2923, %v2937
        %v2963 = vadd.f32 %v2924, %v2937
        %v2964 = vadd.f32 %v2925, %v2937
        %v2965 = vadd.f32 %v2926, %v2937
        %v2966 = vadd.f32 %v2927, %v2937
        %v2967 = vadd.f32 %v2928, %v2937
        %v2968 = vadd.f32 %v2929, %v2937
        %v2969 = vadd.f32 %v2930, %v2937
        %v2970 = vadd.f32 %v2931, %v2937
        %v2971 = vmax.f32 %v2939, 0.0
        %v2972 = vmax.f32 %v2940, 0.0
        %v2973 = vmax.f32 %v2941, 0.0
        %v2974 = vmax.f32 %v2942, 0.0
        %v2975 = vmax.f32 %v2943, 0.0
        %v2976 = vmax.f32 %v2944, 0.0
        %v2977 = vmax.f32 %v2945, 0.0
        %v2978 = vmax.f32 %v2946, 0.0
        %v2979 = vmax.f32 %v2947, 0.0
        %v2980 = vmax.f32 %v2948, 0.0
        %v2981 = vmax.f32 %v2949, 0.0
        %v2982 = vmax.f32 %v2950, 0.0
        %v2983 = vmax.f32 %v2951, 0.0
        %v2984 = vmax.f32 %v2952, 0.0
        %v2985 = vmax.f32 %v2953, 0.0
        %v2986 = vmax.f32 %v2954, 0.0
        %v2987 = vmax.f32 %v2955, 0.0
        %v2988 = vmax.f32 %v2956, 0.0
        %v2989 = vmax.f32 %v2957, 0.0
        %v2990 = vmax.f32 %v2958, 0.0
        %v2991 = vmax.f32 %v2959, 0.0
        %v2992 = vmax.f32 %v2960, 0.0
        %v2993 = vmax.f32 %v2961, 0.0
        %v2994 = vmax.f32 %v2962, 0.0
        %v2995 = vmax.f32 %v2963, 0.0
        %v2996 = vmax.f32 %v2964, 0.0
        %v2997 = vmax.f32 %v2965, 0.0
        %v2998 = vmax.f32 %v2966, 0.0
        %v2999 = vmax.f32 %v2967, 0.0
        %v3000 = vmax.f32 %v2968, 0.0
        %v3001 = vmax.f32 %v2969, 0.0
        %v3002 = vmax.f32 %v2970, 0.0
        %3003 = vst [vmem:[%s163] sm:$0xff] %v2971
        %3004 = vst [vmem:[%s163 + $0x8] sm:$0xff] %v2972
        %3005 = vst [vmem:[%s163 + $0x10] sm:$0xff] %v2973
        %3006 = vst [vmem:[%s163 + $0x18] sm:$0xff] %v2974
        %3007 = vst [vmem:[%s163 + $0x20] sm:$0xff] %v2975
        %3008 = vst [vmem:[%s163 + $0x28] sm:$0xff] %v2976
        %3009 = vst [vmem:[%s163 + $0x30] sm:$0xff] %v2977
        %3010 = vst [vmem:[%s163 + $0x38] sm:$0xff] %v2978
        %3011 = vst [vmem:[%s163 + $0x40] sm:$0xff] %v2979
        %3012 = vst [vmem:[%s163 + $0x48] sm:$0xff] %v2980
        %3013 = vst [vmem:[%s163 + $0x50] sm:$0xff] %v2981
        %3014 = vst [vmem:[%s163 + $0x58] sm:$0xff] %v2982
        %3015 = vst [vmem:[%s163 + $0x60] sm:$0xff] %v2983
        %3016 = vst [vmem:[%s163 + $0x68] sm:$0xff] %v2984
        %3017 = vst [vmem:[%s163 + $0x70] sm:$0xff] %v2985
        %3018 = vst [vmem:[%s163 + $0x78] sm:$0xff] %v2986
        %3019 = vst [vmem:[%s163 + $0x80] sm:$0xff] %v2987
        %3020 = vst [vmem:[%s163 + $0x88] sm:$0xff] %v2988
        %3021 = vst [vmem:[%s163 + $0x90] sm:$0xff] %v2989
        %3022 = vst [vmem:[%s163 + $0x98] sm:$0xff] %v2990
        %3023 = vst [vmem:[%s163 + $0xa0] sm:$0xff] %v2991
        %3024 = vst [vmem:[%s163 + $0xa8] sm:$0xff] %v2992
        %3025 = vst [vmem:[%s163 + $0xb0] sm:$0xff] %v2993
        %3026 = vst [vmem:[%s163 + $0xb8] sm:$0xff] %v2994
        %3027 = vst [vmem:[%s163 + $0xc0] sm:$0xff] %v2995
        %3028 = vst [vmem:[%s163 + $0xc8] sm:$0xff] %v2996
        %3029 = vst [vmem:[%s163 + $0xd0] sm:$0xff] %v2997
        %3030 = vst [vmem:[%s163 + $0xd8] sm:$0xff] %v2998
        %3031 = vst [vmem:[%s163 + $0xe0] sm:$0xff] %v2999
        %3032 = vst [vmem:[%s163 + $0xe8] sm:$0xff] %v3000
        %3033 = vst [vmem:[%s163 + $0xf0] sm:$0xff] %v3001
        %3034 = vst [vmem:[%s163 + $0xf8] sm:$0xff] %v3002
        %s3035 = sand.u32 %s93, 1
        %s3036 = scalar_lea.sflag [#allocation3], %s3035
        %s3037 = sand.u32 %s93, 1
        %s3038 = smul.addr %s3037, 256
        %s3039 = scalar_lea.vmem [#allocation2], %s3038
        // Predicated region
        $region33: #{tpu_custom_call.1} parent=31 // pred_check
          %p3040 = pneg %p103
        $region34: #{tpu_custom_call.1} parent=31 // pred_check_branch
          %3042 = sbr.rel (%p3040) target = $region36
        $region35: #{tpu_custom_call.1} parent=31 // pred_region
          %s3044 = ssub.s32 4096, 4096
          %3045 = vsyncadd %s3036, %s3044
          %s3046 = smul.addr %s17, 32
          %s3047 = smul.addr %s3046, 128
          %s3048 = scalar_lea.hbm %s3, %s3047
          %s3049 = sshll.u32 %s3039, 4
          %s3050 = int_to_ptr.vmem [resolvable:$true] %s3049
          %3055 = dma.vmem_to_hbm [thread:$0]  %s3050, 4096, %s3048, %s3036, 128, 128, 8
        $region36: #{tpu_custom_call.1} parent=31 // pred_fallthru
          _
      $region32: #{tpu_custom_call.1} parent=5 // pred_fallthru
        _
      %p3056 = scmp.le.s32.totalorder 2, %s12
      // Predicated region
      $region37: #{tpu_custom_call.1} parent=5 // pred_check
        %p3057 = pneg %p3056
      $region38: #{tpu_custom_call.1} parent=5 // pred_check_branch
        %3059 = sbr.rel (%p3057) target = $region40
      $region39: #{tpu_custom_call.1} parent=5 // pred_region
        %s3060 = ssub.s32 %s12, 2
        // Predicated region
        $region41: #{tpu_custom_call.1} parent=39 // pred_check
          %p3061 = pneg %p109
        $region42: #{tpu_custom_call.1} parent=39 // pred_check_branch
          %3063 = sbr.rel (%p3061) target = $region44
        $region43: #{tpu_custom_call.1} parent=39 // pred_region
          %s3064 = sand.u32 %s94, 1
          %s3065 = scalar_lea.sflag [#allocation3], %s3064
          %s3066 = sand.u32 %s94, 1
          %s3067 = smul.addr %s3066, 256
          %s3068 = scalar_lea.vmem [#allocation2], %s3067
          %3069 = dma.done %s3065, 4096
        $region44: #{tpu_custom_call.1} parent=39 // pred_fallthru
          _
      $region40: #{tpu_custom_call.1} parent=5 // pred_fallthru
        _
    $region6: #{tpu_custom_call.1} parent=1 // loop_footer
      %s16 = sadd.s32 1, %s12
    $region7: #{tpu_custom_call.1} parent=1 // loop_footer_branch
      %11 = sbr.rel target = $region3
    $region8: #{tpu_custom_call.1} parent=1 // loop_exit
      _
    %3070 = vsyncpa [#allocation3], 1
    %s3071 = scalar_lea.sflag [#allocation3], 1
    %3072 = vsyncpa %s3071, 1

</llo_original>
